<compile_context>
chip_gen: v5e
topology: v5e:2x2
jax: 0.10.0
libtpu: 0.0.40
codegen_flags: <defaults>
</compile_context>

<pallas_src>
import functools

import jax
import jax.numpy as jnp
import numpy as np
from jax.experimental import pallas as pl
from jax.experimental.pallas import tpu as pltpu

LANE = 128  # channel padding target (TPU lane width)


# ------------------------------- fused kernel --------------------------------

def _fused_tcn_kernel(x_ref, s_ref, w1_ref, b1_ref, w2_ref, b2_ref,
                      wd_ref, bd_ref, wo_ref, bo_ref, a_ref, o_ref,
                      *, K, dilations, offsets, has_downsample):
    """Whole QuantGenerator forward for one batch tile, resident in VMEM/vregs.

    x_ref : (M, 128) f32, M = samples_per_block * T (batch folded into matmul rows)
    s_ref : (n_off, M, M) bf16 one-hot time-shift matrices (encode the symmetric
            'same' zero halo and prevent cross-sample leakage)
    w*_ref: bf16 matmul weights, channel-padded to 128 lanes, taps stacked along
            the contraction dim; b*_ref / a_ref: f32 biases / PReLU slopes.
    """
    off_idx = {off: j for j, off in enumerate(offsets)}

    def shift_time(cur_b, off):
        # tap[t] = cur[t + off] inside the sample, 0 in the padding halo.
        # One-hot shift matmul: no VMEM scratch round-trip, no misaligned sublane
        # loads; exact in bf16 (each output element is a single 1.0 * x product).
        if off == 0:
            return cur_b
        return jnp.dot(s_ref[off_idx[off]], cur_b,
                       preferred_element_type=jnp.float32).astype(jnp.bfloat16)

    def dilated_conv_prelu(cur, w_kc_c, bias_1c, alpha_1c, d):
        # K dilated taps stacked along lanes -> ONE (M, K*C) @ (K*C, C) MXU matmul.
        p = d * (K - 1) // 2
        cur_b = cur.astype(jnp.bfloat16)
        lhs = jnp.concatenate([shift_time(cur_b, k * d - p) for k in range(K)],
                              axis=-1)                                    # (M, K*C) bf16
        y = jnp.dot(lhs, w_kc_c, preferred_element_type=jnp.float32) + bias_1c
        return jnp.where(y >= 0.0, y, alpha_1c * y)            # PReLU, f32 on the VPU

    cur = x_ref[...].astype(jnp.float32)                       # (M, 128)
    for i, d in enumerate(dilations):
        h = dilated_conv_prelu(cur, w1_ref[i], b1_ref[i], a_ref[2 * i], d)
        if i == 0 and has_downsample:                           # 1x1 downsample conv
            res = jnp.dot(cur.astype(jnp.bfloat16), wd_ref[...],
                          preferred_element_type=jnp.float32) + bd_ref[...]
        else:
            res = cur
        cur = dilated_conv_prelu(h, w2_ref[i], b2_ref[i], a_ref[2 * i + 1], d) + res

    # final 1x1 conv + tanh; output stays lane-dense (sliced to output_size outside)
    y = jnp.dot(cur.astype(jnp.bfloat16), wo_ref[...],
                preferred_element_type=jnp.float32) + bo_ref[...]
    o_ref[...] = jnp.tanh(y).astype(o_ref.dtype)


# ------------------------- parameter packing (one-time) -----------------------

def _pad_conv_weight(w, C):
    """(K, cin, cout) -> (K*C, C) bf16: zero-pad channels, stack taps along rows."""
    K, cin, cout = w.shape
    wp = jnp.zeros((K, C, C), jnp.float32).at[:, :cin, :cout].set(w.astype(jnp.float32))
    return wp.reshape(K * C, C).astype(jnp.bfloat16)


def _pad_matrix(w, C):
    cin, cout = w.shape
    return (jnp.zeros((C, C), jnp.float32)
            .at[:cin, :cout].set(w.astype(jnp.float32)).astype(jnp.bfloat16))


def _pad_bias(b, C):
    return jnp.zeros((1, C), jnp.float32).at[0, :b.shape[0]].set(b.astype(jnp.float32))


def _forward_packed(x, packed, *, K, dilations, has_downsample, out_size):
    W1, B1, W2, B2, Wd, Bd, Wo, Bo, A = packed
    B, T, Cin = x.shape
    C = LANE
    BT = B * T

    # Lane-dense, batch-folded activations: every conv sees M = samples*T rows.
    x_flat = jnp.zeros((BT, C), jnp.float32).at[:, :Cin].set(
        x.reshape(BT, Cin).astype(jnp.float32))

    # Up to 2 grid steps over batch ("parallel") so both v7x TensorCores get work;
    # on 1-TC chips (v5e/v6e) the steps simply pipeline.  The remaining batch in
    # each step is folded into the matmul M dimension.
    if B % 2 == 0 and ((B // 2) * T) % 8 == 0:
        samples_per_block = B // 2
    else:
        samples_per_block = B                      # full array block: always legal
    num_blocks = B // samples_per_block
    rows_blk = samples_per_block * T

    # One-hot time-shift matrices for every distinct dilated-tap offset.
    # Built with numpy at trace time -> baked in as constants (no per-call cost).
    offsets = tuple(sorted({k * d - d * (K - 1) // 2
                            for d in dilations for k in range(K)} - {0}))
    s_np = np.zeros((max(1, len(offsets)), rows_blk, rows_blk), np.float32)
    for j, off in enumerate(offsets):
        for s in range(samples_per_block):
            for t in range(T):
                if 0 <= t + off < T:
                    s_np[j, s * T + t, s * T + t + off] = 1.0
    S = jnp.asarray(s_np, jnp.bfloat16)

    kern = functools.partial(_fused_tcn_kernel, K=K, dilations=dilations,
                             offsets=offsets, has_downsample=has_downsample)
    const3 = lambda shape: pl.BlockSpec(shape, lambda b: (0, 0, 0))
    const2 = lambda shape: pl.BlockSpec(shape, lambda b: (0, 0))

    out_flat = pl.pallas_call(
        kern,
        grid=(num_blocks,),
        in_specs=[
            pl.BlockSpec((rows_blk, C), lambda b: (b, 0)),    # x (per batch tile)
            const3(S.shape),                                  # time-shift matrices
            const3(W1.shape), const3(B1.shape),               # conv1 weights / bias
            const3(W2.shape), const3(B2.shape),               # conv2 weights / bias
            const2(Wd.shape), const2(Bd.shape),               # 1x1 downsample
            const2(Wo.shape), const2(Bo.shape),               # final 1x1 conv
            const3(A.shape),                                  # PReLU slopes
        ],
        out_specs=pl.BlockSpec((rows_blk, C), lambda b: (b, 0)),
        out_shape=jax.ShapeDtypeStruct((BT, C), x.dtype),
        compiler_params=pltpu.CompilerParams(
            dimension_semantics=("parallel",),
            vmem_limit_bytes=32 * 1024 * 1024),
    )(x_flat, S, W1, B1, W2, B2, Wd, Bd, Wo, Bo, A)

    # TODO(synk): for large T, add a time-tile grid axis (taps spanning tile edges
    # via a small halo) so blocks stay within v7x's 64 MiB VMEM; unnecessary here.
    return out_flat[:, :out_size].reshape(B, T, out_size)


def make_quant_generator(params):
    """One-time parameter packing (channel-padded, bf16) + jitted forward(x)."""
    blocks = params["blocks"]
    K = blocks[0]["w1"].shape[0]
    assert K % 2 == 1, "symmetric 'same' padding matches PyTorch only for odd kernel_size"
    dilations = tuple(2 ** i for i in range(len(blocks)))
    out_size = params["w_out"].shape[1]
    C = LANE
    has_downsample = blocks[0]["wd"] is not None

    W1 = jnp.stack([_pad_conv_weight(b["w1"], C) for b in blocks])   # (L, K*C, C) bf16
    B1 = jnp.stack([_pad_bias(b["b1"], C) for b in blocks])          # (L, 1, C)   f32
    W2 = jnp.stack([_pad_conv_weight(b["w2"], C) for b in blocks])
    B2 = jnp.stack([_pad_bias(b["b2"], C) for b in blocks])
    if has_downsample:
        Wd = _pad_matrix(blocks[0]["wd"], C)
        Bd = _pad_bias(blocks[0]["bd"], C)
    else:
        Wd = jnp.zeros((C, C), jnp.bfloat16)
        Bd = jnp.zeros((1, C), jnp.float32)
    Wo = _pad_matrix(params["w_out"], C)
    Bo = _pad_bias(params["b_out"], C)
    # PReLU slopes broadcast across lanes -> plain VMEM operand (no SMEM needed).
    A = jnp.stack([jnp.broadcast_to(jnp.asarray(v, jnp.float32), (1, C))
                   for b in blocks for v in (b["a1"], b["a2"])])      # (2L, 1, C) f32

    packed = (W1, B1, W2, B2, Wd, Bd, Wo, Bo, A)
    fwd = jax.jit(functools.partial(_forward_packed, K=K, dilations=dilations,
                                    has_downsample=has_downsample, out_size=out_size))
    return lambda x: fwd(x, packed)


# --------------------------- model (parameters) -------------------------------

def init_params(key, input_size, output_size, n_hidden=80, num_layers=4, kernel_size=3):
    params = {"blocks": []}
    k_iter = iter(jax.random.split(key, num_layers * 6 + 2))
    for i in range(num_layers):
        n_in = input_size if i == 0 else n_hidden
        blk = {}
        blk["w1"] = 0.01 * jax.random.normal(next(k_iter), (kernel_size, n_in, n_hidden), jnp.float32)
        blk["b1"] = (1.0 / np.sqrt(n_in * kernel_size)) * \
            jax.random.uniform(next(k_iter), (n_hidden,), jnp.float32, -1.0, 1.0)
        blk["a1"] = jnp.float32(0.25)                   # nn.PReLU default init
        blk["w2"] = 0.01 * jax.random.normal(next(k_iter), (kernel_size, n_hidden, n_hidden), jnp.float32)
        blk["b2"] = (1.0 / np.sqrt(n_hidden * kernel_size)) * \
            jax.random.uniform(next(k_iter), (n_hidden,), jnp.float32, -1.0, 1.0)
        blk["a2"] = jnp.float32(0.25)
        if n_in != n_hidden:                            # downsample 1x1 conv (block 0)
            blk["wd"] = 0.01 * jax.random.normal(next(k_iter), (n_in, n_hidden), jnp.float32)
            blk["bd"] = (1.0 / np.sqrt(n_in)) * \
                jax.random.uniform(next(k_iter), (n_hidden,), jnp.float32, -1.0, 1.0)
        else:
            blk["wd"], blk["bd"] = None, None
            next(k_iter); next(k_iter)
        params["blocks"].append(blk)
    params["w_out"] = 0.01 * jax.random.normal(next(k_iter), (n_hidden, output_size), jnp.float32)
    params["b_out"] = (1.0 / np.sqrt(n_hidden)) * \
        jax.random.uniform(next(k_iter), (output_size,), jnp.float32, -1.0, 1.0)
    return params


# --------------------------- pure-JAX reference --------------------------------

def _ref_conv_prelu(x, w, b, a, dilation, res=None):
    B, T, Cin = x.shape
    K, _, Cout = w.shape
    pad = dilation * (K - 1) // 2
    xpad = jnp.pad(x, ((0, 0), (pad, pad), (0, 0)))
    acc = jnp.zeros((B, T, Cout), jnp.float32)
    for k in range(K):
        acc = acc + jnp.einsum("btc,cd->btd", xpad[:, k * dilation:k * dilation + T, :], w[k])
    acc = acc + b
    acc = jnp.where(acc >= 0.0, acc, a * acc)
    if res is not None:
        acc = acc + res
    return acc


def _ref_forward(x, params):
    y = x
    for i, blk in enumerate(params["blocks"]):
        d = 2 ** i
        h = _ref_conv_prelu(y, blk["w1"], blk["b1"], blk["a1"], d)
        res = y if blk["wd"] is None else jnp.einsum("btc,cd->btd", y, blk["wd"]) + blk["bd"]
        y = _ref_conv_prelu(h, blk["w2"], blk["b2"], blk["a2"], d, res=res)
    return jnp.tanh(jnp.einsum("btc,cd->btd", y, params["w_out"]) + params["b_out"])


# ---------------------------------- main ---------------------------------------

if __name__ == "__main__":
    B, T = 2, 16
    input_size, output_size = 4, 4

    key = jax.random.PRNGKey(0)
    kx, kp = jax.random.split(key)
    x = jax.random.normal(kx, (B, T, input_size), jnp.float32)
    params = init_params(kp, input_size, output_size)

    forward = make_quant_generator(params)       # packing hoisted out of the call path
    out = jax.block_until_ready(forward(x))

    ref = jax.block_until_ready(_ref_forward(x, params))
    # bf16 matmul operands (f32 accumulate) -> looser tolerance than a pure-f32 path.
    np.testing.assert_allclose(np.asarray(out), np.asarray(ref), rtol=3e-2, atol=3e-3)
    assert out.shape == (B, T, output_size)

    print("KERNEL_OK")
</pallas_src>

<mosaic_0001>
module attributes {stable_mosaic.version = 11 : i64} {
  func.func @_fused_tcn_kernel(%arg0: i32, %arg1: memref<16x128xf32, #tpu.memory_space<vmem>>, %arg2: memref<8x16x16xbf16, #tpu.memory_space<vmem>>, %arg3: memref<4x384x128xbf16, #tpu.memory_space<vmem>>, %arg4: memref<4x1x128xf32, #tpu.memory_space<vmem>>, %arg5: memref<4x384x128xbf16, #tpu.memory_space<vmem>>, %arg6: memref<4x1x128xf32, #tpu.memory_space<vmem>>, %arg7: memref<128x128xbf16, #tpu.memory_space<vmem>>, %arg8: memref<1x128xf32, #tpu.memory_space<vmem>>, %arg9: memref<128x128xbf16, #tpu.memory_space<vmem>>, %arg10: memref<1x128xf32, #tpu.memory_space<vmem>>, %arg11: memref<8x1x128xf32, #tpu.memory_space<vmem>>, %arg12: memref<16x128xf32, #tpu.memory_space<vmem>>) attributes {dimension_semantics = [#tpu.dimension_semantics<parallel>], iteration_bounds = array<i64: 2>, scalar_prefetch = 0 : i64, scratch_operands = 0 : i64, tpu.core_type = #tpu.core_type<tc>, window_params = [{transform_indices = @transform_0, window_bounds = array<i64: 16, 128>}, {pipeline_mode = #tpu.pipeline_mode<synchronous>, transform_indices = @transform_1, window_bounds = array<i64: 8, 16, 16>}, {pipeline_mode = #tpu.pipeline_mode<synchronous>, transform_indices = @transform_2, window_bounds = array<i64: 4, 384, 128>}, {pipeline_mode = #tpu.pipeline_mode<synchronous>, transform_indices = @transform_3, window_bounds = array<i64: 4, 1, 128>}, {pipeline_mode = #tpu.pipeline_mode<synchronous>, transform_indices = @transform_4, window_bounds = array<i64: 4, 384, 128>}, {pipeline_mode = #tpu.pipeline_mode<synchronous>, transform_indices = @transform_5, window_bounds = array<i64: 4, 1, 128>}, {pipeline_mode = #tpu.pipeline_mode<synchronous>, transform_indices = @transform_6, window_bounds = array<i64: 128, 128>}, {pipeline_mode = #tpu.pipeline_mode<synchronous>, transform_indices = @transform_7, window_bounds = array<i64: 1, 128>}, {pipeline_mode = #tpu.pipeline_mode<synchronous>, transform_indices = @transform_8, window_bounds = array<i64: 128, 128>}, {pipeline_mode = #tpu.pipeline_mode<synchronous>, transform_indices = @transform_9, window_bounds = array<i64: 1, 128>}, {pipeline_mode = #tpu.pipeline_mode<synchronous>, transform_indices = @transform_10, window_bounds = array<i64: 8, 1, 128>}, {transform_indices = @transform_11, window_bounds = array<i64: 16, 128>}]} {
    %c0 = arith.constant 0 : index
    %c0_0 = arith.constant 0 : index
    %0 = vector.load %arg1[%c0, %c0_0] : memref<16x128xf32, #tpu.memory_space<vmem>>, vector<16x128xf32>
    %c0_1 = arith.constant 0 : index
    %c0_2 = arith.constant 0 : index
    %c0_3 = arith.constant 0 : index
    %1 = vector.load %arg3[%c0_1, %c0_2, %c0_3] : memref<4x384x128xbf16, #tpu.memory_space<vmem>>, vector<1x384x128xbf16>
    %2 = vector.shape_cast %1 : vector<1x384x128xbf16> to vector<384x128xbf16>
    %c0_4 = arith.constant 0 : index
    %c0_5 = arith.constant 0 : index
    %c0_6 = arith.constant 0 : index
    %3 = vector.load %arg4[%c0_4, %c0_5, %c0_6] : memref<4x1x128xf32, #tpu.memory_space<vmem>>, vector<1x1x128xf32>
    %4 = vector.shape_cast %3 : vector<1x1x128xf32> to vector<1x128xf32>
    %c0_7 = arith.constant 0 : index
    %c0_8 = arith.constant 0 : index
    %c0_9 = arith.constant 0 : index
    %5 = vector.load %arg11[%c0_7, %c0_8, %c0_9] : memref<8x1x128xf32, #tpu.memory_space<vmem>>, vector<1x1x128xf32>
    %6 = vector.shape_cast %5 : vector<1x1x128xf32> to vector<1x128xf32>
    %7 = arith.truncf %0 : vector<16x128xf32> to vector<16x128xbf16>
    %c3 = arith.constant 3 : index
    %c0_10 = arith.constant 0 : index
    %c0_11 = arith.constant 0 : index
    %8 = vector.load %arg2[%c3, %c0_10, %c0_11] : memref<8x16x16xbf16, #tpu.memory_space<vmem>>, vector<1x16x16xbf16>
    %9 = vector.shape_cast %8 : vector<1x16x16xbf16> to vector<16x16xbf16>
    %cst = arith.constant dense<0.000000e+00> : vector<16x128xf32>
    %10 = tpu.matmul %9, %7, %cst {dimension_numbers = #tpu.dot_dimension_numbers<[1], [0], [0], [1], [0, 0, 1, 1], [], []>} : vector<16x16xbf16>, vector<16x128xbf16>, vector<16x128xf32> -> vector<16x128xf32>
    %11 = arith.truncf %10 : vector<16x128xf32> to vector<16x128xbf16>
    %c4 = arith.constant 4 : index
    %c0_12 = arith.constant 0 : index
    %c0_13 = arith.constant 0 : index
    %12 = vector.load %arg2[%c4, %c0_12, %c0_13] : memref<8x16x16xbf16, #tpu.memory_space<vmem>>, vector<1x16x16xbf16>
    %13 = vector.shape_cast %12 : vector<1x16x16xbf16> to vector<16x16xbf16>
    %cst_14 = arith.constant dense<0.000000e+00> : vector<16x128xf32>
    %14 = tpu.matmul %13, %7, %cst_14 {dimension_numbers = #tpu.dot_dimension_numbers<[1], [0], [0], [1], [0, 0, 1, 1], [], []>} : vector<16x16xbf16>, vector<16x128xbf16>, vector<16x128xf32> -> vector<16x128xf32>
    %15 = arith.truncf %14 : vector<16x128xf32> to vector<16x128xbf16>
    %16 = tpu.concatenate %11, %7, %15 in 1 : vector<16x128xbf16>, vector<16x128xbf16>, vector<16x128xbf16> -> vector<16x384xbf16>
    %cst_15 = arith.constant dense<0.000000e+00> : vector<16x128xf32>
    %17 = tpu.matmul %16, %2, %cst_15 {dimension_numbers = #tpu.dot_dimension_numbers<[1], [0], [0], [1], [0, 0, 1, 1], [], []>} : vector<16x384xbf16>, vector<384x128xbf16>, vector<16x128xf32> -> vector<16x128xf32>
    %18 = vector.broadcast %4 : vector<1x128xf32> to vector<16x128xf32>
    %19 = arith.addf %17, %18 : vector<16x128xf32>
    %cst_16 = arith.constant 0.000000e+00 : f32
    %20 = vector.broadcast %cst_16 : f32 to vector<16x128xf32>
    %21 = arith.cmpf oge, %19, %20 : vector<16x128xf32>
    %22 = vector.broadcast %6 : vector<1x128xf32> to vector<16x128xf32>
    %23 = arith.mulf %22, %19 : vector<16x128xf32>
    %24 = arith.select %21, %19, %23 : vector<16x128xi1>, vector<16x128xf32>
    %25 = arith.truncf %0 : vector<16x128xf32> to vector<16x128xbf16>
    %c0_17 = arith.constant 0 : index
    %c0_18 = arith.constant 0 : index
    %26 = vector.load %arg7[%c0_17, %c0_18] : memref<128x128xbf16, #tpu.memory_space<vmem>>, vector<128x128xbf16>
    %cst_19 = arith.constant dense<0.000000e+00> : vector<16x128xf32>
    %27 = tpu.matmul %25, %26, %cst_19 {dimension_numbers = #tpu.dot_dimension_numbers<[1], [0], [0], [1], [0, 0, 1, 1], [], []>} : vector<16x128xbf16>, vector<128x128xbf16>, vector<16x128xf32> -> vector<16x128xf32>
    %c0_20 = arith.constant 0 : index
    %c0_21 = arith.constant 0 : index
    %28 = vector.load %arg8[%c0_20, %c0_21] : memref<1x128xf32, #tpu.memory_space<vmem>>, vector<1x128xf32>
    %29 = vector.broadcast %28 : vector<1x128xf32> to vector<16x128xf32>
    %30 = arith.addf %27, %29 : vector<16x128xf32>
    %c0_22 = arith.constant 0 : index
    %c0_23 = arith.constant 0 : index
    %c0_24 = arith.constant 0 : index
    %31 = vector.load %arg5[%c0_22, %c0_23, %c0_24] : memref<4x384x128xbf16, #tpu.memory_space<vmem>>, vector<1x384x128xbf16>
    %32 = vector.shape_cast %31 : vector<1x384x128xbf16> to vector<384x128xbf16>
    %c0_25 = arith.constant 0 : index
    %c0_26 = arith.constant 0 : index
    %c0_27 = arith.constant 0 : index
    %33 = vector.load %arg6[%c0_25, %c0_26, %c0_27] : memref<4x1x128xf32, #tpu.memory_space<vmem>>, vector<1x1x128xf32>
    %34 = vector.shape_cast %33 : vector<1x1x128xf32> to vector<1x128xf32>
    %c1 = arith.constant 1 : index
    %c0_28 = arith.constant 0 : index
    %c0_29 = arith.constant 0 : index
    %35 = vector.load %arg11[%c1, %c0_28, %c0_29] : memref<8x1x128xf32, #tpu.memory_space<vmem>>, vector<1x1x128xf32>
    %36 = vector.shape_cast %35 : vector<1x1x128xf32> to vector<1x128xf32>
    %37 = arith.truncf %24 : vector<16x128xf32> to vector<16x128xbf16>
    %c3_30 = arith.constant 3 : index
    %c0_31 = arith.constant 0 : index
    %c0_32 = arith.constant 0 : index
    %38 = vector.load %arg2[%c3_30, %c0_31, %c0_32] : memref<8x16x16xbf16, #tpu.memory_space<vmem>>, vector<1x16x16xbf16>
    %39 = vector.shape_cast %38 : vector<1x16x16xbf16> to vector<16x16xbf16>
    %cst_33 = arith.constant dense<0.000000e+00> : vector<16x128xf32>
    %40 = tpu.matmul %39, %37, %cst_33 {dimension_numbers = #tpu.dot_dimension_numbers<[1], [0], [0], [1], [0, 0, 1, 1], [], []>} : vector<16x16xbf16>, vector<16x128xbf16>, vector<16x128xf32> -> vector<16x128xf32>
    %41 = arith.truncf %40 : vector<16x128xf32> to vector<16x128xbf16>
    %c4_34 = arith.constant 4 : index
    %c0_35 = arith.constant 0 : index
    %c0_36 = arith.constant 0 : index
    %42 = vector.load %arg2[%c4_34, %c0_35, %c0_36] : memref<8x16x16xbf16, #tpu.memory_space<vmem>>, vector<1x16x16xbf16>
    %43 = vector.shape_cast %42 : vector<1x16x16xbf16> to vector<16x16xbf16>
    %cst_37 = arith.constant dense<0.000000e+00> : vector<16x128xf32>
    %44 = tpu.matmul %43, %37, %cst_37 {dimension_numbers = #tpu.dot_dimension_numbers<[1], [0], [0], [1], [0, 0, 1, 1], [], []>} : vector<16x16xbf16>, vector<16x128xbf16>, vector<16x128xf32> -> vector<16x128xf32>
    %45 = arith.truncf %44 : vector<16x128xf32> to vector<16x128xbf16>
    %46 = tpu.concatenate %41, %37, %45 in 1 : vector<16x128xbf16>, vector<16x128xbf16>, vector<16x128xbf16> -> vector<16x384xbf16>
    %cst_38 = arith.constant dense<0.000000e+00> : vector<16x128xf32>
    %47 = tpu.matmul %46, %32, %cst_38 {dimension_numbers = #tpu.dot_dimension_numbers<[1], [0], [0], [1], [0, 0, 1, 1], [], []>} : vector<16x384xbf16>, vector<384x128xbf16>, vector<16x128xf32> -> vector<16x128xf32>
    %48 = vector.broadcast %34 : vector<1x128xf32> to vector<16x128xf32>
    %49 = arith.addf %47, %48 : vector<16x128xf32>
    %cst_39 = arith.constant 0.000000e+00 : f32
    %50 = vector.broadcast %cst_39 : f32 to vector<16x128xf32>
    %51 = arith.cmpf oge, %49, %50 : vector<16x128xf32>
    %52 = vector.broadcast %36 : vector<1x128xf32> to vector<16x128xf32>
    %53 = arith.mulf %52, %49 : vector<16x128xf32>
    %54 = arith.select %51, %49, %53 : vector<16x128xi1>, vector<16x128xf32>
    %55 = arith.addf %54, %30 : vector<16x128xf32>
    %c1_40 = arith.constant 1 : index
    %c0_41 = arith.constant 0 : index
    %c0_42 = arith.constant 0 : index
    %56 = vector.load %arg3[%c1_40, %c0_41, %c0_42] : memref<4x384x128xbf16, #tpu.memory_space<vmem>>, vector<1x384x128xbf16>
    %57 = vector.shape_cast %56 : vector<1x384x128xbf16> to vector<384x128xbf16>
    %c1_43 = arith.constant 1 : index
    %c0_44 = arith.constant 0 : index
    %c0_45 = arith.constant 0 : index
    %58 = vector.load %arg4[%c1_43, %c0_44, %c0_45] : memref<4x1x128xf32, #tpu.memory_space<vmem>>, vector<1x1x128xf32>
    %59 = vector.shape_cast %58 : vector<1x1x128xf32> to vector<1x128xf32>
    %c2 = arith.constant 2 : index
    %c0_46 = arith.constant 0 : index
    %c0_47 = arith.constant 0 : index
    %60 = vector.load %arg11[%c2, %c0_46, %c0_47] : memref<8x1x128xf32, #tpu.memory_space<vmem>>, vector<1x1x128xf32>
    %61 = vector.shape_cast %60 : vector<1x1x128xf32> to vector<1x128xf32>
    %62 = arith.truncf %55 : vector<16x128xf32> to vector<16x128xbf16>
    %c2_48 = arith.constant 2 : index
    %c0_49 = arith.constant 0 : index
    %c0_50 = arith.constant 0 : index
    %63 = vector.load %arg2[%c2_48, %c0_49, %c0_50] : memref<8x16x16xbf16, #tpu.memory_space<vmem>>, vector<1x16x16xbf16>
    %64 = vector.shape_cast %63 : vector<1x16x16xbf16> to vector<16x16xbf16>
    %cst_51 = arith.constant dense<0.000000e+00> : vector<16x128xf32>
    %65 = tpu.matmul %64, %62, %cst_51 {dimension_numbers = #tpu.dot_dimension_numbers<[1], [0], [0], [1], [0, 0, 1, 1], [], []>} : vector<16x16xbf16>, vector<16x128xbf16>, vector<16x128xf32> -> vector<16x128xf32>
    %66 = arith.truncf %65 : vector<16x128xf32> to vector<16x128xbf16>
    %c5 = arith.constant 5 : index
    %c0_52 = arith.constant 0 : index
    %c0_53 = arith.constant 0 : index
    %67 = vector.load %arg2[%c5, %c0_52, %c0_53] : memref<8x16x16xbf16, #tpu.memory_space<vmem>>, vector<1x16x16xbf16>
    %68 = vector.shape_cast %67 : vector<1x16x16xbf16> to vector<16x16xbf16>
    %cst_54 = arith.constant dense<0.000000e+00> : vector<16x128xf32>
    %69 = tpu.matmul %68, %62, %cst_54 {dimension_numbers = #tpu.dot_dimension_numbers<[1], [0], [0], [1], [0, 0, 1, 1], [], []>} : vector<16x16xbf16>, vector<16x128xbf16>, vector<16x128xf32> -> vector<16x128xf32>
    %70 = arith.truncf %69 : vector<16x128xf32> to vector<16x128xbf16>
    %71 = tpu.concatenate %66, %62, %70 in 1 : vector<16x128xbf16>, vector<16x128xbf16>, vector<16x128xbf16> -> vector<16x384xbf16>
    %cst_55 = arith.constant dense<0.000000e+00> : vector<16x128xf32>
    %72 = tpu.matmul %71, %57, %cst_55 {dimension_numbers = #tpu.dot_dimension_numbers<[1], [0], [0], [1], [0, 0, 1, 1], [], []>} : vector<16x384xbf16>, vector<384x128xbf16>, vector<16x128xf32> -> vector<16x128xf32>
    %73 = vector.broadcast %59 : vector<1x128xf32> to vector<16x128xf32>
    %74 = arith.addf %72, %73 : vector<16x128xf32>
    %cst_56 = arith.constant 0.000000e+00 : f32
    %75 = vector.broadcast %cst_56 : f32 to vector<16x128xf32>
    %76 = arith.cmpf oge, %74, %75 : vector<16x128xf32>
    %77 = vector.broadcast %61 : vector<1x128xf32> to vector<16x128xf32>
    %78 = arith.mulf %77, %74 : vector<16x128xf32>
    %79 = arith.select %76, %74, %78 : vector<16x128xi1>, vector<16x128xf32>
    %c1_57 = arith.constant 1 : index
    %c0_58 = arith.constant 0 : index
    %c0_59 = arith.constant 0 : index
    %80 = vector.load %arg5[%c1_57, %c0_58, %c0_59] : memref<4x384x128xbf16, #tpu.memory_space<vmem>>, vector<1x384x128xbf16>
    %81 = vector.shape_cast %80 : vector<1x384x128xbf16> to vector<384x128xbf16>
    %c1_60 = arith.constant 1 : index
    %c0_61 = arith.constant 0 : index
    %c0_62 = arith.constant 0 : index
    %82 = vector.load %arg6[%c1_60, %c0_61, %c0_62] : memref<4x1x128xf32, #tpu.memory_space<vmem>>, vector<1x1x128xf32>
    %83 = vector.shape_cast %82 : vector<1x1x128xf32> to vector<1x128xf32>
    %c3_63 = arith.constant 3 : index
    %c0_64 = arith.constant 0 : index
    %c0_65 = arith.constant 0 : index
    %84 = vector.load %arg11[%c3_63, %c0_64, %c0_65] : memref<8x1x128xf32, #tpu.memory_space<vmem>>, vector<1x1x128xf32>
    %85 = vector.shape_cast %84 : vector<1x1x128xf32> to vector<1x128xf32>
    %86 = arith.truncf %79 : vector<16x128xf32> to vector<16x128xbf16>
    %c2_66 = arith.constant 2 : index
    %c0_67 = arith.constant 0 : index
    %c0_68 = arith.constant 0 : index
    %87 = vector.load %arg2[%c2_66, %c0_67, %c0_68] : memref<8x16x16xbf16, #tpu.memory_space<vmem>>, vector<1x16x16xbf16>
    %88 = vector.shape_cast %87 : vector<1x16x16xbf16> to vector<16x16xbf16>
    %cst_69 = arith.constant dense<0.000000e+00> : vector<16x128xf32>
    %89 = tpu.matmul %88, %86, %cst_69 {dimension_numbers = #tpu.dot_dimension_numbers<[1], [0], [0], [1], [0, 0, 1, 1], [], []>} : vector<16x16xbf16>, vector<16x128xbf16>, vector<16x128xf32> -> vector<16x128xf32>
    %90 = arith.truncf %89 : vector<16x128xf32> to vector<16x128xbf16>
    %c5_70 = arith.constant 5 : index
    %c0_71 = arith.constant 0 : index
    %c0_72 = arith.constant 0 : index
    %91 = vector.load %arg2[%c5_70, %c0_71, %c0_72] : memref<8x16x16xbf16, #tpu.memory_space<vmem>>, vector<1x16x16xbf16>
    %92 = vector.shape_cast %91 : vector<1x16x16xbf16> to vector<16x16xbf16>
    %cst_73 = arith.constant dense<0.000000e+00> : vector<16x128xf32>
    %93 = tpu.matmul %92, %86, %cst_73 {dimension_numbers = #tpu.dot_dimension_numbers<[1], [0], [0], [1], [0, 0, 1, 1], [], []>} : vector<16x16xbf16>, vector<16x128xbf16>, vector<16x128xf32> -> vector<16x128xf32>
    %94 = arith.truncf %93 : vector<16x128xf32> to vector<16x128xbf16>
    %95 = tpu.concatenate %90, %86, %94 in 1 : vector<16x128xbf16>, vector<16x128xbf16>, vector<16x128xbf16> -> vector<16x384xbf16>
    %cst_74 = arith.constant dense<0.000000e+00> : vector<16x128xf32>
    %96 = tpu.matmul %95, %81, %cst_74 {dimension_numbers = #tpu.dot_dimension_numbers<[1], [0], [0], [1], [0, 0, 1, 1], [], []>} : vector<16x384xbf16>, vector<384x128xbf16>, vector<16x128xf32> -> vector<16x128xf32>
    %97 = vector.broadcast %83 : vector<1x128xf32> to vector<16x128xf32>
    %98 = arith.addf %96, %97 : vector<16x128xf32>
    %cst_75 = arith.constant 0.000000e+00 : f32
    %99 = vector.broadcast %cst_75 : f32 to vector<16x128xf32>
    %100 = arith.cmpf oge, %98, %99 : vector<16x128xf32>
    %101 = vector.broadcast %85 : vector<1x128xf32> to vector<16x128xf32>
    %102 = arith.mulf %101, %98 : vector<16x128xf32>
    %103 = arith.select %100, %98, %102 : vector<16x128xi1>, vector<16x128xf32>
    %104 = arith.addf %103, %55 : vector<16x128xf32>
    %c2_76 = arith.constant 2 : index
    %c0_77 = arith.constant 0 : index
    %c0_78 = arith.constant 0 : index
    %105 = vector.load %arg3[%c2_76, %c0_77, %c0_78] : memref<4x384x128xbf16, #tpu.memory_space<vmem>>, vector<1x384x128xbf16>
    %106 = vector.shape_cast %105 : vector<1x384x128xbf16> to vector<384x128xbf16>
    %c2_79 = arith.constant 2 : index
    %c0_80 = arith.constant 0 : index
    %c0_81 = arith.constant 0 : index
    %107 = vector.load %arg4[%c2_79, %c0_80, %c0_81] : memref<4x1x128xf32, #tpu.memory_space<vmem>>, vector<1x1x128xf32>
    %108 = vector.shape_cast %107 : vector<1x1x128xf32> to vector<1x128xf32>
    %c4_82 = arith.constant 4 : index
    %c0_83 = arith.constant 0 : index
    %c0_84 = arith.constant 0 : index
    %109 = vector.load %arg11[%c4_82, %c0_83, %c0_84] : memref<8x1x128xf32, #tpu.memory_space<vmem>>, vector<1x1x128xf32>
    %110 = vector.shape_cast %109 : vector<1x1x128xf32> to vector<1x128xf32>
    %111 = arith.truncf %104 : vector<16x128xf32> to vector<16x128xbf16>
    %c1_85 = arith.constant 1 : index
    %c0_86 = arith.constant 0 : index
    %c0_87 = arith.constant 0 : index
    %112 = vector.load %arg2[%c1_85, %c0_86, %c0_87] : memref<8x16x16xbf16, #tpu.memory_space<vmem>>, vector<1x16x16xbf16>
    %113 = vector.shape_cast %112 : vector<1x16x16xbf16> to vector<16x16xbf16>
    %cst_88 = arith.constant dense<0.000000e+00> : vector<16x128xf32>
    %114 = tpu.matmul %113, %111, %cst_88 {dimension_numbers = #tpu.dot_dimension_numbers<[1], [0], [0], [1], [0, 0, 1, 1], [], []>} : vector<16x16xbf16>, vector<16x128xbf16>, vector<16x128xf32> -> vector<16x128xf32>
    %115 = arith.truncf %114 : vector<16x128xf32> to vector<16x128xbf16>
    %c6 = arith.constant 6 : index
    %c0_89 = arith.constant 0 : index
    %c0_90 = arith.constant 0 : index
    %116 = vector.load %arg2[%c6, %c0_89, %c0_90] : memref<8x16x16xbf16, #tpu.memory_space<vmem>>, vector<1x16x16xbf16>
    %117 = vector.shape_cast %116 : vector<1x16x16xbf16> to vector<16x16xbf16>
    %cst_91 = arith.constant dense<0.000000e+00> : vector<16x128xf32>
    %118 = tpu.matmul %117, %111, %cst_91 {dimension_numbers = #tpu.dot_dimension_numbers<[1], [0], [0], [1], [0, 0, 1, 1], [], []>} : vector<16x16xbf16>, vector<16x128xbf16>, vector<16x128xf32> -> vector<16x128xf32>
    %119 = arith.truncf %118 : vector<16x128xf32> to vector<16x128xbf16>
    %120 = tpu.concatenate %115, %111, %119 in 1 : vector<16x128xbf16>, vector<16x128xbf16>, vector<16x128xbf16> -> vector<16x384xbf16>
    %cst_92 = arith.constant dense<0.000000e+00> : vector<16x128xf32>
    %121 = tpu.matmul %120, %106, %cst_92 {dimension_numbers = #tpu.dot_dimension_numbers<[1], [0], [0], [1], [0, 0, 1, 1], [], []>} : vector<16x384xbf16>, vector<384x128xbf16>, vector<16x128xf32> -> vector<16x128xf32>
    %122 = vector.broadcast %108 : vector<1x128xf32> to vector<16x128xf32>
    %123 = arith.addf %121, %122 : vector<16x128xf32>
    %cst_93 = arith.constant 0.000000e+00 : f32
    %124 = vector.broadcast %cst_93 : f32 to vector<16x128xf32>
    %125 = arith.cmpf oge, %123, %124 : vector<16x128xf32>
    %126 = vector.broadcast %110 : vector<1x128xf32> to vector<16x128xf32>
    %127 = arith.mulf %126, %123 : vector<16x128xf32>
    %128 = arith.select %125, %123, %127 : vector<16x128xi1>, vector<16x128xf32>
    %c2_94 = arith.constant 2 : index
    %c0_95 = arith.constant 0 : index
    %c0_96 = arith.constant 0 : index
    %129 = vector.load %arg5[%c2_94, %c0_95, %c0_96] : memref<4x384x128xbf16, #tpu.memory_space<vmem>>, vector<1x384x128xbf16>
    %130 = vector.shape_cast %129 : vector<1x384x128xbf16> to vector<384x128xbf16>
    %c2_97 = arith.constant 2 : index
    %c0_98 = arith.constant 0 : index
    %c0_99 = arith.constant 0 : index
    %131 = vector.load %arg6[%c2_97, %c0_98, %c0_99] : memref<4x1x128xf32, #tpu.memory_space<vmem>>, vector<1x1x128xf32>
    %132 = vector.shape_cast %131 : vector<1x1x128xf32> to vector<1x128xf32>
    %c5_100 = arith.constant 5 : index
    %c0_101 = arith.constant 0 : index
    %c0_102 = arith.constant 0 : index
    %133 = vector.load %arg11[%c5_100, %c0_101, %c0_102] : memref<8x1x128xf32, #tpu.memory_space<vmem>>, vector<1x1x128xf32>
    %134 = vector.shape_cast %133 : vector<1x1x128xf32> to vector<1x128xf32>
    %135 = arith.truncf %128 : vector<16x128xf32> to vector<16x128xbf16>
    %c1_103 = arith.constant 1 : index
    %c0_104 = arith.constant 0 : index
    %c0_105 = arith.constant 0 : index
    %136 = vector.load %arg2[%c1_103, %c0_104, %c0_105] : memref<8x16x16xbf16, #tpu.memory_space<vmem>>, vector<1x16x16xbf16>
    %137 = vector.shape_cast %136 : vector<1x16x16xbf16> to vector<16x16xbf16>
    %cst_106 = arith.constant dense<0.000000e+00> : vector<16x128xf32>
    %138 = tpu.matmul %137, %135, %cst_106 {dimension_numbers = #tpu.dot_dimension_numbers<[1], [0], [0], [1], [0, 0, 1, 1], [], []>} : vector<16x16xbf16>, vector<16x128xbf16>, vector<16x128xf32> -> vector<16x128xf32>
    %139 = arith.truncf %138 : vector<16x128xf32> to vector<16x128xbf16>
    %c6_107 = arith.constant 6 : index
    %c0_108 = arith.constant 0 : index
    %c0_109 = arith.constant 0 : index
    %140 = vector.load %arg2[%c6_107, %c0_108, %c0_109] : memref<8x16x16xbf16, #tpu.memory_space<vmem>>, vector<1x16x16xbf16>
    %141 = vector.shape_cast %140 : vector<1x16x16xbf16> to vector<16x16xbf16>
    %cst_110 = arith.constant dense<0.000000e+00> : vector<16x128xf32>
    %142 = tpu.matmul %141, %135, %cst_110 {dimension_numbers = #tpu.dot_dimension_numbers<[1], [0], [0], [1], [0, 0, 1, 1], [], []>} : vector<16x16xbf16>, vector<16x128xbf16>, vector<16x128xf32> -> vector<16x128xf32>
    %143 = arith.truncf %142 : vector<16x128xf32> to vector<16x128xbf16>
    %144 = tpu.concatenate %139, %135, %143 in 1 : vector<16x128xbf16>, vector<16x128xbf16>, vector<16x128xbf16> -> vector<16x384xbf16>
    %cst_111 = arith.constant dense<0.000000e+00> : vector<16x128xf32>
    %145 = tpu.matmul %144, %130, %cst_111 {dimension_numbers = #tpu.dot_dimension_numbers<[1], [0], [0], [1], [0, 0, 1, 1], [], []>} : vector<16x384xbf16>, vector<384x128xbf16>, vector<16x128xf32> -> vector<16x128xf32>
    %146 = vector.broadcast %132 : vector<1x128xf32> to vector<16x128xf32>
    %147 = arith.addf %145, %146 : vector<16x128xf32>
    %cst_112 = arith.constant 0.000000e+00 : f32
    %148 = vector.broadcast %cst_112 : f32 to vector<16x128xf32>
    %149 = arith.cmpf oge, %147, %148 : vector<16x128xf32>
    %150 = vector.broadcast %134 : vector<1x128xf32> to vector<16x128xf32>
    %151 = arith.mulf %150, %147 : vector<16x128xf32>
    %152 = arith.select %149, %147, %151 : vector<16x128xi1>, vector<16x128xf32>
    %153 = arith.addf %152, %104 : vector<16x128xf32>
    %c3_113 = arith.constant 3 : index
    %c0_114 = arith.constant 0 : index
    %c0_115 = arith.constant 0 : index
    %154 = vector.load %arg3[%c3_113, %c0_114, %c0_115] : memref<4x384x128xbf16, #tpu.memory_space<vmem>>, vector<1x384x128xbf16>
    %155 = vector.shape_cast %154 : vector<1x384x128xbf16> to vector<384x128xbf16>
    %c3_116 = arith.constant 3 : index
    %c0_117 = arith.constant 0 : index
    %c0_118 = arith.constant 0 : index
    %156 = vector.load %arg4[%c3_116, %c0_117, %c0_118] : memref<4x1x128xf32, #tpu.memory_space<vmem>>, vector<1x1x128xf32>
    %157 = vector.shape_cast %156 : vector<1x1x128xf32> to vector<1x128xf32>
    %c6_119 = arith.constant 6 : index
    %c0_120 = arith.constant 0 : index
    %c0_121 = arith.constant 0 : index
    %158 = vector.load %arg11[%c6_119, %c0_120, %c0_121] : memref<8x1x128xf32, #tpu.memory_space<vmem>>, vector<1x1x128xf32>
    %159 = vector.shape_cast %158 : vector<1x1x128xf32> to vector<1x128xf32>
    %160 = arith.truncf %153 : vector<16x128xf32> to vector<16x128xbf16>
    %c0_122 = arith.constant 0 : index
    %c0_123 = arith.constant 0 : index
    %c0_124 = arith.constant 0 : index
    %161 = vector.load %arg2[%c0_122, %c0_123, %c0_124] : memref<8x16x16xbf16, #tpu.memory_space<vmem>>, vector<1x16x16xbf16>
    %162 = vector.shape_cast %161 : vector<1x16x16xbf16> to vector<16x16xbf16>
    %cst_125 = arith.constant dense<0.000000e+00> : vector<16x128xf32>
    %163 = tpu.matmul %162, %160, %cst_125 {dimension_numbers = #tpu.dot_dimension_numbers<[1], [0], [0], [1], [0, 0, 1, 1], [], []>} : vector<16x16xbf16>, vector<16x128xbf16>, vector<16x128xf32> -> vector<16x128xf32>
    %164 = arith.truncf %163 : vector<16x128xf32> to vector<16x128xbf16>
    %c7 = arith.constant 7 : index
    %c0_126 = arith.constant 0 : index
    %c0_127 = arith.constant 0 : index
    %165 = vector.load %arg2[%c7, %c0_126, %c0_127] : memref<8x16x16xbf16, #tpu.memory_space<vmem>>, vector<1x16x16xbf16>
    %166 = vector.shape_cast %165 : vector<1x16x16xbf16> to vector<16x16xbf16>
    %cst_128 = arith.constant dense<0.000000e+00> : vector<16x128xf32>
    %167 = tpu.matmul %166, %160, %cst_128 {dimension_numbers = #tpu.dot_dimension_numbers<[1], [0], [0], [1], [0, 0, 1, 1], [], []>} : vector<16x16xbf16>, vector<16x128xbf16>, vector<16x128xf32> -> vector<16x128xf32>
    %168 = arith.truncf %167 : vector<16x128xf32> to vector<16x128xbf16>
    %169 = tpu.concatenate %164, %160, %168 in 1 : vector<16x128xbf16>, vector<16x128xbf16>, vector<16x128xbf16> -> vector<16x384xbf16>
    %cst_129 = arith.constant dense<0.000000e+00> : vector<16x128xf32>
    %170 = tpu.matmul %169, %155, %cst_129 {dimension_numbers = #tpu.dot_dimension_numbers<[1], [0], [0], [1], [0, 0, 1, 1], [], []>} : vector<16x384xbf16>, vector<384x128xbf16>, vector<16x128xf32> -> vector<16x128xf32>
    %171 = vector.broadcast %157 : vector<1x128xf32> to vector<16x128xf32>
    %172 = arith.addf %170, %171 : vector<16x128xf32>
    %cst_130 = arith.constant 0.000000e+00 : f32
    %173 = vector.broadcast %cst_130 : f32 to vector<16x128xf32>
    %174 = arith.cmpf oge, %172, %173 : vector<16x128xf32>
    %175 = vector.broadcast %159 : vector<1x128xf32> to vector<16x128xf32>
    %176 = arith.mulf %175, %172 : vector<16x128xf32>
    %177 = arith.select %174, %172, %176 : vector<16x128xi1>, vector<16x128xf32>
    %c3_131 = arith.constant 3 : index
    %c0_132 = arith.constant 0 : index
    %c0_133 = arith.constant 0 : index
    %178 = vector.load %arg5[%c3_131, %c0_132, %c0_133] : memref<4x384x128xbf16, #tpu.memory_space<vmem>>, vector<1x384x128xbf16>
    %179 = vector.shape_cast %178 : vector<1x384x128xbf16> to vector<384x128xbf16>
    %c3_134 = arith.constant 3 : index
    %c0_135 = arith.constant 0 : index
    %c0_136 = arith.constant 0 : index
    %180 = vector.load %arg6[%c3_134, %c0_135, %c0_136] : memref<4x1x128xf32, #tpu.memory_space<vmem>>, vector<1x1x128xf32>
    %181 = vector.shape_cast %180 : vector<1x1x128xf32> to vector<1x128xf32>
    %c7_137 = arith.constant 7 : index
    %c0_138 = arith.constant 0 : index
    %c0_139 = arith.constant 0 : index
    %182 = vector.load %arg11[%c7_137, %c0_138, %c0_139] : memref<8x1x128xf32, #tpu.memory_space<vmem>>, vector<1x1x128xf32>
    %183 = vector.shape_cast %182 : vector<1x1x128xf32> to vector<1x128xf32>
    %184 = arith.truncf %177 : vector<16x128xf32> to vector<16x128xbf16>
    %c0_140 = arith.constant 0 : index
    %c0_141 = arith.constant 0 : index
    %c0_142 = arith.constant 0 : index
    %185 = vector.load %arg2[%c0_140, %c0_141, %c0_142] : memref<8x16x16xbf16, #tpu.memory_space<vmem>>, vector<1x16x16xbf16>
    %186 = vector.shape_cast %185 : vector<1x16x16xbf16> to vector<16x16xbf16>
    %cst_143 = arith.constant dense<0.000000e+00> : vector<16x128xf32>
    %187 = tpu.matmul %186, %184, %cst_143 {dimension_numbers = #tpu.dot_dimension_numbers<[1], [0], [0], [1], [0, 0, 1, 1], [], []>} : vector<16x16xbf16>, vector<16x128xbf16>, vector<16x128xf32> -> vector<16x128xf32>
    %188 = arith.truncf %187 : vector<16x128xf32> to vector<16x128xbf16>
    %c7_144 = arith.constant 7 : index
    %c0_145 = arith.constant 0 : index
    %c0_146 = arith.constant 0 : index
    %189 = vector.load %arg2[%c7_144, %c0_145, %c0_146] : memref<8x16x16xbf16, #tpu.memory_space<vmem>>, vector<1x16x16xbf16>
    %190 = vector.shape_cast %189 : vector<1x16x16xbf16> to vector<16x16xbf16>
    %cst_147 = arith.constant dense<0.000000e+00> : vector<16x128xf32>
    %191 = tpu.matmul %190, %184, %cst_147 {dimension_numbers = #tpu.dot_dimension_numbers<[1], [0], [0], [1], [0, 0, 1, 1], [], []>} : vector<16x16xbf16>, vector<16x128xbf16>, vector<16x128xf32> -> vector<16x128xf32>
    %192 = arith.truncf %191 : vector<16x128xf32> to vector<16x128xbf16>
    %193 = tpu.concatenate %188, %184, %192 in 1 : vector<16x128xbf16>, vector<16x128xbf16>, vector<16x128xbf16> -> vector<16x384xbf16>
    %cst_148 = arith.constant dense<0.000000e+00> : vector<16x128xf32>
    %194 = tpu.matmul %193, %179, %cst_148 {dimension_numbers = #tpu.dot_dimension_numbers<[1], [0], [0], [1], [0, 0, 1, 1], [], []>} : vector<16x384xbf16>, vector<384x128xbf16>, vector<16x128xf32> -> vector<16x128xf32>
    %195 = vector.broadcast %181 : vector<1x128xf32> to vector<16x128xf32>
    %196 = arith.addf %194, %195 : vector<16x128xf32>
    %cst_149 = arith.constant 0.000000e+00 : f32
    %197 = vector.broadcast %cst_149 : f32 to vector<16x128xf32>
    %198 = arith.cmpf oge, %196, %197 : vector<16x128xf32>
    %199 = vector.broadcast %183 : vector<1x128xf32> to vector<16x128xf32>
    %200 = arith.mulf %199, %196 : vector<16x128xf32>
    %201 = arith.select %198, %196, %200 : vector<16x128xi1>, vector<16x128xf32>
    %202 = arith.addf %201, %153 : vector<16x128xf32>
    %203 = arith.truncf %202 : vector<16x128xf32> to vector<16x128xbf16>
    %c0_150 = arith.constant 0 : index
    %c0_151 = arith.constant 0 : index
    %204 = vector.load %arg9[%c0_150, %c0_151] : memref<128x128xbf16, #tpu.memory_space<vmem>>, vector<128x128xbf16>
    %cst_152 = arith.constant dense<0.000000e+00> : vector<16x128xf32>
    %205 = tpu.matmul %203, %204, %cst_152 {dimension_numbers = #tpu.dot_dimension_numbers<[1], [0], [0], [1], [0, 0, 1, 1], [], []>} : vector<16x128xbf16>, vector<128x128xbf16>, vector<16x128xf32> -> vector<16x128xf32>
    %c0_153 = arith.constant 0 : index
    %c0_154 = arith.constant 0 : index
    %206 = vector.load %arg10[%c0_153, %c0_154] : memref<1x128xf32, #tpu.memory_space<vmem>>, vector<1x128xf32>
    %207 = vector.broadcast %206 : vector<1x128xf32> to vector<16x128xf32>
    %208 = arith.addf %205, %207 : vector<16x128xf32>
    %209 = math.tanh %208 : vector<16x128xf32>
    %c0_155 = arith.constant 0 : index
    %c0_156 = arith.constant 0 : index
    %210 = vector.load %arg12[%c0_155, %c0_156] : memref<16x128xf32, #tpu.memory_space<vmem>>, vector<16x128xf32>
    tpu.vector_store %arg12[%c0_155, %c0_156], %209 {strides = array<i32>} : memref<16x128xf32, #tpu.memory_space<vmem>>, vector<16x128xf32>,
    return
  }
  func.func @transform_0(%arg0: i32) -> (i32, i32) {
    %c0_i32 = arith.constant 0 : i32
    %c0_i32_0 = arith.constant 0 : i32
    return %arg0, %c0_i32 : i32, i32
  }
  func.func @transform_1(%arg0: i32) -> (i32, i32, i32) {
    %c0_i32 = arith.constant 0 : i32
    %c0_i32_0 = arith.constant 0 : i32
    %c0_i32_1 = arith.constant 0 : i32
    %c0_i32_2 = arith.constant 0 : i32
    return %c0_i32, %c0_i32_0, %c0_i32_1 : i32, i32, i32
  }
  func.func @transform_2(%arg0: i32) -> (i32, i32, i32) {
    %c0_i32 = arith.constant 0 : i32
    %c0_i32_0 = arith.constant 0 : i32
    %c0_i32_1 = arith.constant 0 : i32
    %c0_i32_2 = arith.constant 0 : i32
    return %c0_i32, %c0_i32_0, %c0_i32_1 : i32, i32, i32
  }
  func.func @transform_3(%arg0: i32) -> (i32, i32, i32) {
    %c0_i32 = arith.constant 0 : i32
    %c0_i32_0 = arith.constant 0 : i32
    %c0_i32_1 = arith.constant 0 : i32
    %c0_i32_2 = arith.constant 0 : i32
    return %c0_i32, %c0_i32_0, %c0_i32_1 : i32, i32, i32
  }
  func.func @transform_4(%arg0: i32) -> (i32, i32, i32) {
    %c0_i32 = arith.constant 0 : i32
    %c0_i32_0 = arith.constant 0 : i32
    %c0_i32_1 = arith.constant 0 : i32
    %c0_i32_2 = arith.constant 0 : i32
    return %c0_i32, %c0_i32_0, %c0_i32_1 : i32, i32, i32
  }
  func.func @transform_5(%arg0: i32) -> (i32, i32, i32) {
    %c0_i32 = arith.constant 0 : i32
    %c0_i32_0 = arith.constant 0 : i32
    %c0_i32_1 = arith.constant 0 : i32
    %c0_i32_2 = arith.constant 0 : i32
    return %c0_i32, %c0_i32_0, %c0_i32_1 : i32, i32, i32
  }
  func.func @transform_6(%arg0: i32) -> (i32, i32) {
    %c0_i32 = arith.constant 0 : i32
    %c0_i32_0 = arith.constant 0 : i32
    %c0_i32_1 = arith.constant 0 : i32
    return %c0_i32, %c0_i32_0 : i32, i32
  }
  func.func @transform_7(%arg0: i32) -> (i32, i32) {
    %c0_i32 = arith.constant 0 : i32
    %c0_i32_0 = arith.constant 0 : i32
    %c0_i32_1 = arith.constant 0 : i32
    return %c0_i32, %c0_i32_0 : i32, i32
  }
  func.func @transform_8(%arg0: i32) -> (i32, i32) {
    %c0_i32 = arith.constant 0 : i32
    %c0_i32_0 = arith.constant 0 : i32
    %c0_i32_1 = arith.constant 0 : i32
    return %c0_i32, %c0_i32_0 : i32, i32
  }
  func.func @transform_9(%arg0: i32) -> (i32, i32) {
    %c0_i32 = arith.constant 0 : i32
    %c0_i32_0 = arith.constant 0 : i32
    %c0_i32_1 = arith.constant 0 : i32
    return %c0_i32, %c0_i32_0 : i32, i32
  }
  func.func @transform_10(%arg0: i32) -> (i32, i32, i32) {
    %c0_i32 = arith.constant 0 : i32
    %c0_i32_0 = arith.constant 0 : i32
    %c0_i32_1 = arith.constant 0 : i32
    %c0_i32_2 = arith.constant 0 : i32
    return %c0_i32, %c0_i32_0, %c0_i32_1 : i32, i32, i32
  }
  func.func @transform_11(%arg0: i32) -> (i32, i32) {
    %c0_i32 = arith.constant 0 : i32
    %c0_i32_0 = arith.constant 0 : i32
    return %arg0, %c0_i32 : i32, i32
  }
}

</mosaic_0001>

<llo_original>
// kernel: _forward_packed.1
$region0: #{_forward_packed.1}
  #allocation0 [shape = 'u32[]', space=smem, size = 0x4, offset = 0x4, fixed_abs, tag = 'smem constant byte address 0x4 - core index']
  #allocation1 [shape = 'u32[72,128]{1,0:T(1,128)}', space=vmem, size = 0x9000, scoped, tag = 'internal scratch']
  %s0 = inlined_call_operand.vmem [shape: f32[32,128], index: 0, kind: input, shape index: {}]
  %s1 = inlined_call_operand.hbm [shape: bf16[8,16,16], index: 1, kind: input, shape index: {}]
  %s2 = inlined_call_operand.hbm [shape: bf16[4,384,128], index: 2, kind: input, shape index: {}]
  %s3 = inlined_call_operand.hbm [shape: f32[4,1,128], index: 3, kind: input, shape index: {}]
  %s4 = inlined_call_operand.hbm [shape: bf16[4,384,128], index: 4, kind: input, shape index: {}]
  %s5 = inlined_call_operand.hbm [shape: f32[4,1,128], index: 5, kind: input, shape index: {}]
  %s6 = inlined_call_operand.vmem [shape: bf16[128,128], index: 6, kind: input, shape index: {}]
  %s7 = inlined_call_operand.hbm [shape: f32[1,128], index: 7, kind: input, shape index: {}]
  %s8 = inlined_call_operand.vmem [shape: bf16[128,128], index: 8, kind: input, shape index: {}]
  %s9 = inlined_call_operand.vmem [shape: f32[1,128], index: 9, kind: input, shape index: {}]
  %s10 = inlined_call_operand.hbm [shape: f32[8,1,128], index: 10, kind: input, shape index: {}]
  %s11 = inlined_call_operand.vmem [shape: f32[32,128], index: 11, kind: output, shape index: {}]
  %s12 = sld [smem:[#allocation0]]
  $region105: #{_forward_packed.1} parent=0
    _
  %s14 = ssub.s32 1, %s12
  %s15 = scalar_select 0, %s14, %s12
  $region1: #{_forward_packed.1} parent=0
    #allocation2 [shape = 'u8[32768]{0}', space=vmem, size = 0x8000, scoped, tag = 'input window, operand 1, single buffered']
    #allocation3 [shape = 's32[2]{0}', space=sflag, size = 0x8, scoped, tag = 'scoped memory for _forward_packed.1']
    #allocation4 [shape = 'u8[393216]{0}', space=vmem, size = 0x60000, scoped, tag = 'input window, operand 2, single buffered']
    #allocation5 [shape = 's32[1]{0}', space=sflag, size = 0x4, scoped, tag = 'scoped memory for _forward_packed.1']
    #allocation6 [shape = 'u8[2048]{0}', space=vmem, size = 0x800, scoped, tag = 'input window, operand 3, single buffered']
    #allocation7 [shape = 'u8[393216]{0}', space=vmem, size = 0x60000, scoped, tag = 'input window, operand 4, single buffered']
    #allocation8 [shape = 's32[1]{0}', space=sflag, size = 0x4, scoped, tag = 'scoped memory for _forward_packed.1']
    #allocation9 [shape = 'u8[2048]{0}', space=vmem, size = 0x800, scoped, tag = 'input window, operand 5, single buffered']
    #allocation10 [shape = 'u8[512]{0}', space=vmem, size = 0x400, scoped, tag = 'input window, operand 7, single buffered']
    #allocation11 [shape = 's32[1]{0}', space=sflag, size = 0x4, scoped, tag = 'scoped memory for _forward_packed.1']
    #allocation12 [shape = 'u8[4096]{0}', space=vmem, size = 0x1000, scoped, tag = 'input window, operand 10, single buffered']
    %16 = vsyncpa [#allocation3], 0
    %17 = vsyncpa [#allocation5], 0
    %18 = vsyncpa [#allocation8], 0
    %19 = vsyncpa [#allocation11], 0
    loop: start=0, step=1, limit=4
    $region2: #{_forward_packed.1} parent=1 // loop_pre_header
      _
    $region3: #{_forward_packed.1} parent=1 // loop_header
      %s21 = sphi 0, %s25
      %p22 = scmp.ge.s32.totalorder %s21, 4
      %s31 = sphi 0, %s33
      %s34 = sphi 0, %s31
      %s35 = sphi 0, %s34
      %s51 = sphi 0, %s35
      %s55 = sphi 0, %s55
      %s57 = sphi 0, %s55
      %s58 = sphi 0, %s57
      %s72 = sphi 0, %s58
      %s76 = sphi 0, %s76
      %s78 = sphi 0, %s76
      %s79 = sphi 0, %s78
      %s93 = sphi 0, %s79
      %s97 = sphi 0, %s97
      %s99 = sphi 0, %s97
      %s100 = sphi 0, %s99
      %s114 = sphi 0, %s100
      %s118 = sphi 0, %s118
      %s120 = sphi 0, %s118
      %s121 = sphi 0, %s120
      %s135 = sphi 0, %s121
      %s139 = sphi 0, %s139
      %s141 = sphi 0, %s139
      %s142 = sphi 0, %s141
      %s156 = sphi 0, %s142
      %s160 = sphi 0, %s160
      %s162 = sphi 0, %s160
      %s163 = sphi 0, %s162
      %s177 = sphi 0, %s163
      %s181 = sphi 0, %s181
      %s183 = sphi 0, %s181
      %s184 = sphi 0, %s183
      %s198 = sphi 0, %s184
      %s202 = sphi 0, %s202
      %s204 = sphi 0, %s202
      %s205 = sphi 0, %s204
      %s219 = sphi 0, %s205
      %s223 = sphi 0, %s223
      %s225 = sphi 0, %s223
      %s226 = sphi 0, %s225
      %s240 = sphi 0, %s226
      %s244 = sphi 0, %s244
      %s246 = sphi 0, %s244
      %s247 = sphi 0, %s246
      %s261 = sphi 0, %s247
      %s267 = sphi 0, %s269
      %s270 = sphi 0, %s267
      %s271 = sphi 0, %s270
      %s287 = sphi 0, %s271
    $region4: #{_forward_packed.1} parent=1 // loop_header_branch
      %24 = sbr.rel (%p22) target = $region8
    $region5: #{_forward_packed.1} parent=1 // loop_body
      %s26 = ssub.s32 %s21, 1
      %s27 = ssub.s32 %s21, 2
      %s28 = sadd.s32 %s21, 1
      %s29 = ssub.s32 %s21, %s28
      %p30 = scmp.eq.s32.totalorder %s29, 0
      %s32 = sadd.s32 %s31, 1
      %s33 = scalar_select %p30, %s31, %s32
      %p36 = pneg %p30
      %p37 = scmp.eq.s32.totalorder %s21, 1
      %p38 = por %p36, %p37
      %p39 = scmp.ne.s32.totalorder %s31, %s34
      %p40 = scmp.eq.s32.totalorder %s21, 0
      %p41 = por %p39, %p40
      %p42 = scmp.ne.s32.totalorder %s31, %s34
      %p43 = scmp.eq.s32.totalorder %s26, 1
      %p44 = por %p42, %p43
      %p45 = scmp.ne.s32.totalorder %s34, %s35
      %p46 = scmp.eq.s32.totalorder %s26, 0
      %p47 = por %p45, %p46
      %p48 = scmp.ne.s32.totalorder %s34, %s35
      %p49 = scmp.eq.s32.totalorder %s27, 1
      %p50 = por %p48, %p49
      %p52 = scmp.ne.s32.totalorder %s35, %s51
      %p53 = scmp.eq.s32.totalorder %s27, 0
      %p54 = por %p52, %p53
      %s56 = sadd.s32 %s55, 1
      %p59 = scmp.eq.s32.totalorder %s21, 1
      %p60 = scmp.ne.s32.totalorder %s55, %s57
      %p61 = scmp.eq.s32.totalorder %s21, 0
      %p62 = por %p60, %p61
      %p63 = scmp.ne.s32.totalorder %s55, %s57
      %p64 = scmp.eq.s32.totalorder %s26, 1
      %p65 = por %p63, %p64
      %p66 = scmp.ne.s32.totalorder %s57, %s58
      %p67 = scmp.eq.s32.totalorder %s26, 0
      %p68 = por %p66, %p67
      %p69 = scmp.ne.s32.totalorder %s57, %s58
      %p70 = scmp.eq.s32.totalorder %s27, 1
      %p71 = por %p69, %p70
      %p73 = scmp.ne.s32.totalorder %s58, %s72
      %p74 = scmp.eq.s32.totalorder %s27, 0
      %p75 = por %p73, %p74
      %s77 = sadd.s32 %s76, 1
      %p80 = scmp.eq.s32.totalorder %s21, 1
      %p81 = scmp.ne.s32.totalorder %s76, %s78
      %p82 = scmp.eq.s32.totalorder %s21, 0
      %p83 = por %p81, %p82
      %p84 = scmp.ne.s32.totalorder %s76, %s78
      %p85 = scmp.eq.s32.totalorder %s26, 1
      %p86 = por %p84, %p85
      %p87 = scmp.ne.s32.totalorder %s78, %s79
      %p88 = scmp.eq.s32.totalorder %s26, 0
      %p89 = por %p87, %p88
      %p90 = scmp.ne.s32.totalorder %s78, %s79
      %p91 = scmp.eq.s32.totalorder %s27, 1
      %p92 = por %p90, %p91
      %p94 = scmp.ne.s32.totalorder %s79, %s93
      %p95 = scmp.eq.s32.totalorder %s27, 0
      %p96 = por %p94, %p95
      %s98 = sadd.s32 %s97, 1
      %p101 = scmp.eq.s32.totalorder %s21, 1
      %p102 = scmp.ne.s32.totalorder %s97, %s99
      %p103 = scmp.eq.s32.totalorder %s21, 0
      %p104 = por %p102, %p103
      %p105 = scmp.ne.s32.totalorder %s97, %s99
      %p106 = scmp.eq.s32.totalorder %s26, 1
      %p107 = por %p105, %p106
      %p108 = scmp.ne.s32.totalorder %s99, %s100
      %p109 = scmp.eq.s32.totalorder %s26, 0
      %p110 = por %p108, %p109
      %p111 = scmp.ne.s32.totalorder %s99, %s100
      %p112 = scmp.eq.s32.totalorder %s27, 1
      %p113 = por %p111, %p112
      %p115 = scmp.ne.s32.totalorder %s100, %s114
      %p116 = scmp.eq.s32.totalorder %s27, 0
      %p117 = por %p115, %p116
      %s119 = sadd.s32 %s118, 1
      %p122 = scmp.eq.s32.totalorder %s21, 1
      %p123 = scmp.ne.s32.totalorder %s118, %s120
      %p124 = scmp.eq.s32.totalorder %s21, 0
      %p125 = por %p123, %p124
      %p126 = scmp.ne.s32.totalorder %s118, %s120
      %p127 = scmp.eq.s32.totalorder %s26, 1
      %p128 = por %p126, %p127
      %p129 = scmp.ne.s32.totalorder %s120, %s121
      %p130 = scmp.eq.s32.totalorder %s26, 0
      %p131 = por %p129, %p130
      %p132 = scmp.ne.s32.totalorder %s120, %s121
      %p133 = scmp.eq.s32.totalorder %s27, 1
      %p134 = por %p132, %p133
      %p136 = scmp.ne.s32.totalorder %s121, %s135
      %p137 = scmp.eq.s32.totalorder %s27, 0
      %p138 = por %p136, %p137
      %s140 = sadd.s32 %s139, 1
      %p143 = scmp.eq.s32.totalorder %s21, 1
      %p144 = scmp.ne.s32.totalorder %s139, %s141
      %p145 = scmp.eq.s32.totalorder %s21, 0
      %p146 = por %p144, %p145
      %p147 = scmp.ne.s32.totalorder %s139, %s141
      %p148 = scmp.eq.s32.totalorder %s26, 1
      %p149 = por %p147, %p148
      %p150 = scmp.ne.s32.totalorder %s141, %s142
      %p151 = scmp.eq.s32.totalorder %s26, 0
      %p152 = por %p150, %p151
      %p153 = scmp.ne.s32.totalorder %s141, %s142
      %p154 = scmp.eq.s32.totalorder %s27, 1
      %p155 = por %p153, %p154
      %p157 = scmp.ne.s32.totalorder %s142, %s156
      %p158 = scmp.eq.s32.totalorder %s27, 0
      %p159 = por %p157, %p158
      %s161 = sadd.s32 %s160, 1
      %p164 = scmp.eq.s32.totalorder %s21, 1
      %p165 = scmp.ne.s32.totalorder %s160, %s162
      %p166 = scmp.eq.s32.totalorder %s21, 0
      %p167 = por %p165, %p166
      %p168 = scmp.ne.s32.totalorder %s160, %s162
      %p169 = scmp.eq.s32.totalorder %s26, 1
      %p170 = por %p168, %p169
      %p171 = scmp.ne.s32.totalorder %s162, %s163
      %p172 = scmp.eq.s32.totalorder %s26, 0
      %p173 = por %p171, %p172
      %p174 = scmp.ne.s32.totalorder %s162, %s163
      %p175 = scmp.eq.s32.totalorder %s27, 1
      %p176 = por %p174, %p175
      %p178 = scmp.ne.s32.totalorder %s163, %s177
      %p179 = scmp.eq.s32.totalorder %s27, 0
      %p180 = por %p178, %p179
      %s182 = sadd.s32 %s181, 1
      %p185 = scmp.eq.s32.totalorder %s21, 1
      %p186 = scmp.ne.s32.totalorder %s181, %s183
      %p187 = scmp.eq.s32.totalorder %s21, 0
      %p188 = por %p186, %p187
      %p189 = scmp.ne.s32.totalorder %s181, %s183
      %p190 = scmp.eq.s32.totalorder %s26, 1
      %p191 = por %p189, %p190
      %p192 = scmp.ne.s32.totalorder %s183, %s184
      %p193 = scmp.eq.s32.totalorder %s26, 0
      %p194 = por %p192, %p193
      %p195 = scmp.ne.s32.totalorder %s183, %s184
      %p196 = scmp.eq.s32.totalorder %s27, 1
      %p197 = por %p195, %p196
      %p199 = scmp.ne.s32.totalorder %s184, %s198
      %p200 = scmp.eq.s32.totalorder %s27, 0
      %p201 = por %p199, %p200
      %s203 = sadd.s32 %s202, 1
      %p206 = scmp.eq.s32.totalorder %s21, 1
      %p207 = scmp.ne.s32.totalorder %s202, %s204
      %p208 = scmp.eq.s32.totalorder %s21, 0
      %p209 = por %p207, %p208
      %p210 = scmp.ne.s32.totalorder %s202, %s204
      %p211 = scmp.eq.s32.totalorder %s26, 1
      %p212 = por %p210, %p211
      %p213 = scmp.ne.s32.totalorder %s204, %s205
      %p214 = scmp.eq.s32.totalorder %s26, 0
      %p215 = por %p213, %p214
      %p216 = scmp.ne.s32.totalorder %s204, %s205
      %p217 = scmp.eq.s32.totalorder %s27, 1
      %p218 = por %p216, %p217
      %p220 = scmp.ne.s32.totalorder %s205, %s219
      %p221 = scmp.eq.s32.totalorder %s27, 0
      %p222 = por %p220, %p221
      %s224 = sadd.s32 %s223, 1
      %p227 = scmp.eq.s32.totalorder %s21, 1
      %p228 = scmp.ne.s32.totalorder %s223, %s225
      %p229 = scmp.eq.s32.totalorder %s21, 0
      %p230 = por %p228, %p229
      %p231 = scmp.ne.s32.totalorder %s223, %s225
      %p232 = scmp.eq.s32.totalorder %s26, 1
      %p233 = por %p231, %p232
      %p234 = scmp.ne.s32.totalorder %s225, %s226
      %p235 = scmp.eq.s32.totalorder %s26, 0
      %p236 = por %p234, %p235
      %p237 = scmp.ne.s32.totalorder %s225, %s226
      %p238 = scmp.eq.s32.totalorder %s27, 1
      %p239 = por %p237, %p238
      %p241 = scmp.ne.s32.totalorder %s226, %s240
      %p242 = scmp.eq.s32.totalorder %s27, 0
      %p243 = por %p241, %p242
      %s245 = sadd.s32 %s244, 1
      %p248 = scmp.eq.s32.totalorder %s21, 1
      %p249 = scmp.ne.s32.totalorder %s244, %s246
      %p250 = scmp.eq.s32.totalorder %s21, 0
      %p251 = por %p249, %p250
      %p252 = scmp.ne.s32.totalorder %s244, %s246
      %p253 = scmp.eq.s32.totalorder %s26, 1
      %p254 = por %p252, %p253
      %p255 = scmp.ne.s32.totalorder %s246, %s247
      %p256 = scmp.eq.s32.totalorder %s26, 0
      %p257 = por %p255, %p256
      %p258 = scmp.ne.s32.totalorder %s246, %s247
      %p259 = scmp.eq.s32.totalorder %s27, 1
      %p260 = por %p258, %p259
      %p262 = scmp.ne.s32.totalorder %s247, %s261
      %p263 = scmp.eq.s32.totalorder %s27, 0
      %p264 = por %p262, %p263
      %s265 = ssub.s32 %s21, %s28
      %p266 = scmp.eq.s32.totalorder %s265, 0
      %s268 = sadd.s32 %s267, 1
      %s269 = scalar_select %p266, %s267, %s268
      %p272 = pneg %p266
      %p273 = scmp.eq.s32.totalorder %s21, 1
      %p274 = por %p272, %p273
      %p275 = scmp.ne.s32.totalorder %s267, %s270
      %p276 = scmp.eq.s32.totalorder %s21, 0
      %p277 = por %p275, %p276
      %p278 = scmp.ne.s32.totalorder %s267, %s270
      %p279 = scmp.eq.s32.totalorder %s26, 1
      %p280 = por %p278, %p279
      %p281 = scmp.ne.s32.totalorder %s270, %s271
      %p282 = scmp.eq.s32.totalorder %s26, 0
      %p283 = por %p281, %p282
      %p284 = scmp.ne.s32.totalorder %s270, %s271
      %p285 = scmp.eq.s32.totalorder %s27, 1
      %p286 = por %p284, %p285
      %p288 = scmp.ne.s32.totalorder %s271, %s287
      %p289 = scmp.eq.s32.totalorder %s27, 0
      %p290 = por %p288, %p289
      %p291 = scmp.le.s32.totalorder 1, %s21
      %p292 = scmp.lt.s32.totalorder %s21, 3
      %p293 = pnand %p291, %p292
      %p294 = pneg %p293
      // Predicated region
      $region9: #{_forward_packed.1} parent=5 // pred_check
        _
      $region10: #{_forward_packed.1} parent=5 // pred_check_branch
        %296 = sbr.rel (%p293) target = $region12
      $region11: #{_forward_packed.1} parent=5 // pred_region
        %s297 = ssub.s32 %s21, 1
        // Predicated region
        $region13: #{_forward_packed.1} parent=11 // pred_check
          %p298 = pneg %p68
        $region14: #{_forward_packed.1} parent=11 // pred_check_branch
          %300 = sbr.rel (%p298) target = $region16
        $region15: #{_forward_packed.1} parent=11 // pred_region
          %302 = vsyncadd [#allocation3], 0
          %s303 = sshll.u32 %s1, 4
          %s304 = int_to_ptr.hbm [resolvable:$true] %s303
          %s305 = sshll.u32 [#allocation2], 4
          %s306 = int_to_ptr.vmem [resolvable:$true] %s305
          %311 = dma.hbm_to_vmem [thread:$0]  %s304, 1024, %s306, [#allocation3], 64, 64, 4
        $region16: #{_forward_packed.1} parent=11 // pred_fallthru
          _
        // Predicated region
        $region17: #{_forward_packed.1} parent=11 // pred_check
          %p312 = pneg %p89
        $region18: #{_forward_packed.1} parent=11 // pred_check_branch
          %314 = sbr.rel (%p312) target = $region20
        $region19: #{_forward_packed.1} parent=11 // pred_region
          %316 = vsyncadd [#allocation5], 0
          %s317 = sshll.u32 %s2, 4
          %s318 = int_to_ptr.hbm [resolvable:$true] %s317
          %s319 = sshll.u32 [#allocation4], 4
          %s320 = int_to_ptr.vmem [resolvable:$true] %s319
          %325 = dma.hbm_to_vmem [thread:$0]  %s318, 12288, %s320, [#allocation5], 64, 64, 4
        $region20: #{_forward_packed.1} parent=11 // pred_fallthru
          _
        // Predicated region
        $region21: #{_forward_packed.1} parent=11 // pred_check
          %p326 = pneg %p110
        $region22: #{_forward_packed.1} parent=11 // pred_check_branch
          %328 = sbr.rel (%p326) target = $region24
        $region23: #{_forward_packed.1} parent=11 // pred_region
          %330 = vsyncadd [#allocation5], 0
          %s331 = sshll.u32 %s3, 4
          %s332 = int_to_ptr.hbm [resolvable:$true] %s331
          %s333 = sshll.u32 [#allocation6], 4
          %s334 = int_to_ptr.vmem [resolvable:$true] %s333
          %339 = dma.hbm_to_vmem [thread:$0]  %s332, 64, %s334, [#allocation5], 16, 16, 1
        $region24: #{_forward_packed.1} parent=11 // pred_fallthru
          _
        // Predicated region
        $region25: #{_forward_packed.1} parent=11 // pred_check
          %p340 = pneg %p131
        $region26: #{_forward_packed.1} parent=11 // pred_check_branch
          %342 = sbr.rel (%p340) target = $region28
        $region27: #{_forward_packed.1} parent=11 // pred_region
          %344 = vsyncadd [#allocation8], 0
          %s345 = sshll.u32 %s4, 4
          %s346 = int_to_ptr.hbm [resolvable:$true] %s345
          %s347 = sshll.u32 [#allocation7], 4
          %s348 = int_to_ptr.vmem [resolvable:$true] %s347
          %353 = dma.hbm_to_vmem [thread:$0]  %s346, 12288, %s348, [#allocation8], 64, 64, 4
        $region28: #{_forward_packed.1} parent=11 // pred_fallthru
          _
        // Predicated region
        $region29: #{_forward_packed.1} parent=11 // pred_check
          %p354 = pneg %p152
        $region30: #{_forward_packed.1} parent=11 // pred_check_branch
          %356 = sbr.rel (%p354) target = $region32
        $region31: #{_forward_packed.1} parent=11 // pred_region
          %358 = vsyncadd [#allocation8], 0
          %s359 = sshll.u32 %s5, 4
          %s360 = int_to_ptr.hbm [resolvable:$true] %s359
          %s361 = sshll.u32 [#allocation9], 4
          %s362 = int_to_ptr.vmem [resolvable:$true] %s361
          %367 = dma.hbm_to_vmem [thread:$0]  %s360, 64, %s362, [#allocation8], 16, 16, 1
        $region32: #{_forward_packed.1} parent=11 // pred_fallthru
          _
        // Predicated region
        $region33: #{_forward_packed.1} parent=11 // pred_check
          %p368 = pneg %p173
        $region34: #{_forward_packed.1} parent=11 // pred_check_branch
          %370 = sbr.rel (%p368) target = $region36
        $region35: #{_forward_packed.1} parent=11 // pred_region
          _
        $region36: #{_forward_packed.1} parent=11 // pred_fallthru
          _
        // Predicated region
        $region37: #{_forward_packed.1} parent=11 // pred_check
          %p371 = pneg %p194
        $region38: #{_forward_packed.1} parent=11 // pred_check_branch
          %373 = sbr.rel (%p371) target = $region40
        $region39: #{_forward_packed.1} parent=11 // pred_region
          %375 = vsyncadd [#allocation11], 0
          %s377 = sshll.u32 %s7, 4
          %s378 = int_to_ptr.hbm [resolvable:$true] %s377
          %s379 = sshll.u32 [#allocation10], 4
          %s380 = int_to_ptr.vmem [resolvable:$true] %s379
          %382 = dma.hbm_to_vmem [thread:$0]  %s378, 16, %s380, [#allocation11]
        $region40: #{_forward_packed.1} parent=11 // pred_fallthru
          _
        // Predicated region
        $region41: #{_forward_packed.1} parent=11 // pred_check
          %p383 = pneg %p215
        $region42: #{_forward_packed.1} parent=11 // pred_check_branch
          %385 = sbr.rel (%p383) target = $region44
        $region43: #{_forward_packed.1} parent=11 // pred_region
          _
        $region44: #{_forward_packed.1} parent=11 // pred_fallthru
          _
        // Predicated region
        $region45: #{_forward_packed.1} parent=11 // pred_check
          %p386 = pneg %p236
        $region46: #{_forward_packed.1} parent=11 // pred_check_branch
          %388 = sbr.rel (%p386) target = $region48
        $region47: #{_forward_packed.1} parent=11 // pred_region
          _
        $region48: #{_forward_packed.1} parent=11 // pred_fallthru
          _
        // Predicated region
        $region49: #{_forward_packed.1} parent=11 // pred_check
          %p389 = pneg %p257
        $region50: #{_forward_packed.1} parent=11 // pred_check_branch
          %391 = sbr.rel (%p389) target = $region52
        $region51: #{_forward_packed.1} parent=11 // pred_region
          %393 = vsyncadd [#allocation11], 0
          %s394 = sshll.u32 %s10, 4
          %s395 = int_to_ptr.hbm [resolvable:$true] %s394
          %s396 = sshll.u32 [#allocation12], 4
          %s397 = int_to_ptr.vmem [resolvable:$true] %s396
          %402 = dma.hbm_to_vmem [thread:$0]  %s395, 128, %s397, [#allocation11], 16, 16, 1
        $region52: #{_forward_packed.1} parent=11 // pred_fallthru
          _
      $region12: #{_forward_packed.1} parent=5 // pred_fallthru
        _
      %p403 = scmp.lt.s32.totalorder %s21, 2
      // Predicated region
      $region53: #{_forward_packed.1} parent=5 // pred_check
        %p404 = pneg %p403
      $region54: #{_forward_packed.1} parent=5 // pred_check_branch
        %406 = sbr.rel (%p404) target = $region56
      $region55: #{_forward_packed.1} parent=5 // pred_region
        // Predicated region
        $region57: #{_forward_packed.1} parent=55 // pred_check
          %p407 = pneg %p41
        $region58: #{_forward_packed.1} parent=55 // pred_check_branch
          %409 = sbr.rel (%p407) target = $region60
        $region59: #{_forward_packed.1} parent=55 // pred_region
          %s410 = smul.u32 2, %s21
          %p411 = scmp.lt.s32.totalorder %s410, 3
          %s412 = scalar_select %p411, %s410, 3
          %s413 = smul.addr %s412, 8
          %s414 = scalar_lea.vmem %s0, %s413
          %s415 = smul.u32 2, %s21
        $region60: #{_forward_packed.1} parent=55 // pred_fallthru
          _
      $region56: #{_forward_packed.1} parent=5 // pred_fallthru
        _
      %p416 = scmp.le.s32.totalorder 1, %s21
      %p417 = scmp.lt.s32.totalorder %s21, 3
      %p418 = pnand %p416, %p417
      %p419 = pneg %p418
      // Predicated region
      $region61: #{_forward_packed.1} parent=5 // pred_check
        _
      $region62: #{_forward_packed.1} parent=5 // pred_check_branch
        %421 = sbr.rel (%p418) target = $region64
      $region63: #{_forward_packed.1} parent=5 // pred_region
        %s422 = ssub.s32 %s21, 1
        // Predicated region
        $region65: #{_forward_packed.1} parent=63 // pred_check
          %p423 = pneg %p68
        $region66: #{_forward_packed.1} parent=63 // pred_check_branch
          %425 = sbr.rel (%p423) target = $region68
        $region67: #{_forward_packed.1} parent=63 // pred_region
          %427 = dma.done [#allocation3], 1024
        $region68: #{_forward_packed.1} parent=63 // pred_fallthru
          _
        // Predicated region
        $region69: #{_forward_packed.1} parent=63 // pred_check
          %p428 = pneg %p89
        $region70: #{_forward_packed.1} parent=63 // pred_check_branch
          %430 = sbr.rel (%p428) target = $region72
        $region71: #{_forward_packed.1} parent=63 // pred_region
          %432 = dma.done [#allocation5], 12288
        $region72: #{_forward_packed.1} parent=63 // pred_fallthru
          _
        // Predicated region
        $region73: #{_forward_packed.1} parent=63 // pred_check
          %p433 = pneg %p110
        $region74: #{_forward_packed.1} parent=63 // pred_check_branch
          %435 = sbr.rel (%p433) target = $region76
        $region75: #{_forward_packed.1} parent=63 // pred_region
          %437 = dma.done [#allocation5], 64
        $region76: #{_forward_packed.1} parent=63 // pred_fallthru
          _
        // Predicated region
        $region77: #{_forward_packed.1} parent=63 // pred_check
          %p438 = pneg %p131
        $region78: #{_forward_packed.1} parent=63 // pred_check_branch
          %440 = sbr.rel (%p438) target = $region80
        $region79: #{_forward_packed.1} parent=63 // pred_region
          %442 = dma.done [#allocation8], 12288
        $region80: #{_forward_packed.1} parent=63 // pred_fallthru
          _
        // Predicated region
        $region81: #{_forward_packed.1} parent=63 // pred_check
          %p443 = pneg %p152
        $region82: #{_forward_packed.1} parent=63 // pred_check_branch
          %445 = sbr.rel (%p443) target = $region84
        $region83: #{_forward_packed.1} parent=63 // pred_region
          %447 = dma.done [#allocation8], 64
        $region84: #{_forward_packed.1} parent=63 // pred_fallthru
          _
        // Predicated region
        $region85: #{_forward_packed.1} parent=63 // pred_check
          %p448 = pneg %p194
        $region86: #{_forward_packed.1} parent=63 // pred_check_branch
          %450 = sbr.rel (%p448) target = $region88
        $region87: #{_forward_packed.1} parent=63 // pred_region
          %452 = dma.done [#allocation11], 16
        $region88: #{_forward_packed.1} parent=63 // pred_fallthru
          _
        // Predicated region
        $region89: #{_forward_packed.1} parent=63 // pred_check
          %p453 = pneg %p257
        $region90: #{_forward_packed.1} parent=63 // pred_check_branch
          %455 = sbr.rel (%p453) target = $region92
        $region91: #{_forward_packed.1} parent=63 // pred_region
          %457 = dma.done [#allocation11], 128
        $region92: #{_forward_packed.1} parent=63 // pred_fallthru
          _
        %s458 = smul.u32 2, %s26
        %p459 = scmp.lt.s32.totalorder %s458, 3
        %s460 = scalar_select %p459, %s458, 3
        %s461 = smul.addr %s460, 8
        %s462 = scalar_lea.vmem %s0, %s461
        %p463 = pneg %p47
        %p464 = pneg %p44
        %p465 = pneg %p68
        %p466 = pneg %p65
        %p467 = pneg %p89
        %p468 = pneg %p86
        %p469 = pneg %p110
        %p470 = pneg %p107
        %p471 = pneg %p131
        %p472 = pneg %p128
        %p473 = pneg %p152
        %p474 = pneg %p149
        %p475 = pneg %p173
        %p476 = pneg %p170
        %p477 = pneg %p194
        %p478 = pneg %p191
        %p479 = pneg %p215
        %p480 = pneg %p212
        %p481 = pneg %p236
        %p482 = pneg %p233
        %p483 = pneg %p257
        %p484 = pneg %p254
        %p485 = pneg %p283
        %p486 = pneg %p280
        %s487 = smul.u32 2, %s26
        %p488 = scmp.lt.s32.totalorder %s487, 3
        %s489 = scalar_select %p488, %s487, 3
        %s490 = smul.addr %s489, 8
        %s491 = scalar_lea.vmem %s11, %s490
        %s492 = smul.u32 2, %s26
        %p493 = scmp.lt.s32.totalorder %s492, 3
        %s494 = scalar_select %p493, %s492, 3
        %s495 = smul.addr %s494, 8
        %s496 = scalar_lea.vmem %s0, %s495
        %s497 = smul.u32 2, %s26
        %s498 = smul.u32 2, %s26
        %p499 = scmp.lt.s32.totalorder %s498, 3
        %s500 = scalar_select %p499, %s498, 3
        %s501 = smul.addr %s500, 8
        %s502 = scalar_lea.vmem %s11, %s501
        %s503 = smul.u32 2, %s26
        %v505 = vld [vmem:[%s496] sm:$0xff]
        %v506 = vld [vmem:[%s496 + $0x8] sm:$0xff]
        %v507 = vld [vmem:[#allocation4] sm:$0xf]
        %v508 = vld [vmem:[#allocation4 + $0x4] sm:$0xf]
        %v509 = vld [vmem:[#allocation4 + $0x8] sm:$0xf]
        %v510 = vld [vmem:[#allocation4 + $0xc] sm:$0xf]
        %v511 = vld [vmem:[#allocation4 + $0x10] sm:$0xf]
        %v512 = vld [vmem:[#allocation4 + $0x14] sm:$0xf]
        %v513 = vld [vmem:[#allocation4 + $0x18] sm:$0xf]
        %v514 = vld [vmem:[#allocation4 + $0x1c] sm:$0xf]
        %v515 = vld [vmem:[#allocation4 + $0x20] sm:$0xf]
        %v516 = vld [vmem:[#allocation4 + $0x24] sm:$0xf]
        %v517 = vld [vmem:[#allocation4 + $0x28] sm:$0xf]
        %v518 = vld [vmem:[#allocation4 + $0x2c] sm:$0xf]
        %v519 = vld [vmem:[#allocation4 + $0x30] sm:$0xf]
        %v520 = vld [vmem:[#allocation4 + $0x34] sm:$0xf]
        %v521 = vld [vmem:[#allocation4 + $0x38] sm:$0xf]
        %v522 = vld [vmem:[#allocation4 + $0x3c] sm:$0xf]
        %v523 = vld [vmem:[#allocation4 + $0x40] sm:$0xf]
        %v524 = vld [vmem:[#allocation4 + $0x44] sm:$0xf]
        %v525 = vld [vmem:[#allocation4 + $0x48] sm:$0xf]
        %v526 = vld [vmem:[#allocation4 + $0x4c] sm:$0xf]
        %v527 = vld [vmem:[#allocation4 + $0x50] sm:$0xf]
        %v528 = vld [vmem:[#allocation4 + $0x54] sm:$0xf]
        %v529 = vld [vmem:[#allocation4 + $0x58] sm:$0xf]
        %v530 = vld [vmem:[#allocation4 + $0x5c] sm:$0xf]
        %v531 = vld [vmem:[#allocation4 + $0x60] sm:$0xf]
        %v532 = vld [vmem:[#allocation4 + $0x64] sm:$0xf]
        %v533 = vld [vmem:[#allocation4 + $0x68] sm:$0xf]
        %v534 = vld [vmem:[#allocation4 + $0x6c] sm:$0xf]
        %v535 = vld [vmem:[#allocation4 + $0x70] sm:$0xf]
        %v536 = vld [vmem:[#allocation4 + $0x74] sm:$0xf]
        %v537 = vld [vmem:[#allocation4 + $0x78] sm:$0xf]
        %v538 = vld [vmem:[#allocation4 + $0x7c] sm:$0xf]
        %v539 = vld [vmem:[#allocation4 + $0x80] sm:$0xf]
        %v540 = vld [vmem:[#allocation4 + $0x84] sm:$0xf]
        %v541 = vld [vmem:[#allocation4 + $0x88] sm:$0xf]
        %v542 = vld [vmem:[#allocation4 + $0x8c] sm:$0xf]
        %v543 = vld [vmem:[#allocation4 + $0x90] sm:$0xf]
        %v544 = vld [vmem:[#allocation4 + $0x94] sm:$0xf]
        %v545 = vld [vmem:[#allocation4 + $0x98] sm:$0xf]
        %v546 = vld [vmem:[#allocation4 + $0x9c] sm:$0xf]
        %v547 = vld [vmem:[#allocation4 + $0xa0] sm:$0xf]
        %v548 = vld [vmem:[#allocation4 + $0xa4] sm:$0xf]
        %v549 = vld [vmem:[#allocation4 + $0xa8] sm:$0xf]
        %v550 = vld [vmem:[#allocation4 + $0xac] sm:$0xf]
        %v551 = vld [vmem:[#allocation4 + $0xb0] sm:$0xf]
        %v552 = vld [vmem:[#allocation4 + $0xb4] sm:$0xf]
        %v553 = vld [vmem:[#allocation4 + $0xb8] sm:$0xf]
        %v554 = vld [vmem:[#allocation4 + $0xbc] sm:$0xf]
        %v555 = vld [vmem:[#allocation6] sm:$0x1]
        %v556 = vld [vmem:[#allocation12] sm:$0x1]
        %v557 = vpack.c.bf16 %v505, %v505
        %v558 = vpack.c.bf16 %v506, %v506
        %s559 = scalar_lea.vmem [#allocation2], 24
        %v560 = vld [vmem:[%s559] sm:$0xf]
        %v561 = vld [vmem:[%s559 + $0x4] sm:$0xf]
        %v564 = vunpack.c.l.b16 %v560
        %v565 = vunpack.c.l.b16 %v561
        %v566 = vpack.c.b16 %v565, %v564
        %v569 = vunpack.c.l.b16 %v557
        %v570 = vunpack.c.l.b16 %v558
        %v571 = vpack.c.b16 %v570, %v569
        %vm573 = vcmask 130048
        %v575 = vsel %vm573, %v566, 0
        %577 = vmatpush.bf16.msra.mxu0 0
        %578 = vmatpush.bf16.msra.mxu0 0
        %579 = vmatpush.bf16.msra.mxu0 0
        %580 = vmatpush.bf16.msra.mxu0 0
        %581 = vmatpush.bf16.msra.mxu0 0
        %582 = vmatpush.bf16.msra.mxu0 0
        %583 = vmatpush.bf16.msra.mxu0 0
        %584 = vmatpush.bf16.msra.mxu0 %v571
        %585 = vmatmul.bf16.gmra.mxu0 %v575
        %v586 = vpop.f32.mrf.mxu0
        %v587 = vadd.f32 0.0, %v586
        %v588 = vpop.f32.mrf.mxu0
        %v589 = vadd.f32 0.0, %v588
        %590 = vdwg.mxu0
        %v591 = vpack.c.bf16 %v587, %v587
        %v592 = vpack.c.bf16 %v589, %v589
        %s593 = scalar_lea.vmem [#allocation2], 32
        %v594 = vld [vmem:[%s593] sm:$0xf]
        %v595 = vld [vmem:[%s593 + $0x4] sm:$0xf]
        %v598 = vunpack.c.l.b16 %v594
        %v599 = vunpack.c.l.b16 %v595
        %v600 = vpack.c.b16 %v599, %v598
        %v602 = vsel %vm573, %v600, 0
        %604 = vmatpush.bf16.msra.mxu0 0
        %605 = vmatpush.bf16.msra.mxu0 0
        %606 = vmatpush.bf16.msra.mxu0 0
        %607 = vmatpush.bf16.msra.mxu0 0
        %608 = vmatpush.bf16.msra.mxu0 0
        %609 = vmatpush.bf16.msra.mxu0 0
        %610 = vmatpush.bf16.msra.mxu0 0
        %611 = vmatpush.bf16.msra.mxu0 %v571
        %612 = vmatmul.bf16.gmra.mxu0 %v602
        %v613 = vpop.f32.mrf.mxu0
        %v614 = vadd.f32 0.0, %v613
        %v615 = vpop.f32.mrf.mxu0
        %v616 = vadd.f32 0.0, %v615
        %617 = vdwg.mxu0
        %v618 = vpack.c.bf16 %v614, %v614
        %v619 = vpack.c.bf16 %v616, %v616
        %v622 = vunpack.c.l.b16 %v591
        %v623 = vunpack.c.l.b16 %v592
        %v624 = vpack.c.b16 %v623, %v622
        %v628 = vunpack.c.l.b16 %v618
        %v629 = vunpack.c.l.b16 %v619
        %v630 = vpack.c.b16 %v629, %v628
        %v633 = vperm.slane %v555, 0
        %v683 = vunpack.c.l.b16 %v507
        %v684 = vunpack.c.l.b16 %v508
        %v685 = vunpack.c.l.b16 %v509
        %v686 = vunpack.c.l.b16 %v510
        %v687 = vunpack.c.l.b16 %v511
        %v688 = vunpack.c.l.b16 %v512
        %v689 = vunpack.c.l.b16 %v513
        %v690 = vunpack.c.l.b16 %v514
        %v691 = vunpack.c.l.b16 %v515
        %v692 = vunpack.c.l.b16 %v516
        %v693 = vunpack.c.l.b16 %v517
        %v694 = vunpack.c.l.b16 %v518
        %v695 = vunpack.c.l.b16 %v519
        %v696 = vunpack.c.l.b16 %v520
        %v697 = vunpack.c.l.b16 %v521
        %v698 = vunpack.c.l.b16 %v522
        %v699 = vunpack.c.l.b16 %v523
        %v700 = vunpack.c.l.b16 %v524
        %v701 = vunpack.c.l.b16 %v525
        %v702 = vunpack.c.l.b16 %v526
        %v703 = vunpack.c.l.b16 %v527
        %v704 = vunpack.c.l.b16 %v528
        %v705 = vunpack.c.l.b16 %v529
        %v706 = vunpack.c.l.b16 %v530
        %v707 = vunpack.c.l.b16 %v531
        %v708 = vunpack.c.l.b16 %v532
        %v709 = vunpack.c.l.b16 %v533
        %v710 = vunpack.c.l.b16 %v534
        %v711 = vunpack.c.l.b16 %v535
        %v712 = vunpack.c.l.b16 %v536
        %v713 = vunpack.c.l.b16 %v537
        %v714 = vunpack.c.l.b16 %v538
        %v715 = vunpack.c.l.b16 %v539
        %v716 = vunpack.c.l.b16 %v540
        %v717 = vunpack.c.l.b16 %v541
        %v718 = vunpack.c.l.b16 %v542
        %v719 = vunpack.c.l.b16 %v543
        %v720 = vunpack.c.l.b16 %v544
        %v721 = vunpack.c.l.b16 %v545
        %v722 = vunpack.c.l.b16 %v546
        %v723 = vunpack.c.l.b16 %v547
        %v724 = vunpack.c.l.b16 %v548
        %v725 = vunpack.c.l.b16 %v549
        %v726 = vunpack.c.l.b16 %v550
        %v727 = vunpack.c.l.b16 %v551
        %v728 = vunpack.c.l.b16 %v552
        %v729 = vunpack.c.l.b16 %v553
        %v730 = vunpack.c.l.b16 %v554
        %v731 = vpack.c.b16 %v684, %v683
        %v732 = vpack.c.b16 %v686, %v685
        %v733 = vpack.c.b16 %v688, %v687
        %v734 = vpack.c.b16 %v690, %v689
        %v735 = vpack.c.b16 %v692, %v691
        %v736 = vpack.c.b16 %v694, %v693
        %v737 = vpack.c.b16 %v696, %v695
        %v738 = vpack.c.b16 %v698, %v697
        %v739 = vpack.c.b16 %v700, %v699
        %v740 = vpack.c.b16 %v702, %v701
        %v741 = vpack.c.b16 %v704, %v703
        %v742 = vpack.c.b16 %v706, %v705
        %v743 = vpack.c.b16 %v708, %v707
        %v744 = vpack.c.b16 %v710, %v709
        %v745 = vpack.c.b16 %v712, %v711
        %v746 = vpack.c.b16 %v714, %v713
        %v747 = vpack.c.b16 %v716, %v715
        %v748 = vpack.c.b16 %v718, %v717
        %v749 = vpack.c.b16 %v720, %v719
        %v750 = vpack.c.b16 %v722, %v721
        %v751 = vpack.c.b16 %v724, %v723
        %v752 = vpack.c.b16 %v726, %v725
        %v753 = vpack.c.b16 %v728, %v727
        %v754 = vpack.c.b16 %v730, %v729
        %779 = vmatpush.bf16.msra.mxu0 %v738
        %780 = vmatpush.bf16.msra.mxu0 %v737
        %781 = vmatpush.bf16.msra.mxu0 %v736
        %782 = vmatpush.bf16.msra.mxu0 %v735
        %783 = vmatpush.bf16.msra.mxu0 %v734
        %784 = vmatpush.bf16.msra.mxu0 %v733
        %785 = vmatpush.bf16.msra.mxu0 %v732
        %786 = vmatpush.bf16.msra.mxu0 %v731
        %787 = vmatmul.bf16.gmra.mxu0 %v624
        %v788 = vpop.f32.mrf.mxu0
        %v789 = vadd.f32 %v633, %v788
        %v790 = vpop.f32.mrf.mxu0
        %v791 = vadd.f32 %v633, %v790
        %792 = vdwg.mxu0
        %793 = vmatpush.bf16.msra.mxu0 %v746
        %794 = vmatpush.bf16.msra.mxu0 %v745
        %795 = vmatpush.bf16.msra.mxu0 %v744
        %796 = vmatpush.bf16.msra.mxu0 %v743
        %797 = vmatpush.bf16.msra.mxu0 %v742
        %798 = vmatpush.bf16.msra.mxu0 %v741
        %799 = vmatpush.bf16.msra.mxu0 %v740
        %800 = vmatpush.bf16.msra.mxu0 %v739
        %801 = vmatmul.bf16.gmra.mxu0 %v571
        %v802 = vpop.f32.mrf.mxu0
        %v803 = vadd.f32 %v789, %v802
        %v804 = vpop.f32.mrf.mxu0
        %v805 = vadd.f32 %v791, %v804
        %806 = vdwg.mxu0
        %807 = vmatpush.bf16.msra.mxu0 %v754
        %808 = vmatpush.bf16.msra.mxu0 %v753
        %809 = vmatpush.bf16.msra.mxu0 %v752
        %810 = vmatpush.bf16.msra.mxu0 %v751
        %811 = vmatpush.bf16.msra.mxu0 %v750
        %812 = vmatpush.bf16.msra.mxu0 %v749
        %813 = vmatpush.bf16.msra.mxu0 %v748
        %814 = vmatpush.bf16.msra.mxu0 %v747
        %815 = vmatmul.bf16.gmra.mxu0 %v630
        %v816 = vpop.f32.mrf.mxu0
        %v817 = vadd.f32 %v803, %v816
        %v818 = vpop.f32.mrf.mxu0
        %v819 = vadd.f32 %v805, %v818
        %820 = vdwg.mxu0
        %vm821 = vcmp.ge.f32.partialorder %v817, 0.0
        %vm822 = vcmp.ge.f32.partialorder %v819, 0.0
        %v824 = vperm.slane %v556, 0
        %v826 = vmul.f32 %v824, %v817
        %v827 = vmul.f32 %v824, %v819
        %v828 = vsel %vm821, %v817, %v826
        %v829 = vsel %vm822, %v819, %v827
        %v830 = vld [vmem:[%s6] sm:$0xf]
        %v831 = vld [vmem:[%s6 + $0x4] sm:$0xf]
        %v832 = vld [vmem:[%s6 + $0x8] sm:$0xf]
        %v833 = vld [vmem:[%s6 + $0xc] sm:$0xf]
        %v834 = vld [vmem:[%s6 + $0x10] sm:$0xf]
        %v835 = vld [vmem:[%s6 + $0x14] sm:$0xf]
        %v836 = vld [vmem:[%s6 + $0x18] sm:$0xf]
        %v837 = vld [vmem:[%s6 + $0x1c] sm:$0xf]
        %v838 = vld [vmem:[%s6 + $0x20] sm:$0xf]
        %v839 = vld [vmem:[%s6 + $0x24] sm:$0xf]
        %v840 = vld [vmem:[%s6 + $0x28] sm:$0xf]
        %v841 = vld [vmem:[%s6 + $0x2c] sm:$0xf]
        %v842 = vld [vmem:[%s6 + $0x30] sm:$0xf]
        %v843 = vld [vmem:[%s6 + $0x34] sm:$0xf]
        %v844 = vld [vmem:[%s6 + $0x38] sm:$0xf]
        %v845 = vld [vmem:[%s6 + $0x3c] sm:$0xf]
        %v846 = vld [vmem:[#allocation10] sm:$0x1]
        %v848 = vperm.slane %v846, 0
        %v866 = vunpack.c.l.b16 %v830
        %v867 = vunpack.c.l.b16 %v831
        %v868 = vunpack.c.l.b16 %v832
        %v869 = vunpack.c.l.b16 %v833
        %v870 = vunpack.c.l.b16 %v834
        %v871 = vunpack.c.l.b16 %v835
        %v872 = vunpack.c.l.b16 %v836
        %v873 = vunpack.c.l.b16 %v837
        %v874 = vunpack.c.l.b16 %v838
        %v875 = vunpack.c.l.b16 %v839
        %v876 = vunpack.c.l.b16 %v840
        %v877 = vunpack.c.l.b16 %v841
        %v878 = vunpack.c.l.b16 %v842
        %v879 = vunpack.c.l.b16 %v843
        %v880 = vunpack.c.l.b16 %v844
        %v881 = vunpack.c.l.b16 %v845
        %v882 = vpack.c.b16 %v867, %v866
        %v883 = vpack.c.b16 %v869, %v868
        %v884 = vpack.c.b16 %v871, %v870
        %v885 = vpack.c.b16 %v873, %v872
        %v886 = vpack.c.b16 %v875, %v874
        %v887 = vpack.c.b16 %v877, %v876
        %v888 = vpack.c.b16 %v879, %v878
        %v889 = vpack.c.b16 %v881, %v880
        %898 = vmatpush.bf16.msra.mxu0 %v889
        %899 = vmatpush.bf16.msra.mxu0 %v888
        %900 = vmatpush.bf16.msra.mxu0 %v887
        %901 = vmatpush.bf16.msra.mxu0 %v886
        %902 = vmatpush.bf16.msra.mxu0 %v885
        %903 = vmatpush.bf16.msra.mxu0 %v884
        %904 = vmatpush.bf16.msra.mxu0 %v883
        %905 = vmatpush.bf16.msra.mxu0 %v882
        %906 = vmatmul.bf16.gmra.mxu0 %v571
        %v907 = vpop.f32.mrf.mxu0
        %v908 = vadd.f32 %v848, %v907
        %v909 = vpop.f32.mrf.mxu0
        %v910 = vadd.f32 %v848, %v909
        %911 = vdwg.mxu0
        %v912 = vld [vmem:[#allocation7] sm:$0xf]
        %v913 = vld [vmem:[#allocation7 + $0x4] sm:$0xf]
        %v914 = vld [vmem:[#allocation7 + $0x8] sm:$0xf]
        %v915 = vld [vmem:[#allocation7 + $0xc] sm:$0xf]
        %v916 = vld [vmem:[#allocation7 + $0x10] sm:$0xf]
        %v917 = vld [vmem:[#allocation7 + $0x14] sm:$0xf]
        %v918 = vld [vmem:[#allocation7 + $0x18] sm:$0xf]
        %v919 = vld [vmem:[#allocation7 + $0x1c] sm:$0xf]
        %v920 = vld [vmem:[#allocation7 + $0x20] sm:$0xf]
        %v921 = vld [vmem:[#allocation7 + $0x24] sm:$0xf]
        %v922 = vld [vmem:[#allocation7 + $0x28] sm:$0xf]
        %v923 = vld [vmem:[#allocation7 + $0x2c] sm:$0xf]
        %v924 = vld [vmem:[#allocation7 + $0x30] sm:$0xf]
        %v925 = vld [vmem:[#allocation7 + $0x34] sm:$0xf]
        %v926 = vld [vmem:[#allocation7 + $0x38] sm:$0xf]
        %v927 = vld [vmem:[#allocation7 + $0x3c] sm:$0xf]
        %v928 = vld [vmem:[#allocation7 + $0x40] sm:$0xf]
        %v929 = vld [vmem:[#allocation7 + $0x44] sm:$0xf]
        %v930 = vld [vmem:[#allocation7 + $0x48] sm:$0xf]
        %v931 = vld [vmem:[#allocation7 + $0x4c] sm:$0xf]
        %v932 = vld [vmem:[#allocation7 + $0x50] sm:$0xf]
        %v933 = vld [vmem:[#allocation7 + $0x54] sm:$0xf]
        %v934 = vld [vmem:[#allocation7 + $0x58] sm:$0xf]
        %v935 = vld [vmem:[#allocation7 + $0x5c] sm:$0xf]
        %v936 = vld [vmem:[#allocation7 + $0x60] sm:$0xf]
        %v937 = vld [vmem:[#allocation7 + $0x64] sm:$0xf]
        %v938 = vld [vmem:[#allocation7 + $0x68] sm:$0xf]
        %v939 = vld [vmem:[#allocation7 + $0x6c] sm:$0xf]
        %v940 = vld [vmem:[#allocation7 + $0x70] sm:$0xf]
        %v941 = vld [vmem:[#allocation7 + $0x74] sm:$0xf]
        %v942 = vld [vmem:[#allocation7 + $0x78] sm:$0xf]
        %v943 = vld [vmem:[#allocation7 + $0x7c] sm:$0xf]
        %v944 = vld [vmem:[#allocation7 + $0x80] sm:$0xf]
        %v945 = vld [vmem:[#allocation7 + $0x84] sm:$0xf]
        %v946 = vld [vmem:[#allocation7 + $0x88] sm:$0xf]
        %v947 = vld [vmem:[#allocation7 + $0x8c] sm:$0xf]
        %v948 = vld [vmem:[#allocation7 + $0x90] sm:$0xf]
        %v949 = vld [vmem:[#allocation7 + $0x94] sm:$0xf]
        %v950 = vld [vmem:[#allocation7 + $0x98] sm:$0xf]
        %v951 = vld [vmem:[#allocation7 + $0x9c] sm:$0xf]
        %v952 = vld [vmem:[#allocation7 + $0xa0] sm:$0xf]
        %v953 = vld [vmem:[#allocation7 + $0xa4] sm:$0xf]
        %v954 = vld [vmem:[#allocation7 + $0xa8] sm:$0xf]
        %v955 = vld [vmem:[#allocation7 + $0xac] sm:$0xf]
        %v956 = vld [vmem:[#allocation7 + $0xb0] sm:$0xf]
        %v957 = vld [vmem:[#allocation7 + $0xb4] sm:$0xf]
        %v958 = vld [vmem:[#allocation7 + $0xb8] sm:$0xf]
        %v959 = vld [vmem:[#allocation7 + $0xbc] sm:$0xf]
        %v960 = vld [vmem:[#allocation9] sm:$0x1]
        %s961 = scalar_lea.vmem [#allocation12], 1
        %v962 = vld [vmem:[%s961] sm:$0x1]
        %v963 = vpack.c.bf16 %v828, %v828
        %v964 = vpack.c.bf16 %v829, %v829
        %v967 = vunpack.c.l.b16 %v963
        %v968 = vunpack.c.l.b16 %v964
        %v969 = vpack.c.b16 %v968, %v967
        %971 = vmatpush.bf16.msra.mxu0 0
        %972 = vmatpush.bf16.msra.mxu0 0
        %973 = vmatpush.bf16.msra.mxu0 0
        %974 = vmatpush.bf16.msra.mxu0 0
        %975 = vmatpush.bf16.msra.mxu0 0
        %976 = vmatpush.bf16.msra.mxu0 0
        %977 = vmatpush.bf16.msra.mxu0 0
        %978 = vmatpush.bf16.msra.mxu0 %v969
        %979 = vmatmul.bf16.gmra.mxu0 %v575
        %v980 = vpop.f32.mrf.mxu0
        %v981 = vadd.f32 0.0, %v980
        %v982 = vpop.f32.mrf.mxu0
        %v983 = vadd.f32 0.0, %v982
        %984 = vdwg.mxu0
        %v985 = vpack.c.bf16 %v981, %v981
        %v986 = vpack.c.bf16 %v983, %v983
        %987 = vmatpush.bf16.msra.mxu0 0
        %988 = vmatpush.bf16.msra.mxu0 0
        %989 = vmatpush.bf16.msra.mxu0 0
        %990 = vmatpush.bf16.msra.mxu0 0
        %991 = vmatpush.bf16.msra.mxu0 0
        %992 = vmatpush.bf16.msra.mxu0 0
        %993 = vmatpush.bf16.msra.mxu0 0
        %994 = vmatpush.bf16.msra.mxu0 %v969
        %995 = vmatmul.bf16.gmra.mxu0 %v602
        %v996 = vpop.f32.mrf.mxu0
        %v997 = vadd.f32 0.0, %v996
        %v998 = vpop.f32.mrf.mxu0
        %v999 = vadd.f32 0.0, %v998
        %1000 = vdwg.mxu0
        %v1001 = vpack.c.bf16 %v997, %v997
        %v1002 = vpack.c.bf16 %v999, %v999
        %v1005 = vunpack.c.l.b16 %v985
        %v1006 = vunpack.c.l.b16 %v986
        %v1007 = vpack.c.b16 %v1006, %v1005
        %v1011 = vunpack.c.l.b16 %v1001
        %v1012 = vunpack.c.l.b16 %v1002
        %v1013 = vpack.c.b16 %v1012, %v1011
        %v1016 = vperm.slane %v960, 0
        %v1066 = vunpack.c.l.b16 %v912
        %v1067 = vunpack.c.l.b16 %v913
        %v1068 = vunpack.c.l.b16 %v914
        %v1069 = vunpack.c.l.b16 %v915
        %v1070 = vunpack.c.l.b16 %v916
        %v1071 = vunpack.c.l.b16 %v917
        %v1072 = vunpack.c.l.b16 %v918
        %v1073 = vunpack.c.l.b16 %v919
        %v1074 = vunpack.c.l.b16 %v920
        %v1075 = vunpack.c.l.b16 %v921
        %v1076 = vunpack.c.l.b16 %v922
        %v1077 = vunpack.c.l.b16 %v923
        %v1078 = vunpack.c.l.b16 %v924
        %v1079 = vunpack.c.l.b16 %v925
        %v1080 = vunpack.c.l.b16 %v926
        %v1081 = vunpack.c.l.b16 %v927
        %v1082 = vunpack.c.l.b16 %v928
        %v1083 = vunpack.c.l.b16 %v929
        %v1084 = vunpack.c.l.b16 %v930
        %v1085 = vunpack.c.l.b16 %v931
        %v1086 = vunpack.c.l.b16 %v932
        %v1087 = vunpack.c.l.b16 %v933
        %v1088 = vunpack.c.l.b16 %v934
        %v1089 = vunpack.c.l.b16 %v935
        %v1090 = vunpack.c.l.b16 %v936
        %v1091 = vunpack.c.l.b16 %v937
        %v1092 = vunpack.c.l.b16 %v938
        %v1093 = vunpack.c.l.b16 %v939
        %v1094 = vunpack.c.l.b16 %v940
        %v1095 = vunpack.c.l.b16 %v941
        %v1096 = vunpack.c.l.b16 %v942
        %v1097 = vunpack.c.l.b16 %v943
        %v1098 = vunpack.c.l.b16 %v944
        %v1099 = vunpack.c.l.b16 %v945
        %v1100 = vunpack.c.l.b16 %v946
        %v1101 = vunpack.c.l.b16 %v947
        %v1102 = vunpack.c.l.b16 %v948
        %v1103 = vunpack.c.l.b16 %v949
        %v1104 = vunpack.c.l.b16 %v950
        %v1105 = vunpack.c.l.b16 %v951
        %v1106 = vunpack.c.l.b16 %v952
        %v1107 = vunpack.c.l.b16 %v953
        %v1108 = vunpack.c.l.b16 %v954
        %v1109 = vunpack.c.l.b16 %v955
        %v1110 = vunpack.c.l.b16 %v956
        %v1111 = vunpack.c.l.b16 %v957
        %v1112 = vunpack.c.l.b16 %v958
        %v1113 = vunpack.c.l.b16 %v959
        %v1114 = vpack.c.b16 %v1067, %v1066
        %v1115 = vpack.c.b16 %v1069, %v1068
        %v1116 = vpack.c.b16 %v1071, %v1070
        %v1117 = vpack.c.b16 %v1073, %v1072
        %v1118 = vpack.c.b16 %v1075, %v1074
        %v1119 = vpack.c.b16 %v1077, %v1076
        %v1120 = vpack.c.b16 %v1079, %v1078
        %v1121 = vpack.c.b16 %v1081, %v1080
        %v1122 = vpack.c.b16 %v1083, %v1082
        %v1123 = vpack.c.b16 %v1085, %v1084
        %v1124 = vpack.c.b16 %v1087, %v1086
        %v1125 = vpack.c.b16 %v1089, %v1088
        %v1126 = vpack.c.b16 %v1091, %v1090
        %v1127 = vpack.c.b16 %v1093, %v1092
        %v1128 = vpack.c.b16 %v1095, %v1094
        %v1129 = vpack.c.b16 %v1097, %v1096
        %v1130 = vpack.c.b16 %v1099, %v1098
        %v1131 = vpack.c.b16 %v1101, %v1100
        %v1132 = vpack.c.b16 %v1103, %v1102
        %v1133 = vpack.c.b16 %v1105, %v1104
        %v1134 = vpack.c.b16 %v1107, %v1106
        %v1135 = vpack.c.b16 %v1109, %v1108
        %v1136 = vpack.c.b16 %v1111, %v1110
        %v1137 = vpack.c.b16 %v1113, %v1112
        %1162 = vmatpush.bf16.msra.mxu0 %v1121
        %1163 = vmatpush.bf16.msra.mxu0 %v1120
        %1164 = vmatpush.bf16.msra.mxu0 %v1119
        %1165 = vmatpush.bf16.msra.mxu0 %v1118
        %1166 = vmatpush.bf16.msra.mxu0 %v1117
        %1167 = vmatpush.bf16.msra.mxu0 %v1116
        %1168 = vmatpush.bf16.msra.mxu0 %v1115
        %1169 = vmatpush.bf16.msra.mxu0 %v1114
        %1170 = vmatmul.bf16.gmra.mxu0 %v1007
        %v1171 = vpop.f32.mrf.mxu0
        %v1172 = vadd.f32 %v1016, %v1171
        %v1173 = vpop.f32.mrf.mxu0
        %v1174 = vadd.f32 %v1016, %v1173
        %1175 = vdwg.mxu0
        %1176 = vmatpush.bf16.msra.mxu0 %v1129
        %1177 = vmatpush.bf16.msra.mxu0 %v1128
        %1178 = vmatpush.bf16.msra.mxu0 %v1127
        %1179 = vmatpush.bf16.msra.mxu0 %v1126
        %1180 = vmatpush.bf16.msra.mxu0 %v1125
        %1181 = vmatpush.bf16.msra.mxu0 %v1124
        %1182 = vmatpush.bf16.msra.mxu0 %v1123
        %1183 = vmatpush.bf16.msra.mxu0 %v1122
        %1184 = vmatmul.bf16.gmra.mxu0 %v969
        %v1185 = vpop.f32.mrf.mxu0
        %v1186 = vadd.f32 %v1172, %v1185
        %v1187 = vpop.f32.mrf.mxu0
        %v1188 = vadd.f32 %v1174, %v1187
        %1189 = vdwg.mxu0
        %1190 = vmatpush.bf16.msra.mxu0 %v1137
        %1191 = vmatpush.bf16.msra.mxu0 %v1136
        %1192 = vmatpush.bf16.msra.mxu0 %v1135
        %1193 = vmatpush.bf16.msra.mxu0 %v1134
        %1194 = vmatpush.bf16.msra.mxu0 %v1133
        %1195 = vmatpush.bf16.msra.mxu0 %v1132
        %1196 = vmatpush.bf16.msra.mxu0 %v1131
        %1197 = vmatpush.bf16.msra.mxu0 %v1130
        %1198 = vmatmul.bf16.gmra.mxu0 %v1013
        %v1199 = vpop.f32.mrf.mxu0
        %v1200 = vadd.f32 %v1186, %v1199
        %v1201 = vpop.f32.mrf.mxu0
        %v1202 = vadd.f32 %v1188, %v1201
        %1203 = vdwg.mxu0
        %vm1204 = vcmp.ge.f32.partialorder %v1200, 0.0
        %vm1205 = vcmp.ge.f32.partialorder %v1202, 0.0
        %v1207 = vperm.slane %v962, 0
        %v1209 = vmul.f32 %v1207, %v1200
        %v1210 = vmul.f32 %v1207, %v1202
        %v1211 = vsel %vm1204, %v1200, %v1209
        %v1212 = vsel %vm1205, %v1202, %v1210
        %v1213 = vadd.f32 %v1211, %v908
        %v1214 = vadd.f32 %v1212, %v910
        %s1215 = scalar_lea.vmem [#allocation4], 192
        %v1216 = vld [vmem:[%s1215] sm:$0xf]
        %v1217 = vld [vmem:[%s1215 + $0x4] sm:$0xf]
        %v1218 = vld [vmem:[%s1215 + $0x8] sm:$0xf]
        %v1219 = vld [vmem:[%s1215 + $0xc] sm:$0xf]
        %v1220 = vld [vmem:[%s1215 + $0x10] sm:$0xf]
        %v1221 = vld [vmem:[%s1215 + $0x14] sm:$0xf]
        %v1222 = vld [vmem:[%s1215 + $0x18] sm:$0xf]
        %v1223 = vld [vmem:[%s1215 + $0x1c] sm:$0xf]
        %v1224 = vld [vmem:[%s1215 + $0x20] sm:$0xf]
        %v1225 = vld [vmem:[%s1215 + $0x24] sm:$0xf]
        %v1226 = vld [vmem:[%s1215 + $0x28] sm:$0xf]
        %v1227 = vld [vmem:[%s1215 + $0x2c] sm:$0xf]
        %v1228 = vld [vmem:[%s1215 + $0x30] sm:$0xf]
        %v1229 = vld [vmem:[%s1215 + $0x34] sm:$0xf]
        %v1230 = vld [vmem:[%s1215 + $0x38] sm:$0xf]
        %v1231 = vld [vmem:[%s1215 + $0x3c] sm:$0xf]
        %v1232 = vld [vmem:[%s1215 + $0x40] sm:$0xf]
        %v1233 = vld [vmem:[%s1215 + $0x44] sm:$0xf]
        %v1234 = vld [vmem:[%s1215 + $0x48] sm:$0xf]
        %v1235 = vld [vmem:[%s1215 + $0x4c] sm:$0xf]
        %v1236 = vld [vmem:[%s1215 + $0x50] sm:$0xf]
        %v1237 = vld [vmem:[%s1215 + $0x54] sm:$0xf]
        %v1238 = vld [vmem:[%s1215 + $0x58] sm:$0xf]
        %v1239 = vld [vmem:[%s1215 + $0x5c] sm:$0xf]
        %v1240 = vld [vmem:[%s1215 + $0x60] sm:$0xf]
        %v1241 = vld [vmem:[%s1215 + $0x64] sm:$0xf]
        %v1242 = vld [vmem:[%s1215 + $0x68] sm:$0xf]
        %v1243 = vld [vmem:[%s1215 + $0x6c] sm:$0xf]
        %v1244 = vld [vmem:[%s1215 + $0x70] sm:$0xf]
        %v1245 = vld [vmem:[%s1215 + $0x74] sm:$0xf]
        %v1246 = vld [vmem:[%s1215 + $0x78] sm:$0xf]
        %v1247 = vld [vmem:[%s1215 + $0x7c] sm:$0xf]
        %v1248 = vld [vmem:[%s1215 + $0x80] sm:$0xf]
        %v1249 = vld [vmem:[%s1215 + $0x84] sm:$0xf]
        %v1250 = vld [vmem:[%s1215 + $0x88] sm:$0xf]
        %v1251 = vld [vmem:[%s1215 + $0x8c] sm:$0xf]
        %v1252 = vld [vmem:[%s1215 + $0x90] sm:$0xf]
        %v1253 = vld [vmem:[%s1215 + $0x94] sm:$0xf]
        %v1254 = vld [vmem:[%s1215 + $0x98] sm:$0xf]
        %v1255 = vld [vmem:[%s1215 + $0x9c] sm:$0xf]
        %v1256 = vld [vmem:[%s1215 + $0xa0] sm:$0xf]
        %v1257 = vld [vmem:[%s1215 + $0xa4] sm:$0xf]
        %v1258 = vld [vmem:[%s1215 + $0xa8] sm:$0xf]
        %v1259 = vld [vmem:[%s1215 + $0xac] sm:$0xf]
        %v1260 = vld [vmem:[%s1215 + $0xb0] sm:$0xf]
        %v1261 = vld [vmem:[%s1215 + $0xb4] sm:$0xf]
        %v1262 = vld [vmem:[%s1215 + $0xb8] sm:$0xf]
        %v1263 = vld [vmem:[%s1215 + $0xbc] sm:$0xf]
        %s1264 = scalar_lea.vmem [#allocation6], 1
        %v1265 = vld [vmem:[%s1264] sm:$0x1]
        %s1266 = scalar_lea.vmem [#allocation12], 2
        %v1267 = vld [vmem:[%s1266] sm:$0x1]
        %v1268 = vpack.c.bf16 %v1213, %v1213
        %v1269 = vpack.c.bf16 %v1214, %v1214
        %s1270 = scalar_lea.vmem [#allocation2], 16
        %v1271 = vld [vmem:[%s1270] sm:$0xf]
        %v1272 = vld [vmem:[%s1270 + $0x4] sm:$0xf]
        %v1275 = vunpack.c.l.b16 %v1271
        %v1276 = vunpack.c.l.b16 %v1272
        %v1277 = vpack.c.b16 %v1276, %v1275
        %v1280 = vunpack.c.l.b16 %v1268
        %v1281 = vunpack.c.l.b16 %v1269
        %v1282 = vpack.c.b16 %v1281, %v1280
        %v1285 = vsel %vm573, %v1277, 0
        %1287 = vmatpush.bf16.msra.mxu0 0
        %1288 = vmatpush.bf16.msra.mxu0 0
        %1289 = vmatpush.bf16.msra.mxu0 0
        %1290 = vmatpush.bf16.msra.mxu0 0
        %1291 = vmatpush.bf16.msra.mxu0 0
        %1292 = vmatpush.bf16.msra.mxu0 0
        %1293 = vmatpush.bf16.msra.mxu0 0
        %1294 = vmatpush.bf16.msra.mxu0 %v1282
        %1295 = vmatmul.bf16.gmra.mxu0 %v1285
        %v1296 = vpop.f32.mrf.mxu0
        %v1297 = vadd.f32 0.0, %v1296
        %v1298 = vpop.f32.mrf.mxu0
        %v1299 = vadd.f32 0.0, %v1298
        %1300 = vdwg.mxu0
        %v1301 = vpack.c.bf16 %v1297, %v1297
        %v1302 = vpack.c.bf16 %v1299, %v1299
        %s1303 = scalar_lea.vmem [#allocation2], 40
        %v1304 = vld [vmem:[%s1303] sm:$0xf]
        %v1305 = vld [vmem:[%s1303 + $0x4] sm:$0xf]
        %v1308 = vunpack.c.l.b16 %v1304
        %v1309 = vunpack.c.l.b16 %v1305
        %v1310 = vpack.c.b16 %v1309, %v1308
        %v1312 = vsel %vm573, %v1310, 0
        %1314 = vmatpush.bf16.msra.mxu0 0
        %1315 = vmatpush.bf16.msra.mxu0 0
        %1316 = vmatpush.bf16.msra.mxu0 0
        %1317 = vmatpush.bf16.msra.mxu0 0
        %1318 = vmatpush.bf16.msra.mxu0 0
        %1319 = vmatpush.bf16.msra.mxu0 0
        %1320 = vmatpush.bf16.msra.mxu0 0
        %1321 = vmatpush.bf16.msra.mxu0 %v1282
        %1322 = vmatmul.bf16.gmra.mxu0 %v1312
        %v1323 = vpop.f32.mrf.mxu0
        %v1324 = vadd.f32 0.0, %v1323
        %v1325 = vpop.f32.mrf.mxu0
        %v1326 = vadd.f32 0.0, %v1325
        %1327 = vdwg.mxu0
        %v1328 = vpack.c.bf16 %v1324, %v1324
        %v1329 = vpack.c.bf16 %v1326, %v1326
        %v1332 = vunpack.c.l.b16 %v1301
        %v1333 = vunpack.c.l.b16 %v1302
        %v1334 = vpack.c.b16 %v1333, %v1332
        %v1338 = vunpack.c.l.b16 %v1328
        %v1339 = vunpack.c.l.b16 %v1329
        %v1340 = vpack.c.b16 %v1339, %v1338
        %v1343 = vperm.slane %v1265, 0
        %v1393 = vunpack.c.l.b16 %v1216
        %v1394 = vunpack.c.l.b16 %v1217
        %v1395 = vunpack.c.l.b16 %v1218
        %v1396 = vunpack.c.l.b16 %v1219
        %v1397 = vunpack.c.l.b16 %v1220
        %v1398 = vunpack.c.l.b16 %v1221
        %v1399 = vunpack.c.l.b16 %v1222
        %v1400 = vunpack.c.l.b16 %v1223
        %v1401 = vunpack.c.l.b16 %v1224
        %v1402 = vunpack.c.l.b16 %v1225
        %v1403 = vunpack.c.l.b16 %v1226
        %v1404 = vunpack.c.l.b16 %v1227
        %v1405 = vunpack.c.l.b16 %v1228
        %v1406 = vunpack.c.l.b16 %v1229
        %v1407 = vunpack.c.l.b16 %v1230
        %v1408 = vunpack.c.l.b16 %v1231
        %v1409 = vunpack.c.l.b16 %v1232
        %v1410 = vunpack.c.l.b16 %v1233
        %v1411 = vunpack.c.l.b16 %v1234
        %v1412 = vunpack.c.l.b16 %v1235
        %v1413 = vunpack.c.l.b16 %v1236
        %v1414 = vunpack.c.l.b16 %v1237
        %v1415 = vunpack.c.l.b16 %v1238
        %v1416 = vunpack.c.l.b16 %v1239
        %v1417 = vunpack.c.l.b16 %v1240
        %v1418 = vunpack.c.l.b16 %v1241
        %v1419 = vunpack.c.l.b16 %v1242
        %v1420 = vunpack.c.l.b16 %v1243
        %v1421 = vunpack.c.l.b16 %v1244
        %v1422 = vunpack.c.l.b16 %v1245
        %v1423 = vunpack.c.l.b16 %v1246
        %v1424 = vunpack.c.l.b16 %v1247
        %v1425 = vunpack.c.l.b16 %v1248
        %v1426 = vunpack.c.l.b16 %v1249
        %v1427 = vunpack.c.l.b16 %v1250
        %v1428 = vunpack.c.l.b16 %v1251
        %v1429 = vunpack.c.l.b16 %v1252
        %v1430 = vunpack.c.l.b16 %v1253
        %v1431 = vunpack.c.l.b16 %v1254
        %v1432 = vunpack.c.l.b16 %v1255
        %v1433 = vunpack.c.l.b16 %v1256
        %v1434 = vunpack.c.l.b16 %v1257
        %v1435 = vunpack.c.l.b16 %v1258
        %v1436 = vunpack.c.l.b16 %v1259
        %v1437 = vunpack.c.l.b16 %v1260
        %v1438 = vunpack.c.l.b16 %v1261
        %v1439 = vunpack.c.l.b16 %v1262
        %v1440 = vunpack.c.l.b16 %v1263
        %v1441 = vpack.c.b16 %v1394, %v1393
        %v1442 = vpack.c.b16 %v1396, %v1395
        %v1443 = vpack.c.b16 %v1398, %v1397
        %v1444 = vpack.c.b16 %v1400, %v1399
        %v1445 = vpack.c.b16 %v1402, %v1401
        %v1446 = vpack.c.b16 %v1404, %v1403
        %v1447 = vpack.c.b16 %v1406, %v1405
        %v1448 = vpack.c.b16 %v1408, %v1407
        %v1449 = vpack.c.b16 %v1410, %v1409
        %v1450 = vpack.c.b16 %v1412, %v1411
        %v1451 = vpack.c.b16 %v1414, %v1413
        %v1452 = vpack.c.b16 %v1416, %v1415
        %v1453 = vpack.c.b16 %v1418, %v1417
        %v1454 = vpack.c.b16 %v1420, %v1419
        %v1455 = vpack.c.b16 %v1422, %v1421
        %v1456 = vpack.c.b16 %v1424, %v1423
        %v1457 = vpack.c.b16 %v1426, %v1425
        %v1458 = vpack.c.b16 %v1428, %v1427
        %v1459 = vpack.c.b16 %v1430, %v1429
        %v1460 = vpack.c.b16 %v1432, %v1431
        %v1461 = vpack.c.b16 %v1434, %v1433
        %v1462 = vpack.c.b16 %v1436, %v1435
        %v1463 = vpack.c.b16 %v1438, %v1437
        %v1464 = vpack.c.b16 %v1440, %v1439
        %1489 = vmatpush.bf16.msra.mxu0 %v1448
        %1490 = vmatpush.bf16.msra.mxu0 %v1447
        %1491 = vmatpush.bf16.msra.mxu0 %v1446
        %1492 = vmatpush.bf16.msra.mxu0 %v1445
        %1493 = vmatpush.bf16.msra.mxu0 %v1444
        %1494 = vmatpush.bf16.msra.mxu0 %v1443
        %1495 = vmatpush.bf16.msra.mxu0 %v1442
        %1496 = vmatpush.bf16.msra.mxu0 %v1441
        %1497 = vmatmul.bf16.gmra.mxu0 %v1334
        %v1498 = vpop.f32.mrf.mxu0
        %v1499 = vadd.f32 %v1343, %v1498
        %v1500 = vpop.f32.mrf.mxu0
        %v1501 = vadd.f32 %v1343, %v1500
        %1502 = vdwg.mxu0
        %1503 = vmatpush.bf16.msra.mxu0 %v1456
        %1504 = vmatpush.bf16.msra.mxu0 %v1455
        %1505 = vmatpush.bf16.msra.mxu0 %v1454
        %1506 = vmatpush.bf16.msra.mxu0 %v1453
        %1507 = vmatpush.bf16.msra.mxu0 %v1452
        %1508 = vmatpush.bf16.msra.mxu0 %v1451
        %1509 = vmatpush.bf16.msra.mxu0 %v1450
        %1510 = vmatpush.bf16.msra.mxu0 %v1449
        %1511 = vmatmul.bf16.gmra.mxu0 %v1282
        %v1512 = vpop.f32.mrf.mxu0
        %v1513 = vadd.f32 %v1499, %v1512
        %v1514 = vpop.f32.mrf.mxu0
        %v1515 = vadd.f32 %v1501, %v1514
        %1516 = vdwg.mxu0
        %1517 = vmatpush.bf16.msra.mxu0 %v1464
        %1518 = vmatpush.bf16.msra.mxu0 %v1463
        %1519 = vmatpush.bf16.msra.mxu0 %v1462
        %1520 = vmatpush.bf16.msra.mxu0 %v1461
        %1521 = vmatpush.bf16.msra.mxu0 %v1460
        %1522 = vmatpush.bf16.msra.mxu0 %v1459
        %1523 = vmatpush.bf16.msra.mxu0 %v1458
        %1524 = vmatpush.bf16.msra.mxu0 %v1457
        %1525 = vmatmul.bf16.gmra.mxu0 %v1340
        %v1526 = vpop.f32.mrf.mxu0
        %v1527 = vadd.f32 %v1513, %v1526
        %v1528 = vpop.f32.mrf.mxu0
        %v1529 = vadd.f32 %v1515, %v1528
        %1530 = vdwg.mxu0
        %vm1531 = vcmp.ge.f32.partialorder %v1527, 0.0
        %vm1532 = vcmp.ge.f32.partialorder %v1529, 0.0
        %v1534 = vperm.slane %v1267, 0
        %v1536 = vmul.f32 %v1534, %v1527
        %v1537 = vmul.f32 %v1534, %v1529
        %v1538 = vsel %vm1531, %v1527, %v1536
        %v1539 = vsel %vm1532, %v1529, %v1537
        %s1540 = scalar_lea.vmem [#allocation7], 192
        %v1541 = vld [vmem:[%s1540] sm:$0xf]
        %v1542 = vld [vmem:[%s1540 + $0x4] sm:$0xf]
        %v1543 = vld [vmem:[%s1540 + $0x8] sm:$0xf]
        %v1544 = vld [vmem:[%s1540 + $0xc] sm:$0xf]
        %v1545 = vld [vmem:[%s1540 + $0x10] sm:$0xf]
        %v1546 = vld [vmem:[%s1540 + $0x14] sm:$0xf]
        %v1547 = vld [vmem:[%s1540 + $0x18] sm:$0xf]
        %v1548 = vld [vmem:[%s1540 + $0x1c] sm:$0xf]
        %v1549 = vld [vmem:[%s1540 + $0x20] sm:$0xf]
        %v1550 = vld [vmem:[%s1540 + $0x24] sm:$0xf]
        %v1551 = vld [vmem:[%s1540 + $0x28] sm:$0xf]
        %v1552 = vld [vmem:[%s1540 + $0x2c] sm:$0xf]
        %v1553 = vld [vmem:[%s1540 + $0x30] sm:$0xf]
        %v1554 = vld [vmem:[%s1540 + $0x34] sm:$0xf]
        %v1555 = vld [vmem:[%s1540 + $0x38] sm:$0xf]
        %v1556 = vld [vmem:[%s1540 + $0x3c] sm:$0xf]
        %v1557 = vld [vmem:[%s1540 + $0x40] sm:$0xf]
        %v1558 = vld [vmem:[%s1540 + $0x44] sm:$0xf]
        %v1559 = vld [vmem:[%s1540 + $0x48] sm:$0xf]
        %v1560 = vld [vmem:[%s1540 + $0x4c] sm:$0xf]
        %v1561 = vld [vmem:[%s1540 + $0x50] sm:$0xf]
        %v1562 = vld [vmem:[%s1540 + $0x54] sm:$0xf]
        %v1563 = vld [vmem:[%s1540 + $0x58] sm:$0xf]
        %v1564 = vld [vmem:[%s1540 + $0x5c] sm:$0xf]
        %v1565 = vld [vmem:[%s1540 + $0x60] sm:$0xf]
        %v1566 = vld [vmem:[%s1540 + $0x64] sm:$0xf]
        %v1567 = vld [vmem:[%s1540 + $0x68] sm:$0xf]
        %v1568 = vld [vmem:[%s1540 + $0x6c] sm:$0xf]
        %v1569 = vld [vmem:[%s1540 + $0x70] sm:$0xf]
        %v1570 = vld [vmem:[%s1540 + $0x74] sm:$0xf]
        %v1571 = vld [vmem:[%s1540 + $0x78] sm:$0xf]
        %v1572 = vld [vmem:[%s1540 + $0x7c] sm:$0xf]
        %v1573 = vld [vmem:[%s1540 + $0x80] sm:$0xf]
        %v1574 = vld [vmem:[%s1540 + $0x84] sm:$0xf]
        %v1575 = vld [vmem:[%s1540 + $0x88] sm:$0xf]
        %v1576 = vld [vmem:[%s1540 + $0x8c] sm:$0xf]
        %v1577 = vld [vmem:[%s1540 + $0x90] sm:$0xf]
        %v1578 = vld [vmem:[%s1540 + $0x94] sm:$0xf]
        %v1579 = vld [vmem:[%s1540 + $0x98] sm:$0xf]
        %v1580 = vld [vmem:[%s1540 + $0x9c] sm:$0xf]
        %v1581 = vld [vmem:[%s1540 + $0xa0] sm:$0xf]
        %v1582 = vld [vmem:[%s1540 + $0xa4] sm:$0xf]
        %v1583 = vld [vmem:[%s1540 + $0xa8] sm:$0xf]
        %v1584 = vld [vmem:[%s1540 + $0xac] sm:$0xf]
        %v1585 = vld [vmem:[%s1540 + $0xb0] sm:$0xf]
        %v1586 = vld [vmem:[%s1540 + $0xb4] sm:$0xf]
        %v1587 = vld [vmem:[%s1540 + $0xb8] sm:$0xf]
        %v1588 = vld [vmem:[%s1540 + $0xbc] sm:$0xf]
        %s1589 = scalar_lea.vmem [#allocation9], 1
        %v1590 = vld [vmem:[%s1589] sm:$0x1]
        %s1591 = scalar_lea.vmem [#allocation12], 3
        %v1592 = vld [vmem:[%s1591] sm:$0x1]
        %v1593 = vpack.c.bf16 %v1538, %v1538
        %v1594 = vpack.c.bf16 %v1539, %v1539
        %v1597 = vunpack.c.l.b16 %v1593
        %v1598 = vunpack.c.l.b16 %v1594
        %v1599 = vpack.c.b16 %v1598, %v1597
        %1601 = vmatpush.bf16.msra.mxu0 0
        %1602 = vmatpush.bf16.msra.mxu0 0
        %1603 = vmatpush.bf16.msra.mxu0 0
        %1604 = vmatpush.bf16.msra.mxu0 0
        %1605 = vmatpush.bf16.msra.mxu0 0
        %1606 = vmatpush.bf16.msra.mxu0 0
        %1607 = vmatpush.bf16.msra.mxu0 0
        %1608 = vmatpush.bf16.msra.mxu0 %v1599
        %1609 = vmatmul.bf16.gmra.mxu0 %v1285
        %v1610 = vpop.f32.mrf.mxu0
        %v1611 = vadd.f32 0.0, %v1610
        %v1612 = vpop.f32.mrf.mxu0
        %v1613 = vadd.f32 0.0, %v1612
        %1614 = vdwg.mxu0
        %v1615 = vpack.c.bf16 %v1611, %v1611
        %v1616 = vpack.c.bf16 %v1613, %v1613
        %1617 = vmatpush.bf16.msra.mxu0 0
        %1618 = vmatpush.bf16.msra.mxu0 0
        %1619 = vmatpush.bf16.msra.mxu0 0
        %1620 = vmatpush.bf16.msra.mxu0 0
        %1621 = vmatpush.bf16.msra.mxu0 0
        %1622 = vmatpush.bf16.msra.mxu0 0
        %1623 = vmatpush.bf16.msra.mxu0 0
        %1624 = vmatpush.bf16.msra.mxu0 %v1599
        %1625 = vmatmul.bf16.gmra.mxu0 %v1312
        %v1626 = vpop.f32.mrf.mxu0
        %v1627 = vadd.f32 0.0, %v1626
        %v1628 = vpop.f32.mrf.mxu0
        %v1629 = vadd.f32 0.0, %v1628
        %1630 = vdwg.mxu0
        %v1631 = vpack.c.bf16 %v1627, %v1627
        %v1632 = vpack.c.bf16 %v1629, %v1629
        %v1635 = vunpack.c.l.b16 %v1615
        %v1636 = vunpack.c.l.b16 %v1616
        %v1637 = vpack.c.b16 %v1636, %v1635
        %v1641 = vunpack.c.l.b16 %v1631
        %v1642 = vunpack.c.l.b16 %v1632
        %v1643 = vpack.c.b16 %v1642, %v1641
        %v1646 = vperm.slane %v1590, 0
        %v1696 = vunpack.c.l.b16 %v1541
        %v1697 = vunpack.c.l.b16 %v1542
        %v1698 = vunpack.c.l.b16 %v1543
        %v1699 = vunpack.c.l.b16 %v1544
        %v1700 = vunpack.c.l.b16 %v1545
        %v1701 = vunpack.c.l.b16 %v1546
        %v1702 = vunpack.c.l.b16 %v1547
        %v1703 = vunpack.c.l.b16 %v1548
        %v1704 = vunpack.c.l.b16 %v1549
        %v1705 = vunpack.c.l.b16 %v1550
        %v1706 = vunpack.c.l.b16 %v1551
        %v1707 = vunpack.c.l.b16 %v1552
        %v1708 = vunpack.c.l.b16 %v1553
        %v1709 = vunpack.c.l.b16 %v1554
        %v1710 = vunpack.c.l.b16 %v1555
        %v1711 = vunpack.c.l.b16 %v1556
        %v1712 = vunpack.c.l.b16 %v1557
        %v1713 = vunpack.c.l.b16 %v1558
        %v1714 = vunpack.c.l.b16 %v1559
        %v1715 = vunpack.c.l.b16 %v1560
        %v1716 = vunpack.c.l.b16 %v1561
        %v1717 = vunpack.c.l.b16 %v1562
        %v1718 = vunpack.c.l.b16 %v1563
        %v1719 = vunpack.c.l.b16 %v1564
        %v1720 = vunpack.c.l.b16 %v1565
        %v1721 = vunpack.c.l.b16 %v1566
        %v1722 = vunpack.c.l.b16 %v1567
        %v1723 = vunpack.c.l.b16 %v1568
        %v1724 = vunpack.c.l.b16 %v1569
        %v1725 = vunpack.c.l.b16 %v1570
        %v1726 = vunpack.c.l.b16 %v1571
        %v1727 = vunpack.c.l.b16 %v1572
        %v1728 = vunpack.c.l.b16 %v1573
        %v1729 = vunpack.c.l.b16 %v1574
        %v1730 = vunpack.c.l.b16 %v1575
        %v1731 = vunpack.c.l.b16 %v1576
        %v1732 = vunpack.c.l.b16 %v1577
        %v1733 = vunpack.c.l.b16 %v1578
        %v1734 = vunpack.c.l.b16 %v1579
        %v1735 = vunpack.c.l.b16 %v1580
        %v1736 = vunpack.c.l.b16 %v1581
        %v1737 = vunpack.c.l.b16 %v1582
        %v1738 = vunpack.c.l.b16 %v1583
        %v1739 = vunpack.c.l.b16 %v1584
        %v1740 = vunpack.c.l.b16 %v1585
        %v1741 = vunpack.c.l.b16 %v1586
        %v1742 = vunpack.c.l.b16 %v1587
        %v1743 = vunpack.c.l.b16 %v1588
        %v1744 = vpack.c.b16 %v1697, %v1696
        %v1745 = vpack.c.b16 %v1699, %v1698
        %v1746 = vpack.c.b16 %v1701, %v1700
        %v1747 = vpack.c.b16 %v1703, %v1702
        %v1748 = vpack.c.b16 %v1705, %v1704
        %v1749 = vpack.c.b16 %v1707, %v1706
        %v1750 = vpack.c.b16 %v1709, %v1708
        %v1751 = vpack.c.b16 %v1711, %v1710
        %v1752 = vpack.c.b16 %v1713, %v1712
        %v1753 = vpack.c.b16 %v1715, %v1714
        %v1754 = vpack.c.b16 %v1717, %v1716
        %v1755 = vpack.c.b16 %v1719, %v1718
        %v1756 = vpack.c.b16 %v1721, %v1720
        %v1757 = vpack.c.b16 %v1723, %v1722
        %v1758 = vpack.c.b16 %v1725, %v1724
        %v1759 = vpack.c.b16 %v1727, %v1726
        %v1760 = vpack.c.b16 %v1729, %v1728
        %v1761 = vpack.c.b16 %v1731, %v1730
        %v1762 = vpack.c.b16 %v1733, %v1732
        %v1763 = vpack.c.b16 %v1735, %v1734
        %v1764 = vpack.c.b16 %v1737, %v1736
        %v1765 = vpack.c.b16 %v1739, %v1738
        %v1766 = vpack.c.b16 %v1741, %v1740
        %v1767 = vpack.c.b16 %v1743, %v1742
        %1792 = vmatpush.bf16.msra.mxu0 %v1751
        %1793 = vmatpush.bf16.msra.mxu0 %v1750
        %1794 = vmatpush.bf16.msra.mxu0 %v1749
        %1795 = vmatpush.bf16.msra.mxu0 %v1748
        %1796 = vmatpush.bf16.msra.mxu0 %v1747
        %1797 = vmatpush.bf16.msra.mxu0 %v1746
        %1798 = vmatpush.bf16.msra.mxu0 %v1745
        %1799 = vmatpush.bf16.msra.mxu0 %v1744
        %1800 = vmatmul.bf16.gmra.mxu0 %v1637
        %v1801 = vpop.f32.mrf.mxu0
        %v1802 = vadd.f32 %v1646, %v1801
        %v1803 = vpop.f32.mrf.mxu0
        %v1804 = vadd.f32 %v1646, %v1803
        %1805 = vdwg.mxu0
        %1806 = vmatpush.bf16.msra.mxu0 %v1759
        %1807 = vmatpush.bf16.msra.mxu0 %v1758
        %1808 = vmatpush.bf16.msra.mxu0 %v1757
        %1809 = vmatpush.bf16.msra.mxu0 %v1756
        %1810 = vmatpush.bf16.msra.mxu0 %v1755
        %1811 = vmatpush.bf16.msra.mxu0 %v1754
        %1812 = vmatpush.bf16.msra.mxu0 %v1753
        %1813 = vmatpush.bf16.msra.mxu0 %v1752
        %1814 = vmatmul.bf16.gmra.mxu0 %v1599
        %v1815 = vpop.f32.mrf.mxu0
        %v1816 = vadd.f32 %v1802, %v1815
        %v1817 = vpop.f32.mrf.mxu0
        %v1818 = vadd.f32 %v1804, %v1817
        %1819 = vdwg.mxu0
        %1820 = vmatpush.bf16.msra.mxu0 %v1767
        %1821 = vmatpush.bf16.msra.mxu0 %v1766
        %1822 = vmatpush.bf16.msra.mxu0 %v1765
        %1823 = vmatpush.bf16.msra.mxu0 %v1764
        %1824 = vmatpush.bf16.msra.mxu0 %v1763
        %1825 = vmatpush.bf16.msra.mxu0 %v1762
        %1826 = vmatpush.bf16.msra.mxu0 %v1761
        %1827 = vmatpush.bf16.msra.mxu0 %v1760
        %1828 = vmatmul.bf16.gmra.mxu0 %v1643
        %v1829 = vpop.f32.mrf.mxu0
        %v1830 = vadd.f32 %v1816, %v1829
        %v1831 = vpop.f32.mrf.mxu0
        %v1832 = vadd.f32 %v1818, %v1831
        %1833 = vdwg.mxu0
        %vm1834 = vcmp.ge.f32.partialorder %v1830, 0.0
        %vm1835 = vcmp.ge.f32.partialorder %v1832, 0.0
        %v1837 = vperm.slane %v1592, 0
        %v1839 = vmul.f32 %v1837, %v1830
        %v1840 = vmul.f32 %v1837, %v1832
        %v1841 = vsel %vm1834, %v1830, %v1839
        %v1842 = vsel %vm1835, %v1832, %v1840
        %v1843 = vadd.f32 %v1841, %v1213
        %v1844 = vadd.f32 %v1842, %v1214
        %s1845 = scalar_lea.vmem [#allocation4], 384
        %v1846 = vld [vmem:[%s1845] sm:$0xf]
        %v1847 = vld [vmem:[%s1845 + $0x4] sm:$0xf]
        %v1848 = vld [vmem:[%s1845 + $0x8] sm:$0xf]
        %v1849 = vld [vmem:[%s1845 + $0xc] sm:$0xf]
        %v1850 = vld [vmem:[%s1845 + $0x10] sm:$0xf]
        %v1851 = vld [vmem:[%s1845 + $0x14] sm:$0xf]
        %v1852 = vld [vmem:[%s1845 + $0x18] sm:$0xf]
        %v1853 = vld [vmem:[%s1845 + $0x1c] sm:$0xf]
        %v1854 = vld [vmem:[%s1845 + $0x20] sm:$0xf]
        %v1855 = vld [vmem:[%s1845 + $0x24] sm:$0xf]
        %v1856 = vld [vmem:[%s1845 + $0x28] sm:$0xf]
        %v1857 = vld [vmem:[%s1845 + $0x2c] sm:$0xf]
        %v1858 = vld [vmem:[%s1845 + $0x30] sm:$0xf]
        %v1859 = vld [vmem:[%s1845 + $0x34] sm:$0xf]
        %v1860 = vld [vmem:[%s1845 + $0x38] sm:$0xf]
        %v1861 = vld [vmem:[%s1845 + $0x3c] sm:$0xf]
        %v1862 = vld [vmem:[%s1845 + $0x40] sm:$0xf]
        %v1863 = vld [vmem:[%s1845 + $0x44] sm:$0xf]
        %v1864 = vld [vmem:[%s1845 + $0x48] sm:$0xf]
        %v1865 = vld [vmem:[%s1845 + $0x4c] sm:$0xf]
        %v1866 = vld [vmem:[%s1845 + $0x50] sm:$0xf]
        %v1867 = vld [vmem:[%s1845 + $0x54] sm:$0xf]
        %v1868 = vld [vmem:[%s1845 + $0x58] sm:$0xf]
        %v1869 = vld [vmem:[%s1845 + $0x5c] sm:$0xf]
        %v1870 = vld [vmem:[%s1845 + $0x60] sm:$0xf]
        %v1871 = vld [vmem:[%s1845 + $0x64] sm:$0xf]
        %v1872 = vld [vmem:[%s1845 + $0x68] sm:$0xf]
        %v1873 = vld [vmem:[%s1845 + $0x6c] sm:$0xf]
        %v1874 = vld [vmem:[%s1845 + $0x70] sm:$0xf]
        %v1875 = vld [vmem:[%s1845 + $0x74] sm:$0xf]
        %v1876 = vld [vmem:[%s1845 + $0x78] sm:$0xf]
        %v1877 = vld [vmem:[%s1845 + $0x7c] sm:$0xf]
        %v1878 = vld [vmem:[%s1845 + $0x80] sm:$0xf]
        %v1879 = vld [vmem:[%s1845 + $0x84] sm:$0xf]
        %v1880 = vld [vmem:[%s1845 + $0x88] sm:$0xf]
        %v1881 = vld [vmem:[%s1845 + $0x8c] sm:$0xf]
        %v1882 = vld [vmem:[%s1845 + $0x90] sm:$0xf]
        %v1883 = vld [vmem:[%s1845 + $0x94] sm:$0xf]
        %v1884 = vld [vmem:[%s1845 + $0x98] sm:$0xf]
        %v1885 = vld [vmem:[%s1845 + $0x9c] sm:$0xf]
        %v1886 = vld [vmem:[%s1845 + $0xa0] sm:$0xf]
        %v1887 = vld [vmem:[%s1845 + $0xa4] sm:$0xf]
        %v1888 = vld [vmem:[%s1845 + $0xa8] sm:$0xf]
        %v1889 = vld [vmem:[%s1845 + $0xac] sm:$0xf]
        %v1890 = vld [vmem:[%s1845 + $0xb0] sm:$0xf]
        %v1891 = vld [vmem:[%s1845 + $0xb4] sm:$0xf]
        %v1892 = vld [vmem:[%s1845 + $0xb8] sm:$0xf]
        %v1893 = vld [vmem:[%s1845 + $0xbc] sm:$0xf]
        %s1894 = scalar_lea.vmem [#allocation6], 2
        %v1895 = vld [vmem:[%s1894] sm:$0x1]
        %s1896 = scalar_lea.vmem [#allocation12], 4
        %v1897 = vld [vmem:[%s1896] sm:$0x1]
        %v1898 = vpack.c.bf16 %v1843, %v1843
        %v1899 = vpack.c.bf16 %v1844, %v1844
        %s1900 = scalar_lea.vmem [#allocation2], 8
        %v1901 = vld [vmem:[%s1900] sm:$0xf]
        %v1902 = vld [vmem:[%s1900 + $0x4] sm:$0xf]
        %v1905 = vunpack.c.l.b16 %v1901
        %v1906 = vunpack.c.l.b16 %v1902
        %v1907 = vpack.c.b16 %v1906, %v1905
        %v1910 = vunpack.c.l.b16 %v1898
        %v1911 = vunpack.c.l.b16 %v1899
        %v1912 = vpack.c.b16 %v1911, %v1910
        %v1915 = vsel %vm573, %v1907, 0
        %1917 = vmatpush.bf16.msra.mxu0 0
        %1918 = vmatpush.bf16.msra.mxu0 0
        %1919 = vmatpush.bf16.msra.mxu0 0
        %1920 = vmatpush.bf16.msra.mxu0 0
        %1921 = vmatpush.bf16.msra.mxu0 0
        %1922 = vmatpush.bf16.msra.mxu0 0
        %1923 = vmatpush.bf16.msra.mxu0 0
        %1924 = vmatpush.bf16.msra.mxu0 %v1912
        %1925 = vmatmul.bf16.gmra.mxu0 %v1915
        %v1926 = vpop.f32.mrf.mxu0
        %v1927 = vadd.f32 0.0, %v1926
        %v1928 = vpop.f32.mrf.mxu0
        %v1929 = vadd.f32 0.0, %v1928
        %1930 = vdwg.mxu0
        %v1931 = vpack.c.bf16 %v1927, %v1927
        %v1932 = vpack.c.bf16 %v1929, %v1929
        %s1933 = scalar_lea.vmem [#allocation2], 48
        %v1934 = vld [vmem:[%s1933] sm:$0xf]
        %v1935 = vld [vmem:[%s1933 + $0x4] sm:$0xf]
        %v1938 = vunpack.c.l.b16 %v1934
        %v1939 = vunpack.c.l.b16 %v1935
        %v1940 = vpack.c.b16 %v1939, %v1938
        %v1942 = vsel %vm573, %v1940, 0
        %1944 = vmatpush.bf16.msra.mxu0 0
        %1945 = vmatpush.bf16.msra.mxu0 0
        %1946 = vmatpush.bf16.msra.mxu0 0
        %1947 = vmatpush.bf16.msra.mxu0 0
        %1948 = vmatpush.bf16.msra.mxu0 0
        %1949 = vmatpush.bf16.msra.mxu0 0
        %1950 = vmatpush.bf16.msra.mxu0 0
        %1951 = vmatpush.bf16.msra.mxu0 %v1912
        %1952 = vmatmul.bf16.gmra.mxu0 %v1942
        %v1953 = vpop.f32.mrf.mxu0
        %v1954 = vadd.f32 0.0, %v1953
        %v1955 = vpop.f32.mrf.mxu0
        %v1956 = vadd.f32 0.0, %v1955
        %1957 = vdwg.mxu0
        %v1958 = vpack.c.bf16 %v1954, %v1954
        %v1959 = vpack.c.bf16 %v1956, %v1956
        %v1962 = vunpack.c.l.b16 %v1931
        %v1963 = vunpack.c.l.b16 %v1932
        %v1964 = vpack.c.b16 %v1963, %v1962
        %v1968 = vunpack.c.l.b16 %v1958
        %v1969 = vunpack.c.l.b16 %v1959
        %v1970 = vpack.c.b16 %v1969, %v1968
        %v1973 = vperm.slane %v1895, 0
        %v2023 = vunpack.c.l.b16 %v1846
        %v2024 = vunpack.c.l.b16 %v1847
        %v2025 = vunpack.c.l.b16 %v1848
        %v2026 = vunpack.c.l.b16 %v1849
        %v2027 = vunpack.c.l.b16 %v1850
        %v2028 = vunpack.c.l.b16 %v1851
        %v2029 = vunpack.c.l.b16 %v1852
        %v2030 = vunpack.c.l.b16 %v1853
        %v2031 = vunpack.c.l.b16 %v1854
        %v2032 = vunpack.c.l.b16 %v1855
        %v2033 = vunpack.c.l.b16 %v1856
        %v2034 = vunpack.c.l.b16 %v1857
        %v2035 = vunpack.c.l.b16 %v1858
        %v2036 = vunpack.c.l.b16 %v1859
        %v2037 = vunpack.c.l.b16 %v1860
        %v2038 = vunpack.c.l.b16 %v1861
        %v2039 = vunpack.c.l.b16 %v1862
        %v2040 = vunpack.c.l.b16 %v1863
        %v2041 = vunpack.c.l.b16 %v1864
        %v2042 = vunpack.c.l.b16 %v1865
        %v2043 = vunpack.c.l.b16 %v1866
        %v2044 = vunpack.c.l.b16 %v1867
        %v2045 = vunpack.c.l.b16 %v1868
        %v2046 = vunpack.c.l.b16 %v1869
        %v2047 = vunpack.c.l.b16 %v1870
        %v2048 = vunpack.c.l.b16 %v1871
        %v2049 = vunpack.c.l.b16 %v1872
        %v2050 = vunpack.c.l.b16 %v1873
        %v2051 = vunpack.c.l.b16 %v1874
        %v2052 = vunpack.c.l.b16 %v1875
        %v2053 = vunpack.c.l.b16 %v1876
        %v2054 = vunpack.c.l.b16 %v1877
        %v2055 = vunpack.c.l.b16 %v1878
        %v2056 = vunpack.c.l.b16 %v1879
        %v2057 = vunpack.c.l.b16 %v1880
        %v2058 = vunpack.c.l.b16 %v1881
        %v2059 = vunpack.c.l.b16 %v1882
        %v2060 = vunpack.c.l.b16 %v1883
        %v2061 = vunpack.c.l.b16 %v1884
        %v2062 = vunpack.c.l.b16 %v1885
        %v2063 = vunpack.c.l.b16 %v1886
        %v2064 = vunpack.c.l.b16 %v1887
        %v2065 = vunpack.c.l.b16 %v1888
        %v2066 = vunpack.c.l.b16 %v1889
        %v2067 = vunpack.c.l.b16 %v1890
        %v2068 = vunpack.c.l.b16 %v1891
        %v2069 = vunpack.c.l.b16 %v1892
        %v2070 = vunpack.c.l.b16 %v1893
        %v2071 = vpack.c.b16 %v2024, %v2023
        %v2072 = vpack.c.b16 %v2026, %v2025
        %v2073 = vpack.c.b16 %v2028, %v2027
        %v2074 = vpack.c.b16 %v2030, %v2029
        %v2075 = vpack.c.b16 %v2032, %v2031
        %v2076 = vpack.c.b16 %v2034, %v2033
        %v2077 = vpack.c.b16 %v2036, %v2035
        %v2078 = vpack.c.b16 %v2038, %v2037
        %v2079 = vpack.c.b16 %v2040, %v2039
        %v2080 = vpack.c.b16 %v2042, %v2041
        %v2081 = vpack.c.b16 %v2044, %v2043
        %v2082 = vpack.c.b16 %v2046, %v2045
        %v2083 = vpack.c.b16 %v2048, %v2047
        %v2084 = vpack.c.b16 %v2050, %v2049
        %v2085 = vpack.c.b16 %v2052, %v2051
        %v2086 = vpack.c.b16 %v2054, %v2053
        %v2087 = vpack.c.b16 %v2056, %v2055
        %v2088 = vpack.c.b16 %v2058, %v2057
        %v2089 = vpack.c.b16 %v2060, %v2059
        %v2090 = vpack.c.b16 %v2062, %v2061
        %v2091 = vpack.c.b16 %v2064, %v2063
        %v2092 = vpack.c.b16 %v2066, %v2065
        %v2093 = vpack.c.b16 %v2068, %v2067
        %v2094 = vpack.c.b16 %v2070, %v2069
        %2119 = vmatpush.bf16.msra.mxu0 %v2078
        %2120 = vmatpush.bf16.msra.mxu0 %v2077
        %2121 = vmatpush.bf16.msra.mxu0 %v2076
        %2122 = vmatpush.bf16.msra.mxu0 %v2075
        %2123 = vmatpush.bf16.msra.mxu0 %v2074
        %2124 = vmatpush.bf16.msra.mxu0 %v2073
        %2125 = vmatpush.bf16.msra.mxu0 %v2072
        %2126 = vmatpush.bf16.msra.mxu0 %v2071
        %2127 = vmatmul.bf16.gmra.mxu0 %v1964
        %v2128 = vpop.f32.mrf.mxu0
        %v2129 = vadd.f32 %v1973, %v2128
        %v2130 = vpop.f32.mrf.mxu0
        %v2131 = vadd.f32 %v1973, %v2130
        %2132 = vdwg.mxu0
        %2133 = vmatpush.bf16.msra.mxu0 %v2086
        %2134 = vmatpush.bf16.msra.mxu0 %v2085
        %2135 = vmatpush.bf16.msra.mxu0 %v2084
        %2136 = vmatpush.bf16.msra.mxu0 %v2083
        %2137 = vmatpush.bf16.msra.mxu0 %v2082
        %2138 = vmatpush.bf16.msra.mxu0 %v2081
        %2139 = vmatpush.bf16.msra.mxu0 %v2080
        %2140 = vmatpush.bf16.msra.mxu0 %v2079
        %2141 = vmatmul.bf16.gmra.mxu0 %v1912
        %v2142 = vpop.f32.mrf.mxu0
        %v2143 = vadd.f32 %v2129, %v2142
        %v2144 = vpop.f32.mrf.mxu0
        %v2145 = vadd.f32 %v2131, %v2144
        %2146 = vdwg.mxu0
        %2147 = vmatpush.bf16.msra.mxu0 %v2094
        %2148 = vmatpush.bf16.msra.mxu0 %v2093
        %2149 = vmatpush.bf16.msra.mxu0 %v2092
        %2150 = vmatpush.bf16.msra.mxu0 %v2091
        %2151 = vmatpush.bf16.msra.mxu0 %v2090
        %2152 = vmatpush.bf16.msra.mxu0 %v2089
        %2153 = vmatpush.bf16.msra.mxu0 %v2088
        %2154 = vmatpush.bf16.msra.mxu0 %v2087
        %2155 = vmatmul.bf16.gmra.mxu0 %v1970
        %v2156 = vpop.f32.mrf.mxu0
        %v2157 = vadd.f32 %v2143, %v2156
        %v2158 = vpop.f32.mrf.mxu0
        %v2159 = vadd.f32 %v2145, %v2158
        %2160 = vdwg.mxu0
        %vm2161 = vcmp.ge.f32.partialorder %v2157, 0.0
        %vm2162 = vcmp.ge.f32.partialorder %v2159, 0.0
        %v2164 = vperm.slane %v1897, 0
        %v2166 = vmul.f32 %v2164, %v2157
        %v2167 = vmul.f32 %v2164, %v2159
        %v2168 = vsel %vm2161, %v2157, %v2166
        %v2169 = vsel %vm2162, %v2159, %v2167
        %s2170 = scalar_lea.vmem [#allocation7], 384
        %v2171 = vld [vmem:[%s2170] sm:$0xf]
        %v2172 = vld [vmem:[%s2170 + $0x4] sm:$0xf]
        %v2173 = vld [vmem:[%s2170 + $0x8] sm:$0xf]
        %v2174 = vld [vmem:[%s2170 + $0xc] sm:$0xf]
        %v2175 = vld [vmem:[%s2170 + $0x10] sm:$0xf]
        %v2176 = vld [vmem:[%s2170 + $0x14] sm:$0xf]
        %v2177 = vld [vmem:[%s2170 + $0x18] sm:$0xf]
        %v2178 = vld [vmem:[%s2170 + $0x1c] sm:$0xf]
        %v2179 = vld [vmem:[%s2170 + $0x20] sm:$0xf]
        %v2180 = vld [vmem:[%s2170 + $0x24] sm:$0xf]
        %v2181 = vld [vmem:[%s2170 + $0x28] sm:$0xf]
        %v2182 = vld [vmem:[%s2170 + $0x2c] sm:$0xf]
        %v2183 = vld [vmem:[%s2170 + $0x30] sm:$0xf]
        %v2184 = vld [vmem:[%s2170 + $0x34] sm:$0xf]
        %v2185 = vld [vmem:[%s2170 + $0x38] sm:$0xf]
        %v2186 = vld [vmem:[%s2170 + $0x3c] sm:$0xf]
        %v2187 = vld [vmem:[%s2170 + $0x40] sm:$0xf]
        %v2188 = vld [vmem:[%s2170 + $0x44] sm:$0xf]
        %v2189 = vld [vmem:[%s2170 + $0x48] sm:$0xf]
        %v2190 = vld [vmem:[%s2170 + $0x4c] sm:$0xf]
        %v2191 = vld [vmem:[%s2170 + $0x50] sm:$0xf]
        %v2192 = vld [vmem:[%s2170 + $0x54] sm:$0xf]
        %v2193 = vld [vmem:[%s2170 + $0x58] sm:$0xf]
        %v2194 = vld [vmem:[%s2170 + $0x5c] sm:$0xf]
        %v2195 = vld [vmem:[%s2170 + $0x60] sm:$0xf]
        %v2196 = vld [vmem:[%s2170 + $0x64] sm:$0xf]
        %v2197 = vld [vmem:[%s2170 + $0x68] sm:$0xf]
        %v2198 = vld [vmem:[%s2170 + $0x6c] sm:$0xf]
        %v2199 = vld [vmem:[%s2170 + $0x70] sm:$0xf]
        %v2200 = vld [vmem:[%s2170 + $0x74] sm:$0xf]
        %v2201 = vld [vmem:[%s2170 + $0x78] sm:$0xf]
        %v2202 = vld [vmem:[%s2170 + $0x7c] sm:$0xf]
        %v2203 = vld [vmem:[%s2170 + $0x80] sm:$0xf]
        %v2204 = vld [vmem:[%s2170 + $0x84] sm:$0xf]
        %v2205 = vld [vmem:[%s2170 + $0x88] sm:$0xf]
        %v2206 = vld [vmem:[%s2170 + $0x8c] sm:$0xf]
        %v2207 = vld [vmem:[%s2170 + $0x90] sm:$0xf]
        %v2208 = vld [vmem:[%s2170 + $0x94] sm:$0xf]
        %v2209 = vld [vmem:[%s2170 + $0x98] sm:$0xf]
        %v2210 = vld [vmem:[%s2170 + $0x9c] sm:$0xf]
        %v2211 = vld [vmem:[%s2170 + $0xa0] sm:$0xf]
        %v2212 = vld [vmem:[%s2170 + $0xa4] sm:$0xf]
        %v2213 = vld [vmem:[%s2170 + $0xa8] sm:$0xf]
        %v2214 = vld [vmem:[%s2170 + $0xac] sm:$0xf]
        %v2215 = vld [vmem:[%s2170 + $0xb0] sm:$0xf]
        %v2216 = vld [vmem:[%s2170 + $0xb4] sm:$0xf]
        %v2217 = vld [vmem:[%s2170 + $0xb8] sm:$0xf]
        %v2218 = vld [vmem:[%s2170 + $0xbc] sm:$0xf]
        %s2219 = scalar_lea.vmem [#allocation9], 2
        %v2220 = vld [vmem:[%s2219] sm:$0x1]
        %s2221 = scalar_lea.vmem [#allocation12], 5
        %v2222 = vld [vmem:[%s2221] sm:$0x1]
        %v2223 = vpack.c.bf16 %v2168, %v2168
        %v2224 = vpack.c.bf16 %v2169, %v2169
        %v2227 = vunpack.c.l.b16 %v2223
        %v2228 = vunpack.c.l.b16 %v2224
        %v2229 = vpack.c.b16 %v2228, %v2227
        %2231 = vmatpush.bf16.msra.mxu0 0
        %2232 = vmatpush.bf16.msra.mxu0 0
        %2233 = vmatpush.bf16.msra.mxu0 0
        %2234 = vmatpush.bf16.msra.mxu0 0
        %2235 = vmatpush.bf16.msra.mxu0 0
        %2236 = vmatpush.bf16.msra.mxu0 0
        %2237 = vmatpush.bf16.msra.mxu0 0
        %2238 = vmatpush.bf16.msra.mxu0 %v2229
        %2239 = vmatmul.bf16.gmra.mxu0 %v1915
        %v2240 = vpop.f32.mrf.mxu0
        %v2241 = vadd.f32 0.0, %v2240
        %v2242 = vpop.f32.mrf.mxu0
        %v2243 = vadd.f32 0.0, %v2242
        %2244 = vdwg.mxu0
        %v2245 = vpack.c.bf16 %v2241, %v2241
        %v2246 = vpack.c.bf16 %v2243, %v2243
        %2247 = vmatpush.bf16.msra.mxu0 0
        %2248 = vmatpush.bf16.msra.mxu0 0
        %2249 = vmatpush.bf16.msra.mxu0 0
        %2250 = vmatpush.bf16.msra.mxu0 0
        %2251 = vmatpush.bf16.msra.mxu0 0
        %2252 = vmatpush.bf16.msra.mxu0 0
        %2253 = vmatpush.bf16.msra.mxu0 0
        %2254 = vmatpush.bf16.msra.mxu0 %v2229
        %2255 = vmatmul.bf16.gmra.mxu0 %v1942
        %v2256 = vpop.f32.mrf.mxu0
        %v2257 = vadd.f32 0.0, %v2256
        %v2258 = vpop.f32.mrf.mxu0
        %v2259 = vadd.f32 0.0, %v2258
        %2260 = vdwg.mxu0
        %v2261 = vpack.c.bf16 %v2257, %v2257
        %v2262 = vpack.c.bf16 %v2259, %v2259
        %v2265 = vunpack.c.l.b16 %v2245
        %v2266 = vunpack.c.l.b16 %v2246
        %v2267 = vpack.c.b16 %v2266, %v2265
        %v2271 = vunpack.c.l.b16 %v2261
        %v2272 = vunpack.c.l.b16 %v2262
        %v2273 = vpack.c.b16 %v2272, %v2271
        %v2276 = vperm.slane %v2220, 0
        %v2326 = vunpack.c.l.b16 %v2171
        %v2327 = vunpack.c.l.b16 %v2172
        %v2328 = vunpack.c.l.b16 %v2173
        %v2329 = vunpack.c.l.b16 %v2174
        %v2330 = vunpack.c.l.b16 %v2175
        %v2331 = vunpack.c.l.b16 %v2176
        %v2332 = vunpack.c.l.b16 %v2177
        %v2333 = vunpack.c.l.b16 %v2178
        %v2334 = vunpack.c.l.b16 %v2179
        %v2335 = vunpack.c.l.b16 %v2180
        %v2336 = vunpack.c.l.b16 %v2181
        %v2337 = vunpack.c.l.b16 %v2182
        %v2338 = vunpack.c.l.b16 %v2183
        %v2339 = vunpack.c.l.b16 %v2184
        %v2340 = vunpack.c.l.b16 %v2185
        %v2341 = vunpack.c.l.b16 %v2186
        %v2342 = vunpack.c.l.b16 %v2187
        %v2343 = vunpack.c.l.b16 %v2188
        %v2344 = vunpack.c.l.b16 %v2189
        %v2345 = vunpack.c.l.b16 %v2190
        %v2346 = vunpack.c.l.b16 %v2191
        %v2347 = vunpack.c.l.b16 %v2192
        %v2348 = vunpack.c.l.b16 %v2193
        %v2349 = vunpack.c.l.b16 %v2194
        %v2350 = vunpack.c.l.b16 %v2195
        %v2351 = vunpack.c.l.b16 %v2196
        %v2352 = vunpack.c.l.b16 %v2197
        %v2353 = vunpack.c.l.b16 %v2198
        %v2354 = vunpack.c.l.b16 %v2199
        %v2355 = vunpack.c.l.b16 %v2200
        %v2356 = vunpack.c.l.b16 %v2201
        %v2357 = vunpack.c.l.b16 %v2202
        %v2358 = vunpack.c.l.b16 %v2203
        %v2359 = vunpack.c.l.b16 %v2204
        %v2360 = vunpack.c.l.b16 %v2205
        %v2361 = vunpack.c.l.b16 %v2206
        %v2362 = vunpack.c.l.b16 %v2207
        %v2363 = vunpack.c.l.b16 %v2208
        %v2364 = vunpack.c.l.b16 %v2209
        %v2365 = vunpack.c.l.b16 %v2210
        %v2366 = vunpack.c.l.b16 %v2211
        %v2367 = vunpack.c.l.b16 %v2212
        %v2368 = vunpack.c.l.b16 %v2213
        %v2369 = vunpack.c.l.b16 %v2214
        %v2370 = vunpack.c.l.b16 %v2215
        %v2371 = vunpack.c.l.b16 %v2216
        %v2372 = vunpack.c.l.b16 %v2217
        %v2373 = vunpack.c.l.b16 %v2218
        %v2374 = vpack.c.b16 %v2327, %v2326
        %v2375 = vpack.c.b16 %v2329, %v2328
        %v2376 = vpack.c.b16 %v2331, %v2330
        %v2377 = vpack.c.b16 %v2333, %v2332
        %v2378 = vpack.c.b16 %v2335, %v2334
        %v2379 = vpack.c.b16 %v2337, %v2336
        %v2380 = vpack.c.b16 %v2339, %v2338
        %v2381 = vpack.c.b16 %v2341, %v2340
        %v2382 = vpack.c.b16 %v2343, %v2342
        %v2383 = vpack.c.b16 %v2345, %v2344
        %v2384 = vpack.c.b16 %v2347, %v2346
        %v2385 = vpack.c.b16 %v2349, %v2348
        %v2386 = vpack.c.b16 %v2351, %v2350
        %v2387 = vpack.c.b16 %v2353, %v2352
        %v2388 = vpack.c.b16 %v2355, %v2354
        %v2389 = vpack.c.b16 %v2357, %v2356
        %v2390 = vpack.c.b16 %v2359, %v2358
        %v2391 = vpack.c.b16 %v2361, %v2360
        %v2392 = vpack.c.b16 %v2363, %v2362
        %v2393 = vpack.c.b16 %v2365, %v2364
        %v2394 = vpack.c.b16 %v2367, %v2366
        %v2395 = vpack.c.b16 %v2369, %v2368
        %v2396 = vpack.c.b16 %v2371, %v2370
        %v2397 = vpack.c.b16 %v2373, %v2372
        %2422 = vmatpush.bf16.msra.mxu0 %v2381
        %2423 = vmatpush.bf16.msra.mxu0 %v2380
        %2424 = vmatpush.bf16.msra.mxu0 %v2379
        %2425 = vmatpush.bf16.msra.mxu0 %v2378
        %2426 = vmatpush.bf16.msra.mxu0 %v2377
        %2427 = vmatpush.bf16.msra.mxu0 %v2376
        %2428 = vmatpush.bf16.msra.mxu0 %v2375
        %2429 = vmatpush.bf16.msra.mxu0 %v2374
        %2430 = vmatmul.bf16.gmra.mxu0 %v2267
        %v2431 = vpop.f32.mrf.mxu0
        %v2432 = vadd.f32 %v2276, %v2431
        %v2433 = vpop.f32.mrf.mxu0
        %v2434 = vadd.f32 %v2276, %v2433
        %2435 = vdwg.mxu0
        %2436 = vmatpush.bf16.msra.mxu0 %v2389
        %2437 = vmatpush.bf16.msra.mxu0 %v2388
        %2438 = vmatpush.bf16.msra.mxu0 %v2387
        %2439 = vmatpush.bf16.msra.mxu0 %v2386
        %2440 = vmatpush.bf16.msra.mxu0 %v2385
        %2441 = vmatpush.bf16.msra.mxu0 %v2384
        %2442 = vmatpush.bf16.msra.mxu0 %v2383
        %2443 = vmatpush.bf16.msra.mxu0 %v2382
        %2444 = vmatmul.bf16.gmra.mxu0 %v2229
        %v2445 = vpop.f32.mrf.mxu0
        %v2446 = vadd.f32 %v2432, %v2445
        %v2447 = vpop.f32.mrf.mxu0
        %v2448 = vadd.f32 %v2434, %v2447
        %2449 = vdwg.mxu0
        %2450 = vmatpush.bf16.msra.mxu0 %v2397
        %2451 = vmatpush.bf16.msra.mxu0 %v2396
        %2452 = vmatpush.bf16.msra.mxu0 %v2395
        %2453 = vmatpush.bf16.msra.mxu0 %v2394
        %2454 = vmatpush.bf16.msra.mxu0 %v2393
        %2455 = vmatpush.bf16.msra.mxu0 %v2392
        %2456 = vmatpush.bf16.msra.mxu0 %v2391
        %2457 = vmatpush.bf16.msra.mxu0 %v2390
        %2458 = vmatmul.bf16.gmra.mxu0 %v2273
        %v2459 = vpop.f32.mrf.mxu0
        %v2460 = vadd.f32 %v2446, %v2459
        %v2461 = vpop.f32.mrf.mxu0
        %v2462 = vadd.f32 %v2448, %v2461
        %2463 = vdwg.mxu0
        %vm2464 = vcmp.ge.f32.partialorder %v2460, 0.0
        %vm2465 = vcmp.ge.f32.partialorder %v2462, 0.0
        %v2467 = vperm.slane %v2222, 0
        %v2469 = vmul.f32 %v2467, %v2460
        %v2470 = vmul.f32 %v2467, %v2462
        %v2471 = vsel %vm2464, %v2460, %v2469
        %v2472 = vsel %vm2465, %v2462, %v2470
        %v2473 = vadd.f32 %v2471, %v1843
        %v2474 = vadd.f32 %v2472, %v1844
        %s2475 = scalar_lea.vmem [#allocation4], 576
        %v2476 = vld [vmem:[%s2475] sm:$0xf]
        %v2477 = vld [vmem:[%s2475 + $0x4] sm:$0xf]
        %v2478 = vld [vmem:[%s2475 + $0x8] sm:$0xf]
        %v2479 = vld [vmem:[%s2475 + $0xc] sm:$0xf]
        %v2480 = vld [vmem:[%s2475 + $0x10] sm:$0xf]
        %v2481 = vld [vmem:[%s2475 + $0x14] sm:$0xf]
        %v2482 = vld [vmem:[%s2475 + $0x18] sm:$0xf]
        %v2483 = vld [vmem:[%s2475 + $0x1c] sm:$0xf]
        %v2484 = vld [vmem:[%s2475 + $0x20] sm:$0xf]
        %v2485 = vld [vmem:[%s2475 + $0x24] sm:$0xf]
        %v2486 = vld [vmem:[%s2475 + $0x28] sm:$0xf]
        %v2487 = vld [vmem:[%s2475 + $0x2c] sm:$0xf]
        %v2488 = vld [vmem:[%s2475 + $0x30] sm:$0xf]
        %v2489 = vld [vmem:[%s2475 + $0x34] sm:$0xf]
        %v2490 = vld [vmem:[%s2475 + $0x38] sm:$0xf]
        %v2491 = vld [vmem:[%s2475 + $0x3c] sm:$0xf]
        %v2492 = vld [vmem:[%s2475 + $0x40] sm:$0xf]
        %v2493 = vld [vmem:[%s2475 + $0x44] sm:$0xf]
        %v2494 = vld [vmem:[%s2475 + $0x48] sm:$0xf]
        %v2495 = vld [vmem:[%s2475 + $0x4c] sm:$0xf]
        %v2496 = vld [vmem:[%s2475 + $0x50] sm:$0xf]
        %v2497 = vld [vmem:[%s2475 + $0x54] sm:$0xf]
        %v2498 = vld [vmem:[%s2475 + $0x58] sm:$0xf]
        %v2499 = vld [vmem:[%s2475 + $0x5c] sm:$0xf]
        %v2500 = vld [vmem:[%s2475 + $0x60] sm:$0xf]
        %v2501 = vld [vmem:[%s2475 + $0x64] sm:$0xf]
        %v2502 = vld [vmem:[%s2475 + $0x68] sm:$0xf]
        %v2503 = vld [vmem:[%s2475 + $0x6c] sm:$0xf]
        %v2504 = vld [vmem:[%s2475 + $0x70] sm:$0xf]
        %v2505 = vld [vmem:[%s2475 + $0x74] sm:$0xf]
        %v2506 = vld [vmem:[%s2475 + $0x78] sm:$0xf]
        %v2507 = vld [vmem:[%s2475 + $0x7c] sm:$0xf]
        %v2508 = vld [vmem:[%s2475 + $0x80] sm:$0xf]
        %v2509 = vld [vmem:[%s2475 + $0x84] sm:$0xf]
        %v2510 = vld [vmem:[%s2475 + $0x88] sm:$0xf]
        %v2511 = vld [vmem:[%s2475 + $0x8c] sm:$0xf]
        %v2512 = vld [vmem:[%s2475 + $0x90] sm:$0xf]
        %v2513 = vld [vmem:[%s2475 + $0x94] sm:$0xf]
        %v2514 = vld [vmem:[%s2475 + $0x98] sm:$0xf]
        %v2515 = vld [vmem:[%s2475 + $0x9c] sm:$0xf]
        %v2516 = vld [vmem:[%s2475 + $0xa0] sm:$0xf]
        %v2517 = vld [vmem:[%s2475 + $0xa4] sm:$0xf]
        %v2518 = vld [vmem:[%s2475 + $0xa8] sm:$0xf]
        %v2519 = vld [vmem:[%s2475 + $0xac] sm:$0xf]
        %v2520 = vld [vmem:[%s2475 + $0xb0] sm:$0xf]
        %v2521 = vld [vmem:[%s2475 + $0xb4] sm:$0xf]
        %v2522 = vld [vmem:[%s2475 + $0xb8] sm:$0xf]
        %v2523 = vld [vmem:[%s2475 + $0xbc] sm:$0xf]
        %s2524 = scalar_lea.vmem [#allocation6], 3
        %v2525 = vld [vmem:[%s2524] sm:$0x1]
        %s2526 = scalar_lea.vmem [#allocation12], 6
        %v2527 = vld [vmem:[%s2526] sm:$0x1]
        %v2528 = vpack.c.bf16 %v2473, %v2473
        %v2529 = vpack.c.bf16 %v2474, %v2474
        %v2530 = vld [vmem:[#allocation2] sm:$0xf]
        %v2531 = vld [vmem:[#allocation2 + $0x4] sm:$0xf]
        %v2534 = vunpack.c.l.b16 %v2530
        %v2535 = vunpack.c.l.b16 %v2531
        %v2536 = vpack.c.b16 %v2535, %v2534
        %v2539 = vunpack.c.l.b16 %v2528
        %v2540 = vunpack.c.l.b16 %v2529
        %v2541 = vpack.c.b16 %v2540, %v2539
        %v2544 = vsel %vm573, %v2536, 0
        %2546 = vmatpush.bf16.msra.mxu0 0
        %2547 = vmatpush.bf16.msra.mxu0 0
        %2548 = vmatpush.bf16.msra.mxu0 0
        %2549 = vmatpush.bf16.msra.mxu0 0
        %2550 = vmatpush.bf16.msra.mxu0 0
        %2551 = vmatpush.bf16.msra.mxu0 0
        %2552 = vmatpush.bf16.msra.mxu0 0
        %2553 = vmatpush.bf16.msra.mxu0 %v2541
        %2554 = vmatmul.bf16.gmra.mxu0 %v2544
        %v2555 = vpop.f32.mrf.mxu0
        %v2556 = vadd.f32 0.0, %v2555
        %v2557 = vpop.f32.mrf.mxu0
        %v2558 = vadd.f32 0.0, %v2557
        %2559 = vdwg.mxu0
        %v2560 = vpack.c.bf16 %v2556, %v2556
        %v2561 = vpack.c.bf16 %v2558, %v2558
        %s2562 = scalar_lea.vmem [#allocation2], 56
        %v2563 = vld [vmem:[%s2562] sm:$0xf]
        %v2564 = vld [vmem:[%s2562 + $0x4] sm:$0xf]
        %v2567 = vunpack.c.l.b16 %v2563
        %v2568 = vunpack.c.l.b16 %v2564
        %v2569 = vpack.c.b16 %v2568, %v2567
        %v2571 = vsel %vm573, %v2569, 0
        %2573 = vmatpush.bf16.msra.mxu0 0
        %2574 = vmatpush.bf16.msra.mxu0 0
        %2575 = vmatpush.bf16.msra.mxu0 0
        %2576 = vmatpush.bf16.msra.mxu0 0
        %2577 = vmatpush.bf16.msra.mxu0 0
        %2578 = vmatpush.bf16.msra.mxu0 0
        %2579 = vmatpush.bf16.msra.mxu0 0
        %2580 = vmatpush.bf16.msra.mxu0 %v2541
        %2581 = vmatmul.bf16.gmra.mxu0 %v2571
        %v2582 = vpop.f32.mrf.mxu0
        %v2583 = vadd.f32 0.0, %v2582
        %v2584 = vpop.f32.mrf.mxu0
        %v2585 = vadd.f32 0.0, %v2584
        %2586 = vdwg.mxu0
        %v2587 = vpack.c.bf16 %v2583, %v2583
        %v2588 = vpack.c.bf16 %v2585, %v2585
        %v2591 = vunpack.c.l.b16 %v2560
        %v2592 = vunpack.c.l.b16 %v2561
        %v2593 = vpack.c.b16 %v2592, %v2591
        %v2597 = vunpack.c.l.b16 %v2587
        %v2598 = vunpack.c.l.b16 %v2588
        %v2599 = vpack.c.b16 %v2598, %v2597
        %v2602 = vperm.slane %v2525, 0
        %v2652 = vunpack.c.l.b16 %v2476
        %v2653 = vunpack.c.l.b16 %v2477
        %v2654 = vunpack.c.l.b16 %v2478
        %v2655 = vunpack.c.l.b16 %v2479
        %v2656 = vunpack.c.l.b16 %v2480
        %v2657 = vunpack.c.l.b16 %v2481
        %v2658 = vunpack.c.l.b16 %v2482
        %v2659 = vunpack.c.l.b16 %v2483
        %v2660 = vunpack.c.l.b16 %v2484
        %v2661 = vunpack.c.l.b16 %v2485
        %v2662 = vunpack.c.l.b16 %v2486
        %v2663 = vunpack.c.l.b16 %v2487
        %v2664 = vunpack.c.l.b16 %v2488
        %v2665 = vunpack.c.l.b16 %v2489
        %v2666 = vunpack.c.l.b16 %v2490
        %v2667 = vunpack.c.l.b16 %v2491
        %v2668 = vunpack.c.l.b16 %v2492
        %v2669 = vunpack.c.l.b16 %v2493
        %v2670 = vunpack.c.l.b16 %v2494
        %v2671 = vunpack.c.l.b16 %v2495
        %v2672 = vunpack.c.l.b16 %v2496
        %v2673 = vunpack.c.l.b16 %v2497
        %v2674 = vunpack.c.l.b16 %v2498
        %v2675 = vunpack.c.l.b16 %v2499
        %v2676 = vunpack.c.l.b16 %v2500
        %v2677 = vunpack.c.l.b16 %v2501
        %v2678 = vunpack.c.l.b16 %v2502
        %v2679 = vunpack.c.l.b16 %v2503
        %v2680 = vunpack.c.l.b16 %v2504
        %v2681 = vunpack.c.l.b16 %v2505
        %v2682 = vunpack.c.l.b16 %v2506
        %v2683 = vunpack.c.l.b16 %v2507
        %v2684 = vunpack.c.l.b16 %v2508
        %v2685 = vunpack.c.l.b16 %v2509
        %v2686 = vunpack.c.l.b16 %v2510
        %v2687 = vunpack.c.l.b16 %v2511
        %v2688 = vunpack.c.l.b16 %v2512
        %v2689 = vunpack.c.l.b16 %v2513
        %v2690 = vunpack.c.l.b16 %v2514
        %v2691 = vunpack.c.l.b16 %v2515
        %v2692 = vunpack.c.l.b16 %v2516
        %v2693 = vunpack.c.l.b16 %v2517
        %v2694 = vunpack.c.l.b16 %v2518
        %v2695 = vunpack.c.l.b16 %v2519
        %v2696 = vunpack.c.l.b16 %v2520
        %v2697 = vunpack.c.l.b16 %v2521
        %v2698 = vunpack.c.l.b16 %v2522
        %v2699 = vunpack.c.l.b16 %v2523
        %v2700 = vpack.c.b16 %v2653, %v2652
        %v2701 = vpack.c.b16 %v2655, %v2654
        %v2702 = vpack.c.b16 %v2657, %v2656
        %v2703 = vpack.c.b16 %v2659, %v2658
        %v2704 = vpack.c.b16 %v2661, %v2660
        %v2705 = vpack.c.b16 %v2663, %v2662
        %v2706 = vpack.c.b16 %v2665, %v2664
        %v2707 = vpack.c.b16 %v2667, %v2666
        %v2708 = vpack.c.b16 %v2669, %v2668
        %v2709 = vpack.c.b16 %v2671, %v2670
        %v2710 = vpack.c.b16 %v2673, %v2672
        %v2711 = vpack.c.b16 %v2675, %v2674
        %v2712 = vpack.c.b16 %v2677, %v2676
        %v2713 = vpack.c.b16 %v2679, %v2678
        %v2714 = vpack.c.b16 %v2681, %v2680
        %v2715 = vpack.c.b16 %v2683, %v2682
        %v2716 = vpack.c.b16 %v2685, %v2684
        %v2717 = vpack.c.b16 %v2687, %v2686
        %v2718 = vpack.c.b16 %v2689, %v2688
        %v2719 = vpack.c.b16 %v2691, %v2690
        %v2720 = vpack.c.b16 %v2693, %v2692
        %v2721 = vpack.c.b16 %v2695, %v2694
        %v2722 = vpack.c.b16 %v2697, %v2696
        %v2723 = vpack.c.b16 %v2699, %v2698
        %2748 = vmatpush.bf16.msra.mxu0 %v2707
        %2749 = vmatpush.bf16.msra.mxu0 %v2706
        %2750 = vmatpush.bf16.msra.mxu0 %v2705
        %2751 = vmatpush.bf16.msra.mxu0 %v2704
        %2752 = vmatpush.bf16.msra.mxu0 %v2703
        %2753 = vmatpush.bf16.msra.mxu0 %v2702
        %2754 = vmatpush.bf16.msra.mxu0 %v2701
        %2755 = vmatpush.bf16.msra.mxu0 %v2700
        %2756 = vmatmul.bf16.gmra.mxu0 %v2593
        %v2757 = vpop.f32.mrf.mxu0
        %v2758 = vadd.f32 %v2602, %v2757
        %v2759 = vpop.f32.mrf.mxu0
        %v2760 = vadd.f32 %v2602, %v2759
        %2761 = vdwg.mxu0
        %2762 = vmatpush.bf16.msra.mxu0 %v2715
        %2763 = vmatpush.bf16.msra.mxu0 %v2714
        %2764 = vmatpush.bf16.msra.mxu0 %v2713
        %2765 = vmatpush.bf16.msra.mxu0 %v2712
        %2766 = vmatpush.bf16.msra.mxu0 %v2711
        %2767 = vmatpush.bf16.msra.mxu0 %v2710
        %2768 = vmatpush.bf16.msra.mxu0 %v2709
        %2769 = vmatpush.bf16.msra.mxu0 %v2708
        %2770 = vmatmul.bf16.gmra.mxu0 %v2541
        %v2771 = vpop.f32.mrf.mxu0
        %v2772 = vadd.f32 %v2758, %v2771
        %v2773 = vpop.f32.mrf.mxu0
        %v2774 = vadd.f32 %v2760, %v2773
        %2775 = vdwg.mxu0
        %2776 = vmatpush.bf16.msra.mxu0 %v2723
        %2777 = vmatpush.bf16.msra.mxu0 %v2722
        %2778 = vmatpush.bf16.msra.mxu0 %v2721
        %2779 = vmatpush.bf16.msra.mxu0 %v2720
        %2780 = vmatpush.bf16.msra.mxu0 %v2719
        %2781 = vmatpush.bf16.msra.mxu0 %v2718
        %2782 = vmatpush.bf16.msra.mxu0 %v2717
        %2783 = vmatpush.bf16.msra.mxu0 %v2716
        %2784 = vmatmul.bf16.gmra.mxu0 %v2599
        %v2785 = vpop.f32.mrf.mxu0
        %v2786 = vadd.f32 %v2772, %v2785
        %v2787 = vpop.f32.mrf.mxu0
        %v2788 = vadd.f32 %v2774, %v2787
        %2789 = vdwg.mxu0
        %vm2790 = vcmp.ge.f32.partialorder %v2786, 0.0
        %vm2791 = vcmp.ge.f32.partialorder %v2788, 0.0
        %v2793 = vperm.slane %v2527, 0
        %v2795 = vmul.f32 %v2793, %v2786
        %v2796 = vmul.f32 %v2793, %v2788
        %v2797 = vsel %vm2790, %v2786, %v2795
        %v2798 = vsel %vm2791, %v2788, %v2796
        %s2799 = scalar_lea.vmem [#allocation7], 576
        %v2800 = vld [vmem:[%s2799] sm:$0xf]
        %v2801 = vld [vmem:[%s2799 + $0x4] sm:$0xf]
        %v2802 = vld [vmem:[%s2799 + $0x8] sm:$0xf]
        %v2803 = vld [vmem:[%s2799 + $0xc] sm:$0xf]
        %v2804 = vld [vmem:[%s2799 + $0x10] sm:$0xf]
        %v2805 = vld [vmem:[%s2799 + $0x14] sm:$0xf]
        %v2806 = vld [vmem:[%s2799 + $0x18] sm:$0xf]
        %v2807 = vld [vmem:[%s2799 + $0x1c] sm:$0xf]
        %v2808 = vld [vmem:[%s2799 + $0x20] sm:$0xf]
        %v2809 = vld [vmem:[%s2799 + $0x24] sm:$0xf]
        %v2810 = vld [vmem:[%s2799 + $0x28] sm:$0xf]
        %v2811 = vld [vmem:[%s2799 + $0x2c] sm:$0xf]
        %v2812 = vld [vmem:[%s2799 + $0x30] sm:$0xf]
        %v2813 = vld [vmem:[%s2799 + $0x34] sm:$0xf]
        %v2814 = vld [vmem:[%s2799 + $0x38] sm:$0xf]
        %v2815 = vld [vmem:[%s2799 + $0x3c] sm:$0xf]
        %v2816 = vld [vmem:[%s2799 + $0x40] sm:$0xf]
        %v2817 = vld [vmem:[%s2799 + $0x44] sm:$0xf]
        %v2818 = vld [vmem:[%s2799 + $0x48] sm:$0xf]
        %v2819 = vld [vmem:[%s2799 + $0x4c] sm:$0xf]
        %v2820 = vld [vmem:[%s2799 + $0x50] sm:$0xf]
        %v2821 = vld [vmem:[%s2799 + $0x54] sm:$0xf]
        %v2822 = vld [vmem:[%s2799 + $0x58] sm:$0xf]
        %v2823 = vld [vmem:[%s2799 + $0x5c] sm:$0xf]
        %v2824 = vld [vmem:[%s2799 + $0x60] sm:$0xf]
        %v2825 = vld [vmem:[%s2799 + $0x64] sm:$0xf]
        %v2826 = vld [vmem:[%s2799 + $0x68] sm:$0xf]
        %v2827 = vld [vmem:[%s2799 + $0x6c] sm:$0xf]
        %v2828 = vld [vmem:[%s2799 + $0x70] sm:$0xf]
        %v2829 = vld [vmem:[%s2799 + $0x74] sm:$0xf]
        %v2830 = vld [vmem:[%s2799 + $0x78] sm:$0xf]
        %v2831 = vld [vmem:[%s2799 + $0x7c] sm:$0xf]
        %v2832 = vld [vmem:[%s2799 + $0x80] sm:$0xf]
        %v2833 = vld [vmem:[%s2799 + $0x84] sm:$0xf]
        %v2834 = vld [vmem:[%s2799 + $0x88] sm:$0xf]
        %v2835 = vld [vmem:[%s2799 + $0x8c] sm:$0xf]
        %v2836 = vld [vmem:[%s2799 + $0x90] sm:$0xf]
        %v2837 = vld [vmem:[%s2799 + $0x94] sm:$0xf]
        %v2838 = vld [vmem:[%s2799 + $0x98] sm:$0xf]
        %v2839 = vld [vmem:[%s2799 + $0x9c] sm:$0xf]
        %v2840 = vld [vmem:[%s2799 + $0xa0] sm:$0xf]
        %v2841 = vld [vmem:[%s2799 + $0xa4] sm:$0xf]
        %v2842 = vld [vmem:[%s2799 + $0xa8] sm:$0xf]
        %v2843 = vld [vmem:[%s2799 + $0xac] sm:$0xf]
        %v2844 = vld [vmem:[%s2799 + $0xb0] sm:$0xf]
        %v2845 = vld [vmem:[%s2799 + $0xb4] sm:$0xf]
        %v2846 = vld [vmem:[%s2799 + $0xb8] sm:$0xf]
        %v2847 = vld [vmem:[%s2799 + $0xbc] sm:$0xf]
        %s2848 = scalar_lea.vmem [#allocation9], 3
        %v2849 = vld [vmem:[%s2848] sm:$0x1]
        %s2850 = scalar_lea.vmem [#allocation12], 7
        %v2851 = vld [vmem:[%s2850] sm:$0x1]
        %v2852 = vpack.c.bf16 %v2797, %v2797
        %v2853 = vpack.c.bf16 %v2798, %v2798
        %v2856 = vunpack.c.l.b16 %v2852
        %v2857 = vunpack.c.l.b16 %v2853
        %v2858 = vpack.c.b16 %v2857, %v2856
        %2860 = vmatpush.bf16.msra.mxu0 0
        %2861 = vmatpush.bf16.msra.mxu0 0
        %2862 = vmatpush.bf16.msra.mxu0 0
        %2863 = vmatpush.bf16.msra.mxu0 0
        %2864 = vmatpush.bf16.msra.mxu0 0
        %2865 = vmatpush.bf16.msra.mxu0 0
        %2866 = vmatpush.bf16.msra.mxu0 0
        %2867 = vmatpush.bf16.msra.mxu0 %v2858
        %2868 = vmatmul.bf16.gmra.mxu0 %v2544
        %v2869 = vpop.f32.mrf.mxu0
        %v2870 = vadd.f32 0.0, %v2869
        %v2871 = vpop.f32.mrf.mxu0
        %v2872 = vadd.f32 0.0, %v2871
        %2873 = vdwg.mxu0
        %v2874 = vpack.c.bf16 %v2870, %v2870
        %v2875 = vpack.c.bf16 %v2872, %v2872
        %2876 = vmatpush.bf16.msra.mxu0 0
        %2877 = vmatpush.bf16.msra.mxu0 0
        %2878 = vmatpush.bf16.msra.mxu0 0
        %2879 = vmatpush.bf16.msra.mxu0 0
        %2880 = vmatpush.bf16.msra.mxu0 0
        %2881 = vmatpush.bf16.msra.mxu0 0
        %2882 = vmatpush.bf16.msra.mxu0 0
        %2883 = vmatpush.bf16.msra.mxu0 %v2858
        %2884 = vmatmul.bf16.gmra.mxu0 %v2571
        %v2885 = vpop.f32.mrf.mxu0
        %v2886 = vadd.f32 0.0, %v2885
        %v2887 = vpop.f32.mrf.mxu0
        %v2888 = vadd.f32 0.0, %v2887
        %2889 = vdwg.mxu0
        %v2890 = vpack.c.bf16 %v2886, %v2886
        %v2891 = vpack.c.bf16 %v2888, %v2888
        %v2894 = vunpack.c.l.b16 %v2874
        %v2895 = vunpack.c.l.b16 %v2875
        %v2896 = vpack.c.b16 %v2895, %v2894
        %v2900 = vunpack.c.l.b16 %v2890
        %v2901 = vunpack.c.l.b16 %v2891
        %v2902 = vpack.c.b16 %v2901, %v2900
        %v2905 = vperm.slane %v2849, 0
        %v2955 = vunpack.c.l.b16 %v2800
        %v2956 = vunpack.c.l.b16 %v2801
        %v2957 = vunpack.c.l.b16 %v2802
        %v2958 = vunpack.c.l.b16 %v2803
        %v2959 = vunpack.c.l.b16 %v2804
        %v2960 = vunpack.c.l.b16 %v2805
        %v2961 = vunpack.c.l.b16 %v2806
        %v2962 = vunpack.c.l.b16 %v2807
        %v2963 = vunpack.c.l.b16 %v2808
        %v2964 = vunpack.c.l.b16 %v2809
        %v2965 = vunpack.c.l.b16 %v2810
        %v2966 = vunpack.c.l.b16 %v2811
        %v2967 = vunpack.c.l.b16 %v2812
        %v2968 = vunpack.c.l.b16 %v2813
        %v2969 = vunpack.c.l.b16 %v2814
        %v2970 = vunpack.c.l.b16 %v2815
        %v2971 = vunpack.c.l.b16 %v2816
        %v2972 = vunpack.c.l.b16 %v2817
        %v2973 = vunpack.c.l.b16 %v2818
        %v2974 = vunpack.c.l.b16 %v2819
        %v2975 = vunpack.c.l.b16 %v2820
        %v2976 = vunpack.c.l.b16 %v2821
        %v2977 = vunpack.c.l.b16 %v2822
        %v2978 = vunpack.c.l.b16 %v2823
        %v2979 = vunpack.c.l.b16 %v2824
        %v2980 = vunpack.c.l.b16 %v2825
        %v2981 = vunpack.c.l.b16 %v2826
        %v2982 = vunpack.c.l.b16 %v2827
        %v2983 = vunpack.c.l.b16 %v2828
        %v2984 = vunpack.c.l.b16 %v2829
        %v2985 = vunpack.c.l.b16 %v2830
        %v2986 = vunpack.c.l.b16 %v2831
        %v2987 = vunpack.c.l.b16 %v2832
        %v2988 = vunpack.c.l.b16 %v2833
        %v2989 = vunpack.c.l.b16 %v2834
        %v2990 = vunpack.c.l.b16 %v2835
        %v2991 = vunpack.c.l.b16 %v2836
        %v2992 = vunpack.c.l.b16 %v2837
        %v2993 = vunpack.c.l.b16 %v2838
        %v2994 = vunpack.c.l.b16 %v2839
        %v2995 = vunpack.c.l.b16 %v2840
        %v2996 = vunpack.c.l.b16 %v2841
        %v2997 = vunpack.c.l.b16 %v2842
        %v2998 = vunpack.c.l.b16 %v2843
        %v2999 = vunpack.c.l.b16 %v2844
        %v3000 = vunpack.c.l.b16 %v2845
        %v3001 = vunpack.c.l.b16 %v2846
        %v3002 = vunpack.c.l.b16 %v2847
        %v3003 = vpack.c.b16 %v2956, %v2955
        %v3004 = vpack.c.b16 %v2958, %v2957
        %v3005 = vpack.c.b16 %v2960, %v2959
        %v3006 = vpack.c.b16 %v2962, %v2961
        %v3007 = vpack.c.b16 %v2964, %v2963
        %v3008 = vpack.c.b16 %v2966, %v2965
        %v3009 = vpack.c.b16 %v2968, %v2967
        %v3010 = vpack.c.b16 %v2970, %v2969
        %v3011 = vpack.c.b16 %v2972, %v2971
        %v3012 = vpack.c.b16 %v2974, %v2973
        %v3013 = vpack.c.b16 %v2976, %v2975
        %v3014 = vpack.c.b16 %v2978, %v2977
        %v3015 = vpack.c.b16 %v2980, %v2979
        %v3016 = vpack.c.b16 %v2982, %v2981
        %v3017 = vpack.c.b16 %v2984, %v2983
        %v3018 = vpack.c.b16 %v2986, %v2985
        %v3019 = vpack.c.b16 %v2988, %v2987
        %v3020 = vpack.c.b16 %v2990, %v2989
        %v3021 = vpack.c.b16 %v2992, %v2991
        %v3022 = vpack.c.b16 %v2994, %v2993
        %v3023 = vpack.c.b16 %v2996, %v2995
        %v3024 = vpack.c.b16 %v2998, %v2997
        %v3025 = vpack.c.b16 %v3000, %v2999
        %v3026 = vpack.c.b16 %v3002, %v3001
        %3051 = vmatpush.bf16.msra.mxu0 %v3010
        %3052 = vmatpush.bf16.msra.mxu0 %v3009
        %3053 = vmatpush.bf16.msra.mxu0 %v3008
        %3054 = vmatpush.bf16.msra.mxu0 %v3007
        %3055 = vmatpush.bf16.msra.mxu0 %v3006
        %3056 = vmatpush.bf16.msra.mxu0 %v3005
        %3057 = vmatpush.bf16.msra.mxu0 %v3004
        %3058 = vmatpush.bf16.msra.mxu0 %v3003
        %3059 = vmatmul.bf16.gmra.mxu0 %v2896
        %v3060 = vpop.f32.mrf.mxu0
        %v3061 = vadd.f32 %v2905, %v3060
        %v3062 = vpop.f32.mrf.mxu0
        %v3063 = vadd.f32 %v2905, %v3062
        %3064 = vdwg.mxu0
        %3065 = vmatpush.bf16.msra.mxu0 %v3018
        %3066 = vmatpush.bf16.msra.mxu0 %v3017
        %3067 = vmatpush.bf16.msra.mxu0 %v3016
        %3068 = vmatpush.bf16.msra.mxu0 %v3015
        %3069 = vmatpush.bf16.msra.mxu0 %v3014
        %3070 = vmatpush.bf16.msra.mxu0 %v3013
        %3071 = vmatpush.bf16.msra.mxu0 %v3012
        %3072 = vmatpush.bf16.msra.mxu0 %v3011
        %3073 = vmatmul.bf16.gmra.mxu0 %v2858
        %v3074 = vpop.f32.mrf.mxu0
        %v3075 = vadd.f32 %v3061, %v3074
        %v3076 = vpop.f32.mrf.mxu0
        %v3077 = vadd.f32 %v3063, %v3076
        %3078 = vdwg.mxu0
        %3079 = vmatpush.bf16.msra.mxu0 %v3026
        %3080 = vmatpush.bf16.msra.mxu0 %v3025
        %3081 = vmatpush.bf16.msra.mxu0 %v3024
        %3082 = vmatpush.bf16.msra.mxu0 %v3023
        %3083 = vmatpush.bf16.msra.mxu0 %v3022
        %3084 = vmatpush.bf16.msra.mxu0 %v3021
        %3085 = vmatpush.bf16.msra.mxu0 %v3020
        %3086 = vmatpush.bf16.msra.mxu0 %v3019
        %3087 = vmatmul.bf16.gmra.mxu0 %v2902
        %v3088 = vpop.f32.mrf.mxu0
        %v3089 = vadd.f32 %v3075, %v3088
        %v3090 = vpop.f32.mrf.mxu0
        %v3091 = vadd.f32 %v3077, %v3090
        %3092 = vdwg.mxu0
        %vm3093 = vcmp.ge.f32.partialorder %v3089, 0.0
        %vm3094 = vcmp.ge.f32.partialorder %v3091, 0.0
        %v3096 = vperm.slane %v2851, 0
        %v3098 = vmul.f32 %v3096, %v3089
        %v3099 = vmul.f32 %v3096, %v3091
        %v3100 = vsel %vm3093, %v3089, %v3098
        %v3101 = vsel %vm3094, %v3091, %v3099
        %v3102 = vadd.f32 %v3100, %v2473
        %v3103 = vadd.f32 %v3101, %v2474
        %v3104 = vpack.c.bf16 %v3103, %v3102
        %v3105 = vld [vmem:[%s8] sm:$0xf]
        %v3106 = vld [vmem:[%s8 + $0x4] sm:$0xf]
        %v3107 = vld [vmem:[%s8 + $0x8] sm:$0xf]
        %v3108 = vld [vmem:[%s8 + $0xc] sm:$0xf]
        %v3109 = vld [vmem:[%s8 + $0x10] sm:$0xf]
        %v3110 = vld [vmem:[%s8 + $0x14] sm:$0xf]
        %v3111 = vld [vmem:[%s8 + $0x18] sm:$0xf]
        %v3112 = vld [vmem:[%s8 + $0x1c] sm:$0xf]
        %v3113 = vld [vmem:[%s8 + $0x20] sm:$0xf]
        %v3114 = vld [vmem:[%s8 + $0x24] sm:$0xf]
        %v3115 = vld [vmem:[%s8 + $0x28] sm:$0xf]
        %v3116 = vld [vmem:[%s8 + $0x2c] sm:$0xf]
        %v3117 = vld [vmem:[%s8 + $0x30] sm:$0xf]
        %v3118 = vld [vmem:[%s8 + $0x34] sm:$0xf]
        %v3119 = vld [vmem:[%s8 + $0x38] sm:$0xf]
        %v3120 = vld [vmem:[%s8 + $0x3c] sm:$0xf]
        %v3121 = vld [vmem:[%s9] sm:$0x1]
        %v3123 = vperm.slane %v3121, 0
        %v3141 = vunpack.c.l.b16 %v3105
        %v3142 = vunpack.c.l.b16 %v3106
        %v3143 = vunpack.c.l.b16 %v3107
        %v3144 = vunpack.c.l.b16 %v3108
        %v3145 = vunpack.c.l.b16 %v3109
        %v3146 = vunpack.c.l.b16 %v3110
        %v3147 = vunpack.c.l.b16 %v3111
        %v3148 = vunpack.c.l.b16 %v3112
        %v3149 = vunpack.c.l.b16 %v3113
        %v3150 = vunpack.c.l.b16 %v3114
        %v3151 = vunpack.c.l.b16 %v3115
        %v3152 = vunpack.c.l.b16 %v3116
        %v3153 = vunpack.c.l.b16 %v3117
        %v3154 = vunpack.c.l.b16 %v3118
        %v3155 = vunpack.c.l.b16 %v3119
        %v3156 = vunpack.c.l.b16 %v3120
        %v3157 = vpack.c.b16 %v3142, %v3141
        %v3158 = vpack.c.b16 %v3144, %v3143
        %v3159 = vpack.c.b16 %v3146, %v3145
        %v3160 = vpack.c.b16 %v3148, %v3147
        %v3161 = vpack.c.b16 %v3150, %v3149
        %v3162 = vpack.c.b16 %v3152, %v3151
        %v3163 = vpack.c.b16 %v3154, %v3153
        %v3164 = vpack.c.b16 %v3156, %v3155
        %3173 = vmatpush.bf16.msra.mxu0 %v3164
        %3174 = vmatpush.bf16.msra.mxu0 %v3163
        %3175 = vmatpush.bf16.msra.mxu0 %v3162
        %3176 = vmatpush.bf16.msra.mxu0 %v3161
        %3177 = vmatpush.bf16.msra.mxu0 %v3160
        %3178 = vmatpush.bf16.msra.mxu0 %v3159
        %3179 = vmatpush.bf16.msra.mxu0 %v3158
        %3180 = vmatpush.bf16.msra.mxu0 %v3157
        %3181 = vmatmul.bf16.gmra.mxu0 %v3104
        %v3182 = vpop.f32.mrf.mxu0
        %v3183 = vadd.f32 %v3123, %v3182
        %v3184 = vpop.f32.mrf.mxu0
        %v3185 = vadd.f32 %v3123, %v3184
        %3186 = vdwg.mxu0
        %v3187 = vtanh.pop %v3183
        %v3188 = vtanh.pop %v3185
        %3189 = vst [vmem:[%s502] sm:$0xff] %v3187
        %3190 = vst [vmem:[%s502 + $0x8] sm:$0xff] %v3188
        %s3191 = smul.u32 2, %s26
        %p3192 = scmp.lt.s32.totalorder %s3191, 3
        %s3193 = scalar_select %p3192, %s3191, 3
        %s3194 = smul.addr %s3193, 8
        %s3195 = scalar_lea.vmem %s11, %s3194
        // Predicated region
        $region93: #{_forward_packed.1} parent=63 // pred_check
          %p3196 = pneg %p280
        $region94: #{_forward_packed.1} parent=63 // pred_check_branch
          %3198 = sbr.rel (%p3196) target = $region96
        $region95: #{_forward_packed.1} parent=63 // pred_region
          %s3199 = smul.u32 2, %s26
        $region96: #{_forward_packed.1} parent=63 // pred_fallthru
          _
      $region64: #{_forward_packed.1} parent=5 // pred_fallthru
        _
      %p3200 = scmp.le.s32.totalorder 2, %s21
      // Predicated region
      $region97: #{_forward_packed.1} parent=5 // pred_check
        %p3201 = pneg %p3200
      $region98: #{_forward_packed.1} parent=5 // pred_check_branch
        %3203 = sbr.rel (%p3201) target = $region100
      $region99: #{_forward_packed.1} parent=5 // pred_region
        %s3204 = ssub.s32 %s21, 2
        // Predicated region
        $region101: #{_forward_packed.1} parent=99 // pred_check
          %p3205 = pneg %p286
        $region102: #{_forward_packed.1} parent=99 // pred_check_branch
          %3207 = sbr.rel (%p3205) target = $region104
        $region103: #{_forward_packed.1} parent=99 // pred_region
          %s3208 = smul.u32 2, %s27
          %p3209 = scmp.lt.s32.totalorder %s3208, 3
          %s3210 = scalar_select %p3209, %s3208, 3
          %s3211 = smul.addr %s3210, 8
          %s3212 = scalar_lea.vmem %s11, %s3211
        $region104: #{_forward_packed.1} parent=99 // pred_fallthru
          _
      $region100: #{_forward_packed.1} parent=5 // pred_fallthru
        _
    $region6: #{_forward_packed.1} parent=1 // loop_footer
      %s25 = sadd.s32 1, %s21
    $region7: #{_forward_packed.1} parent=1 // loop_footer_branch
      %20 = sbr.rel target = $region3
    $region8: #{_forward_packed.1} parent=1 // loop_exit
      _
    %3213 = vsyncpa [#allocation3], 1
    %s3214 = scalar_lea.sflag [#allocation3], 1
    %3215 = vsyncpa %s3214, 1
    %3216 = vsyncpa [#allocation5], 1
    %3217 = vsyncpa [#allocation8], 1
    %3218 = vsyncpa [#allocation11], 1

</llo_original>
